<compile_context>
chip_gen: v7x
topology: tpu7x:2x2x1
jax: 0.10.0
libtpu: 0.0.40
codegen_flags: <defaults>
</compile_context>

<pallas_src>
import functools

import jax
import jax.numpy as jnp
from jax.experimental import pallas as pl
from jax.experimental.pallas import tpu as pltpu

# Geometry implied by the PyTorch module (fc = Linear(128 * H/4 * W/4, E)).
IMG = 16                    # H = W = 16
C_IN = 3
H1 = W1 = IMG // 2          # 8  : conv1 output (stride 2, pad 1)
H2 = W2 = IMG // 4          # 4  : conv2 output (stride 2, pad 1)
H3 = W3 = H2                # 4  : conv3 output (stride 1, pad 1)
C1, C2, C3 = 32, 64, 128
K1 = 32                     # conv1 K = 3*3*3 = 27, zero-padded to 32
KFC = H3 * W3 * C3          # 2048
ENC_PAD = 128               # FC output padded to a full 128-lane tile
PHALF = H1 // 2 + 1         # 5 : parity-half extent (incl. one pad slot)


# ----------------------------------------------------------------------------
# Fused encoder kernel: conv1 + conv2 + conv3 (+ReLU) + FC in one pallas_call
# ----------------------------------------------------------------------------
def _encoder_kernel(p1_ref, w1_ref, b1_ref, w2_ref, b2_ref, w3_ref, b3_ref,
                    wfc_ref, bfc_ref, out_ref,
                    a1p_ref, a2p_ref, p4_ref):
    B = out_ref.shape[0]

    # ---- conv1: (B*64, 32) = relu(P1 @ W1 + b1)  (P1 built wrapper-side) ----
    a1 = jnp.dot(p1_ref[...], w1_ref[...], preferred_element_type=jnp.float32)
    a1 = jnp.maximum(a1 + b1_ref[...], 0.0)                   # f32 epilogue

    # Store conv1's activation into a zero-padded, parity-deinterleaved scratch
    #   a1p[b, hpos, wpos, c]  with hpos = (hpad % 2) * 5 + hpad // 2
    # (hpad = h1 + 1, same for w).  P1's rows are ordered so the real rows land
    # in the contiguous interior [1:9, 1:9] -> ONE store; every stride-2 window
    # of conv2 becomes a contiguous 4x4 slice.
    a1p_ref[...] = jnp.zeros_like(a1p_ref)
    a1p_ref[:, 1:1 + H1, 1:1 + W1, :] = a1.reshape(B, H1, W1, C1)

    # ---- conv2 (k=3, stride 2, pad 1): 9-tap matmul decomposition -----------
    acc2 = jnp.zeros((B * H2 * W2, C2), jnp.float32)
    for kh in range(3):
        hs = (kh % 2) * PHALF + kh // 2
        for kw in range(3):
            ws = (kw % 2) * PHALF + kw // 2
            tap = a1p_ref[:, hs:hs + H2, ws:ws + W2, :].reshape(B * H2 * W2, C1)
            acc2 += jnp.dot(tap.astype(jnp.bfloat16), w2_ref[kh * 3 + kw],
                            preferred_element_type=jnp.float32)
    a2 = jnp.maximum(acc2 + b2_ref[...], 0.0)                 # (B*16, 64)

    # ---- conv3 (k=3, stride 1, pad 1): padded scratch + 9-tap matmuls -------
    a2p_ref[...] = jnp.zeros_like(a2p_ref)
    a2p_ref[:, 1:1 + H2, 1:1 + W2, :] = a2.reshape(B, H2, W2, C2)

    acc3 = jnp.zeros((B * H3 * W3, C3), jnp.float32)
    for kh in range(3):
        for kw in range(3):
            tap = a2p_ref[:, kh:kh + H3, kw:kw + W3, :].reshape(B * H3 * W3, C2)
            acc3 += jnp.dot(tap.astype(jnp.bfloat16), w3_ref[kh * 3 + kw],
                            preferred_element_type=jnp.float32)
    a3 = jnp.maximum(acc3 + b3_ref[...], 0.0)                 # (B*16, 128)

    # ---- flatten: PyTorch's NCHW view(B,-1) order is absorbed into the packed
    #      FC weight; here we lay the (hw, c) blocks side by side with
    #      lane-aligned 128-wide row copies. --------------------------------
    for b in range(B):
        for hw in range(H3 * W3):
            src = b * H3 * W3 + hw
            p4_ref[b:b + 1, hw * C3:(hw + 1) * C3] = a3[src:src + 1, :]

    # ---- FC (output padded to 128 lanes => lane-dense HBM store) ------------
    v = jnp.dot(p4_ref[...].astype(jnp.bfloat16), wfc_ref[...],
                preferred_element_type=jnp.float32)
    out_ref[...] = v + bfc_ref[...]


# ----------------------------------------------------------------------------
# Wrapper-side layout plumbing (runs once per forward / once at init)
# ----------------------------------------------------------------------------
def _build_p1(x_nchw):
    """im2col for conv1 only (input-dependent, tiny).  Rows are ordered
    (b, odd-then-even h1, odd-then-even w1) so the in-kernel scatter into the
    parity-deinterleaved padded scratch is a single contiguous store."""
    B = x_nchw.shape[0]
    x = jnp.transpose(x_nchw, (0, 2, 3, 1))                  # NCHW -> NHWC
    xp = jnp.pad(x, ((0, 0), (1, 1), (1, 1), (0, 0)))        # (B, 18, 18, 3)
    cols = []
    for kh in range(3):
        for kw in range(3):
            cols.append(xp[:, kh:kh + 2 * H1:2, kw:kw + 2 * W1:2, :])
    p = jnp.stack(cols, axis=3).reshape(B, H1, W1, 9 * C_IN)  # (B,8,8,27)
    p = jnp.concatenate([p[:, 1::2], p[:, 0::2]], axis=1)     # h1: odd, even
    p = jnp.concatenate([p[:, :, 1::2], p[:, :, 0::2]], axis=2)  # w1: odd, even
    p = p.reshape(B * H1 * W1, 9 * C_IN)
    p = jnp.pad(p, ((0, 0), (0, K1 - 9 * C_IN)))              # K: 27 -> 32
    return p.astype(jnp.bfloat16)


def init_params(key, encoding_dim):
    ks = jax.random.split(key, 8)

    def w(k, shape, fan_in):
        return jax.random.normal(k, shape, jnp.float32) / jnp.sqrt(fan_in)

    fc_in = C3 * H3 * W3
    return {
        "conv1_w": w(ks[0], (C1, C_IN, 3, 3), C_IN * 9),
        "conv1_b": w(ks[1], (C1,), C_IN * 9),
        "conv2_w": w(ks[2], (C2, C1, 3, 3), C1 * 9),
        "conv2_b": w(ks[3], (C2,), C1 * 9),
        "conv3_w": w(ks[4], (C3, C2, 3, 3), C2 * 9),
        "conv3_b": w(ks[5], (C3,), C2 * 9),
        "fc_w": w(ks[6], (encoding_dim, fc_in), fc_in),      # PyTorch (out, in)
        "fc_b": w(ks[7], (encoding_dim,), fc_in),
    }


def pack_params(params):
    """One-time weight packing: conv OIHW -> per-tap (Cin, Cout) matrices,
    FC weight reordered to (hw, c)-major input and padded to 128 output lanes."""
    def conv_taps(w):
        co, ci, kh, kw = w.shape
        return jnp.transpose(w, (2, 3, 1, 0)).reshape(kh * kw, ci, co)

    w1 = conv_taps(params["conv1_w"]).reshape(9 * C_IN, C1)  # (27, 32)
    w1 = jnp.pad(w1, ((0, K1 - 9 * C_IN), (0, 0)))           # K pad 27 -> 32
    w2 = conv_taps(params["conv2_w"])                        # (9, 32, 64)
    w3 = conv_taps(params["conv3_w"])                        # (9, 64, 128)

    e = params["fc_w"].shape[0]
    wfc = params["fc_w"].reshape(e, C3, H3, W3)              # NCHW flatten order
    wfc = jnp.transpose(wfc, (2, 3, 1, 0)).reshape(KFC, e)   # (hw, c)-major rows
    wfc = jnp.pad(wfc, ((0, 0), (0, ENC_PAD - e)))           # lane-dense output
    bfc = jnp.pad(params["fc_b"], (0, ENC_PAD - e))

    return {
        "w1": w1.astype(jnp.bfloat16),
        "b1": params["conv1_b"].reshape(1, C1).astype(jnp.float32),
        "w2": w2.astype(jnp.bfloat16),
        "b2": params["conv2_b"].reshape(1, C2).astype(jnp.float32),
        "w3": w3.astype(jnp.bfloat16),
        "b3": params["conv3_b"].reshape(1, C3).astype(jnp.float32),
        "wfc": wfc.astype(jnp.bfloat16),
        "bfc": bfc.reshape(1, ENC_PAD).astype(jnp.float32),
    }


def _full_spec(shape):
    rank = len(shape)
    return pl.BlockSpec(shape, lambda i, _r=rank: (0,) * _r)


@functools.partial(jax.jit, static_argnames=("encoding_dim",))
def autoencoder_forward(packed, x_nchw, encoding_dim):
    """x_nchw: (B, 3, 16, 16) float32.  Returns the encoder latent (B, E)."""
    assert x_nchw.shape[1:] == (C_IN, IMG, IMG)
    B = x_nchw.shape[0]
    p1 = _build_p1(x_nchw)

    operands = (p1, packed["w1"], packed["b1"], packed["w2"], packed["b2"],
                packed["w3"], packed["b3"], packed["wfc"], packed["bfc"])

    out = pl.pallas_call(
        _encoder_kernel,
        out_shape=jax.ShapeDtypeStruct((B, ENC_PAD), jnp.float32),
        grid=(1,),
        in_specs=[_full_spec(o.shape) for o in operands],
        out_specs=_full_spec((B, ENC_PAD)),
        scratch_shapes=[
            pltpu.VMEM((B, 2 * PHALF, 2 * PHALF, C1), jnp.float32),  # a1 padded/deint
            pltpu.VMEM((B, H2 + 2, W2 + 2, C2), jnp.float32),        # a2 padded
            pltpu.VMEM((B, KFC), jnp.float32),                       # FC input
        ],
        compiler_params=pltpu.CompilerParams(
            dimension_semantics=("arbitrary",),
            vmem_limit_bytes=32 * 1024 * 1024),
    )(*operands)
    # TODO(synk): Decoder.forward has an empty body in the source module
    # (returns an undefined `x`); no semantics to translate, so the encoder
    # latent is returned here.
    return out[:, :encoding_dim]


# ----------------------------------------------------------------------------
# Plain-JAX reference (for a loose numerical cross-check; bf16 MXU inputs)
# ----------------------------------------------------------------------------
def _reference_forward(params, x):
    def conv(h, w, b, stride):
        y = jax.lax.conv_general_dilated(
            h, w, window_strides=(stride, stride), padding=((1, 1), (1, 1)),
            dimension_numbers=("NCHW", "OIHW", "NCHW"))
        return jax.nn.relu(y + b[None, :, None, None])

    y = conv(x, params["conv1_w"], params["conv1_b"], 2)
    y = conv(y, params["conv2_w"], params["conv2_b"], 2)
    y = conv(y, params["conv3_w"], params["conv3_b"], 1)
    flat = y.reshape(y.shape[0], -1)                         # NCHW flatten
    return flat @ params["fc_w"].T + params["fc_b"]


if __name__ == "__main__":
    B, C, H, W = 2, 3, 16, 16
    encoding_dim = 32

    key = jax.random.PRNGKey(0)
    k_params, k_x = jax.random.split(key)
    params = init_params(k_params, encoding_dim)
    packed = pack_params(params)
    x = jax.random.normal(k_x, (B, C, H, W), jnp.float32)

    v = autoencoder_forward(packed, x, encoding_dim)
    jax.block_until_ready(v)
    assert v.shape == (B, encoding_dim)

    v_ref = _reference_forward(params, x)
    err = float(jnp.max(jnp.abs(v - v_ref) / (jnp.abs(v_ref) + 1.0)))
    assert err < 0.05, f"mismatch vs reference: {err}"

    print("KERNEL_OK")
</pallas_src>

<mosaic_0001>
module attributes {stable_mosaic.version = 11 : i64} {
  func.func @_encoder_kernel(%arg0: i32, %arg1: memref<128x32xbf16, #tpu.memory_space<vmem>>, %arg2: memref<32x32xbf16, #tpu.memory_space<vmem>>, %arg3: memref<1x32xf32, #tpu.memory_space<vmem>>, %arg4: memref<9x32x64xbf16, #tpu.memory_space<vmem>>, %arg5: memref<1x64xf32, #tpu.memory_space<vmem>>, %arg6: memref<9x64x128xbf16, #tpu.memory_space<vmem>>, %arg7: memref<1x128xf32, #tpu.memory_space<vmem>>, %arg8: memref<2048x128xbf16, #tpu.memory_space<vmem>>, %arg9: memref<1x128xf32, #tpu.memory_space<vmem>>, %arg10: memref<2x128xf32, #tpu.memory_space<vmem>>, %arg11: memref<2x10x10x32xf32, #tpu.memory_space<vmem>>, %arg12: memref<2x6x6x64xf32, #tpu.memory_space<vmem>>, %arg13: memref<2x2048xf32, #tpu.memory_space<vmem>>) attributes {dimension_semantics = [#tpu.dimension_semantics<arbitrary>], iteration_bounds = array<i64: 1>, scalar_prefetch = 0 : i64, scratch_operands = 3 : i64, tpu.core_type = #tpu.core_type<tc>, window_params = [{pipeline_mode = #tpu.pipeline_mode<synchronous>, transform_indices = @transform_0, window_bounds = array<i64: 128, 32>}, {pipeline_mode = #tpu.pipeline_mode<synchronous>, transform_indices = @transform_1, window_bounds = array<i64: 32, 32>}, {pipeline_mode = #tpu.pipeline_mode<synchronous>, transform_indices = @transform_2, window_bounds = array<i64: 1, 32>}, {pipeline_mode = #tpu.pipeline_mode<synchronous>, transform_indices = @transform_3, window_bounds = array<i64: 9, 32, 64>}, {pipeline_mode = #tpu.pipeline_mode<synchronous>, transform_indices = @transform_4, window_bounds = array<i64: 1, 64>}, {pipeline_mode = #tpu.pipeline_mode<synchronous>, transform_indices = @transform_5, window_bounds = array<i64: 9, 64, 128>}, {pipeline_mode = #tpu.pipeline_mode<synchronous>, transform_indices = @transform_6, window_bounds = array<i64: 1, 128>}, {pipeline_mode = #tpu.pipeline_mode<synchronous>, transform_indices = @transform_7, window_bounds = array<i64: 2048, 128>}, {pipeline_mode = #tpu.pipeline_mode<synchronous>, transform_indices = @transform_8, window_bounds = array<i64: 1, 128>}, {pipeline_mode = #tpu.pipeline_mode<synchronous>, transform_indices = @transform_9, window_bounds = array<i64: 2, 128>}]} {
    %c0 = arith.constant 0 : index
    %c0_0 = arith.constant 0 : index
    %0 = vector.load %arg1[%c0, %c0_0] : memref<128x32xbf16, #tpu.memory_space<vmem>>, vector<128x32xbf16>
    %c0_1 = arith.constant 0 : index
    %c0_2 = arith.constant 0 : index
    %1 = vector.load %arg2[%c0_1, %c0_2] : memref<32x32xbf16, #tpu.memory_space<vmem>>, vector<32x32xbf16>
    %cst = arith.constant dense<0.000000e+00> : vector<128x32xf32>
    %2 = tpu.matmul %0, %1, %cst {dimension_numbers = #tpu.dot_dimension_numbers<[1], [0], [0], [1], [0, 0, 1, 1], [], []>} : vector<128x32xbf16>, vector<32x32xbf16>, vector<128x32xf32> -> vector<128x32xf32>
    %c0_3 = arith.constant 0 : index
    %c0_4 = arith.constant 0 : index
    %3 = vector.load %arg3[%c0_3, %c0_4] : memref<1x32xf32, #tpu.memory_space<vmem>>, vector<1x32xf32>
    %4 = vector.broadcast %3 : vector<1x32xf32> to vector<128x32xf32>
    %5 = arith.addf %2, %4 : vector<128x32xf32>
    %cst_5 = arith.constant 0.000000e+00 : f32
    %6 = vector.broadcast %cst_5 : f32 to vector<128x32xf32>
    %7 = arith.maximumf %5, %6 : vector<128x32xf32>
    %cst_6 = arith.constant 0.000000e+00 : f32
    %8 = vector.broadcast %cst_6 : f32 to vector<2x10x10x32xf32>
    %c0_7 = arith.constant 0 : index
    %c0_8 = arith.constant 0 : index
    %c0_9 = arith.constant 0 : index
    %c0_10 = arith.constant 0 : index
    %9 = vector.load %arg11[%c0_7, %c0_8, %c0_9, %c0_10] : memref<2x10x10x32xf32, #tpu.memory_space<vmem>>, vector<2x10x10x32xf32>
    tpu.vector_store %arg11[%c0_7, %c0_8, %c0_9, %c0_10], %8 {strides = array<i32>} : memref<2x10x10x32xf32, #tpu.memory_space<vmem>>, vector<2x10x10x32xf32>,
    %10 = vector.shape_cast %7 : vector<128x32xf32> to vector<2x8x8x32xf32>
    %c0_11 = arith.constant 0 : index
    %c1 = arith.constant 1 : index
    %c1_12 = arith.constant 1 : index
    %c0_13 = arith.constant 0 : index
    %11 = vector.load %arg11[%c0_11, %c1, %c1_12, %c0_13] : memref<2x10x10x32xf32, #tpu.memory_space<vmem>>, vector<2x8x8x32xf32>
    tpu.vector_store %arg11[%c0_11, %c1, %c1_12, %c0_13], %10 {strides = array<i32>} : memref<2x10x10x32xf32, #tpu.memory_space<vmem>>, vector<2x8x8x32xf32>,
    %cst_14 = arith.constant 0.000000e+00 : f32
    %12 = vector.broadcast %cst_14 : f32 to vector<32x64xf32>
    %c0_15 = arith.constant 0 : index
    %c0_16 = arith.constant 0 : index
    %c0_17 = arith.constant 0 : index
    %c0_18 = arith.constant 0 : index
    %13 = vector.load %arg11[%c0_15, %c0_16, %c0_17, %c0_18] : memref<2x10x10x32xf32, #tpu.memory_space<vmem>>, vector<2x4x4x32xf32>
    %14 = vector.shape_cast %13 : vector<2x4x4x32xf32> to vector<32x32xf32>
    %15 = arith.truncf %14 : vector<32x32xf32> to vector<32x32xbf16>
    %c0_19 = arith.constant 0 : index
    %c0_20 = arith.constant 0 : index
    %c0_21 = arith.constant 0 : index
    %16 = vector.load %arg4[%c0_19, %c0_20, %c0_21] : memref<9x32x64xbf16, #tpu.memory_space<vmem>>, vector<1x32x64xbf16>
    %17 = vector.shape_cast %16 : vector<1x32x64xbf16> to vector<32x64xbf16>
    %cst_22 = arith.constant dense<0.000000e+00> : vector<32x64xf32>
    %18 = tpu.matmul %15, %17, %cst_22 {dimension_numbers = #tpu.dot_dimension_numbers<[1], [0], [0], [1], [0, 0, 1, 1], [], []>} : vector<32x32xbf16>, vector<32x64xbf16>, vector<32x64xf32> -> vector<32x64xf32>
    %19 = arith.addf %12, %18 : vector<32x64xf32>
    %c0_23 = arith.constant 0 : index
    %c0_24 = arith.constant 0 : index
    %c5 = arith.constant 5 : index
    %c0_25 = arith.constant 0 : index
    %20 = vector.load %arg11[%c0_23, %c0_24, %c5, %c0_25] : memref<2x10x10x32xf32, #tpu.memory_space<vmem>>, vector<2x4x4x32xf32>
    %21 = vector.shape_cast %20 : vector<2x4x4x32xf32> to vector<32x32xf32>
    %22 = arith.truncf %21 : vector<32x32xf32> to vector<32x32xbf16>
    %c1_26 = arith.constant 1 : index
    %c0_27 = arith.constant 0 : index
    %c0_28 = arith.constant 0 : index
    %23 = vector.load %arg4[%c1_26, %c0_27, %c0_28] : memref<9x32x64xbf16, #tpu.memory_space<vmem>>, vector<1x32x64xbf16>
    %24 = vector.shape_cast %23 : vector<1x32x64xbf16> to vector<32x64xbf16>
    %cst_29 = arith.constant dense<0.000000e+00> : vector<32x64xf32>
    %25 = tpu.matmul %22, %24, %cst_29 {dimension_numbers = #tpu.dot_dimension_numbers<[1], [0], [0], [1], [0, 0, 1, 1], [], []>} : vector<32x32xbf16>, vector<32x64xbf16>, vector<32x64xf32> -> vector<32x64xf32>
    %26 = arith.addf %19, %25 : vector<32x64xf32>
    %c0_30 = arith.constant 0 : index
    %c0_31 = arith.constant 0 : index
    %c1_32 = arith.constant 1 : index
    %c0_33 = arith.constant 0 : index
    %27 = vector.load %arg11[%c0_30, %c0_31, %c1_32, %c0_33] : memref<2x10x10x32xf32, #tpu.memory_space<vmem>>, vector<2x4x4x32xf32>
    %28 = vector.shape_cast %27 : vector<2x4x4x32xf32> to vector<32x32xf32>
    %29 = arith.truncf %28 : vector<32x32xf32> to vector<32x32xbf16>
    %c2 = arith.constant 2 : index
    %c0_34 = arith.constant 0 : index
    %c0_35 = arith.constant 0 : index
    %30 = vector.load %arg4[%c2, %c0_34, %c0_35] : memref<9x32x64xbf16, #tpu.memory_space<vmem>>, vector<1x32x64xbf16>
    %31 = vector.shape_cast %30 : vector<1x32x64xbf16> to vector<32x64xbf16>
    %cst_36 = arith.constant dense<0.000000e+00> : vector<32x64xf32>
    %32 = tpu.matmul %29, %31, %cst_36 {dimension_numbers = #tpu.dot_dimension_numbers<[1], [0], [0], [1], [0, 0, 1, 1], [], []>} : vector<32x32xbf16>, vector<32x64xbf16>, vector<32x64xf32> -> vector<32x64xf32>
    %33 = arith.addf %26, %32 : vector<32x64xf32>
    %c0_37 = arith.constant 0 : index
    %c5_38 = arith.constant 5 : index
    %c0_39 = arith.constant 0 : index
    %c0_40 = arith.constant 0 : index
    %34 = vector.load %arg11[%c0_37, %c5_38, %c0_39, %c0_40] : memref<2x10x10x32xf32, #tpu.memory_space<vmem>>, vector<2x4x4x32xf32>
    %35 = vector.shape_cast %34 : vector<2x4x4x32xf32> to vector<32x32xf32>
    %36 = arith.truncf %35 : vector<32x32xf32> to vector<32x32xbf16>
    %c3 = arith.constant 3 : index
    %c0_41 = arith.constant 0 : index
    %c0_42 = arith.constant 0 : index
    %37 = vector.load %arg4[%c3, %c0_41, %c0_42] : memref<9x32x64xbf16, #tpu.memory_space<vmem>>, vector<1x32x64xbf16>
    %38 = vector.shape_cast %37 : vector<1x32x64xbf16> to vector<32x64xbf16>
    %cst_43 = arith.constant dense<0.000000e+00> : vector<32x64xf32>
    %39 = tpu.matmul %36, %38, %cst_43 {dimension_numbers = #tpu.dot_dimension_numbers<[1], [0], [0], [1], [0, 0, 1, 1], [], []>} : vector<32x32xbf16>, vector<32x64xbf16>, vector<32x64xf32> -> vector<32x64xf32>
    %40 = arith.addf %33, %39 : vector<32x64xf32>
    %c0_44 = arith.constant 0 : index
    %c5_45 = arith.constant 5 : index
    %c5_46 = arith.constant 5 : index
    %c0_47 = arith.constant 0 : index
    %41 = vector.load %arg11[%c0_44, %c5_45, %c5_46, %c0_47] : memref<2x10x10x32xf32, #tpu.memory_space<vmem>>, vector<2x4x4x32xf32>
    %42 = vector.shape_cast %41 : vector<2x4x4x32xf32> to vector<32x32xf32>
    %43 = arith.truncf %42 : vector<32x32xf32> to vector<32x32xbf16>
    %c4 = arith.constant 4 : index
    %c0_48 = arith.constant 0 : index
    %c0_49 = arith.constant 0 : index
    %44 = vector.load %arg4[%c4, %c0_48, %c0_49] : memref<9x32x64xbf16, #tpu.memory_space<vmem>>, vector<1x32x64xbf16>
    %45 = vector.shape_cast %44 : vector<1x32x64xbf16> to vector<32x64xbf16>
    %cst_50 = arith.constant dense<0.000000e+00> : vector<32x64xf32>
    %46 = tpu.matmul %43, %45, %cst_50 {dimension_numbers = #tpu.dot_dimension_numbers<[1], [0], [0], [1], [0, 0, 1, 1], [], []>} : vector<32x32xbf16>, vector<32x64xbf16>, vector<32x64xf32> -> vector<32x64xf32>
    %47 = arith.addf %40, %46 : vector<32x64xf32>
    %c0_51 = arith.constant 0 : index
    %c5_52 = arith.constant 5 : index
    %c1_53 = arith.constant 1 : index
    %c0_54 = arith.constant 0 : index
    %48 = vector.load %arg11[%c0_51, %c5_52, %c1_53, %c0_54] : memref<2x10x10x32xf32, #tpu.memory_space<vmem>>, vector<2x4x4x32xf32>
    %49 = vector.shape_cast %48 : vector<2x4x4x32xf32> to vector<32x32xf32>
    %50 = arith.truncf %49 : vector<32x32xf32> to vector<32x32xbf16>
    %c5_55 = arith.constant 5 : index
    %c0_56 = arith.constant 0 : index
    %c0_57 = arith.constant 0 : index
    %51 = vector.load %arg4[%c5_55, %c0_56, %c0_57] : memref<9x32x64xbf16, #tpu.memory_space<vmem>>, vector<1x32x64xbf16>
    %52 = vector.shape_cast %51 : vector<1x32x64xbf16> to vector<32x64xbf16>
    %cst_58 = arith.constant dense<0.000000e+00> : vector<32x64xf32>
    %53 = tpu.matmul %50, %52, %cst_58 {dimension_numbers = #tpu.dot_dimension_numbers<[1], [0], [0], [1], [0, 0, 1, 1], [], []>} : vector<32x32xbf16>, vector<32x64xbf16>, vector<32x64xf32> -> vector<32x64xf32>
    %54 = arith.addf %47, %53 : vector<32x64xf32>
    %c0_59 = arith.constant 0 : index
    %c1_60 = arith.constant 1 : index
    %c0_61 = arith.constant 0 : index
    %c0_62 = arith.constant 0 : index
    %55 = vector.load %arg11[%c0_59, %c1_60, %c0_61, %c0_62] : memref<2x10x10x32xf32, #tpu.memory_space<vmem>>, vector<2x4x4x32xf32>
    %56 = vector.shape_cast %55 : vector<2x4x4x32xf32> to vector<32x32xf32>
    %57 = arith.truncf %56 : vector<32x32xf32> to vector<32x32xbf16>
    %c6 = arith.constant 6 : index
    %c0_63 = arith.constant 0 : index
    %c0_64 = arith.constant 0 : index
    %58 = vector.load %arg4[%c6, %c0_63, %c0_64] : memref<9x32x64xbf16, #tpu.memory_space<vmem>>, vector<1x32x64xbf16>
    %59 = vector.shape_cast %58 : vector<1x32x64xbf16> to vector<32x64xbf16>
    %cst_65 = arith.constant dense<0.000000e+00> : vector<32x64xf32>
    %60 = tpu.matmul %57, %59, %cst_65 {dimension_numbers = #tpu.dot_dimension_numbers<[1], [0], [0], [1], [0, 0, 1, 1], [], []>} : vector<32x32xbf16>, vector<32x64xbf16>, vector<32x64xf32> -> vector<32x64xf32>
    %61 = arith.addf %54, %60 : vector<32x64xf32>
    %c0_66 = arith.constant 0 : index
    %c1_67 = arith.constant 1 : index
    %c5_68 = arith.constant 5 : index
    %c0_69 = arith.constant 0 : index
    %62 = vector.load %arg11[%c0_66, %c1_67, %c5_68, %c0_69] : memref<2x10x10x32xf32, #tpu.memory_space<vmem>>, vector<2x4x4x32xf32>
    %63 = vector.shape_cast %62 : vector<2x4x4x32xf32> to vector<32x32xf32>
    %64 = arith.truncf %63 : vector<32x32xf32> to vector<32x32xbf16>
    %c7 = arith.constant 7 : index
    %c0_70 = arith.constant 0 : index
    %c0_71 = arith.constant 0 : index
    %65 = vector.load %arg4[%c7, %c0_70, %c0_71] : memref<9x32x64xbf16, #tpu.memory_space<vmem>>, vector<1x32x64xbf16>
    %66 = vector.shape_cast %65 : vector<1x32x64xbf16> to vector<32x64xbf16>
    %cst_72 = arith.constant dense<0.000000e+00> : vector<32x64xf32>
    %67 = tpu.matmul %64, %66, %cst_72 {dimension_numbers = #tpu.dot_dimension_numbers<[1], [0], [0], [1], [0, 0, 1, 1], [], []>} : vector<32x32xbf16>, vector<32x64xbf16>, vector<32x64xf32> -> vector<32x64xf32>
    %68 = arith.addf %61, %67 : vector<32x64xf32>
    %c0_73 = arith.constant 0 : index
    %c1_74 = arith.constant 1 : index
    %c1_75 = arith.constant 1 : index
    %c0_76 = arith.constant 0 : index
    %69 = vector.load %arg11[%c0_73, %c1_74, %c1_75, %c0_76] : memref<2x10x10x32xf32, #tpu.memory_space<vmem>>, vector<2x4x4x32xf32>
    %70 = vector.shape_cast %69 : vector<2x4x4x32xf32> to vector<32x32xf32>
    %71 = arith.truncf %70 : vector<32x32xf32> to vector<32x32xbf16>
    %c8 = arith.constant 8 : index
    %c0_77 = arith.constant 0 : index
    %c0_78 = arith.constant 0 : index
    %72 = vector.load %arg4[%c8, %c0_77, %c0_78] : memref<9x32x64xbf16, #tpu.memory_space<vmem>>, vector<1x32x64xbf16>
    %73 = vector.shape_cast %72 : vector<1x32x64xbf16> to vector<32x64xbf16>
    %cst_79 = arith.constant dense<0.000000e+00> : vector<32x64xf32>
    %74 = tpu.matmul %71, %73, %cst_79 {dimension_numbers = #tpu.dot_dimension_numbers<[1], [0], [0], [1], [0, 0, 1, 1], [], []>} : vector<32x32xbf16>, vector<32x64xbf16>, vector<32x64xf32> -> vector<32x64xf32>
    %75 = arith.addf %68, %74 : vector<32x64xf32>
    %c0_80 = arith.constant 0 : index
    %c0_81 = arith.constant 0 : index
    %76 = vector.load %arg5[%c0_80, %c0_81] : memref<1x64xf32, #tpu.memory_space<vmem>>, vector<1x64xf32>
    %77 = vector.broadcast %76 : vector<1x64xf32> to vector<32x64xf32>
    %78 = arith.addf %75, %77 : vector<32x64xf32>
    %cst_82 = arith.constant 0.000000e+00 : f32
    %79 = vector.broadcast %cst_82 : f32 to vector<32x64xf32>
    %80 = arith.maximumf %78, %79 : vector<32x64xf32>
    %cst_83 = arith.constant 0.000000e+00 : f32
    %81 = vector.broadcast %cst_83 : f32 to vector<2x6x6x64xf32>
    %c0_84 = arith.constant 0 : index
    %c0_85 = arith.constant 0 : index
    %c0_86 = arith.constant 0 : index
    %c0_87 = arith.constant 0 : index
    %82 = vector.load %arg12[%c0_84, %c0_85, %c0_86, %c0_87] : memref<2x6x6x64xf32, #tpu.memory_space<vmem>>, vector<2x6x6x64xf32>
    tpu.vector_store %arg12[%c0_84, %c0_85, %c0_86, %c0_87], %81 {strides = array<i32>} : memref<2x6x6x64xf32, #tpu.memory_space<vmem>>, vector<2x6x6x64xf32>,
    %83 = vector.shape_cast %80 : vector<32x64xf32> to vector<2x4x4x64xf32>
    %c0_88 = arith.constant 0 : index
    %c1_89 = arith.constant 1 : index
    %c1_90 = arith.constant 1 : index
    %c0_91 = arith.constant 0 : index
    %84 = vector.load %arg12[%c0_88, %c1_89, %c1_90, %c0_91] : memref<2x6x6x64xf32, #tpu.memory_space<vmem>>, vector<2x4x4x64xf32>
    tpu.vector_store %arg12[%c0_88, %c1_89, %c1_90, %c0_91], %83 {strides = array<i32>} : memref<2x6x6x64xf32, #tpu.memory_space<vmem>>, vector<2x4x4x64xf32>,
    %cst_92 = arith.constant 0.000000e+00 : f32
    %85 = vector.broadcast %cst_92 : f32 to vector<32x128xf32>
    %c0_93 = arith.constant 0 : index
    %c0_94 = arith.constant 0 : index
    %c0_95 = arith.constant 0 : index
    %c0_96 = arith.constant 0 : index
    %86 = vector.load %arg12[%c0_93, %c0_94, %c0_95, %c0_96] : memref<2x6x6x64xf32, #tpu.memory_space<vmem>>, vector<2x4x4x64xf32>
    %87 = vector.shape_cast %86 : vector<2x4x4x64xf32> to vector<32x64xf32>
    %88 = arith.truncf %87 : vector<32x64xf32> to vector<32x64xbf16>
    %c0_97 = arith.constant 0 : index
    %c0_98 = arith.constant 0 : index
    %c0_99 = arith.constant 0 : index
    %89 = vector.load %arg6[%c0_97, %c0_98, %c0_99] : memref<9x64x128xbf16, #tpu.memory_space<vmem>>, vector<1x64x128xbf16>
    %90 = vector.shape_cast %89 : vector<1x64x128xbf16> to vector<64x128xbf16>
    %cst_100 = arith.constant dense<0.000000e+00> : vector<32x128xf32>
    %91 = tpu.matmul %88, %90, %cst_100 {dimension_numbers = #tpu.dot_dimension_numbers<[1], [0], [0], [1], [0, 0, 1, 1], [], []>} : vector<32x64xbf16>, vector<64x128xbf16>, vector<32x128xf32> -> vector<32x128xf32>
    %92 = arith.addf %85, %91 : vector<32x128xf32>
    %c0_101 = arith.constant 0 : index
    %c0_102 = arith.constant 0 : index
    %c1_103 = arith.constant 1 : index
    %c0_104 = arith.constant 0 : index
    %93 = vector.load %arg12[%c0_101, %c0_102, %c1_103, %c0_104] : memref<2x6x6x64xf32, #tpu.memory_space<vmem>>, vector<2x4x4x64xf32>
    %94 = vector.shape_cast %93 : vector<2x4x4x64xf32> to vector<32x64xf32>
    %95 = arith.truncf %94 : vector<32x64xf32> to vector<32x64xbf16>
    %c1_105 = arith.constant 1 : index
    %c0_106 = arith.constant 0 : index
    %c0_107 = arith.constant 0 : index
    %96 = vector.load %arg6[%c1_105, %c0_106, %c0_107] : memref<9x64x128xbf16, #tpu.memory_space<vmem>>, vector<1x64x128xbf16>
    %97 = vector.shape_cast %96 : vector<1x64x128xbf16> to vector<64x128xbf16>
    %cst_108 = arith.constant dense<0.000000e+00> : vector<32x128xf32>
    %98 = tpu.matmul %95, %97, %cst_108 {dimension_numbers = #tpu.dot_dimension_numbers<[1], [0], [0], [1], [0, 0, 1, 1], [], []>} : vector<32x64xbf16>, vector<64x128xbf16>, vector<32x128xf32> -> vector<32x128xf32>
    %99 = arith.addf %92, %98 : vector<32x128xf32>
    %c0_109 = arith.constant 0 : index
    %c0_110 = arith.constant 0 : index
    %c2_111 = arith.constant 2 : index
    %c0_112 = arith.constant 0 : index
    %100 = vector.load %arg12[%c0_109, %c0_110, %c2_111, %c0_112] : memref<2x6x6x64xf32, #tpu.memory_space<vmem>>, vector<2x4x4x64xf32>
    %101 = vector.shape_cast %100 : vector<2x4x4x64xf32> to vector<32x64xf32>
    %102 = arith.truncf %101 : vector<32x64xf32> to vector<32x64xbf16>
    %c2_113 = arith.constant 2 : index
    %c0_114 = arith.constant 0 : index
    %c0_115 = arith.constant 0 : index
    %103 = vector.load %arg6[%c2_113, %c0_114, %c0_115] : memref<9x64x128xbf16, #tpu.memory_space<vmem>>, vector<1x64x128xbf16>
    %104 = vector.shape_cast %103 : vector<1x64x128xbf16> to vector<64x128xbf16>
    %cst_116 = arith.constant dense<0.000000e+00> : vector<32x128xf32>
    %105 = tpu.matmul %102, %104, %cst_116 {dimension_numbers = #tpu.dot_dimension_numbers<[1], [0], [0], [1], [0, 0, 1, 1], [], []>} : vector<32x64xbf16>, vector<64x128xbf16>, vector<32x128xf32> -> vector<32x128xf32>
    %106 = arith.addf %99, %105 : vector<32x128xf32>
    %c0_117 = arith.constant 0 : index
    %c1_118 = arith.constant 1 : index
    %c0_119 = arith.constant 0 : index
    %c0_120 = arith.constant 0 : index
    %107 = vector.load %arg12[%c0_117, %c1_118, %c0_119, %c0_120] : memref<2x6x6x64xf32, #tpu.memory_space<vmem>>, vector<2x4x4x64xf32>
    %108 = vector.shape_cast %107 : vector<2x4x4x64xf32> to vector<32x64xf32>
    %109 = arith.truncf %108 : vector<32x64xf32> to vector<32x64xbf16>
    %c3_121 = arith.constant 3 : index
    %c0_122 = arith.constant 0 : index
    %c0_123 = arith.constant 0 : index
    %110 = vector.load %arg6[%c3_121, %c0_122, %c0_123] : memref<9x64x128xbf16, #tpu.memory_space<vmem>>, vector<1x64x128xbf16>
    %111 = vector.shape_cast %110 : vector<1x64x128xbf16> to vector<64x128xbf16>
    %cst_124 = arith.constant dense<0.000000e+00> : vector<32x128xf32>
    %112 = tpu.matmul %109, %111, %cst_124 {dimension_numbers = #tpu.dot_dimension_numbers<[1], [0], [0], [1], [0, 0, 1, 1], [], []>} : vector<32x64xbf16>, vector<64x128xbf16>, vector<32x128xf32> -> vector<32x128xf32>
    %113 = arith.addf %106, %112 : vector<32x128xf32>
    %c0_125 = arith.constant 0 : index
    %c1_126 = arith.constant 1 : index
    %c1_127 = arith.constant 1 : index
    %c0_128 = arith.constant 0 : index
    %114 = vector.load %arg12[%c0_125, %c1_126, %c1_127, %c0_128] : memref<2x6x6x64xf32, #tpu.memory_space<vmem>>, vector<2x4x4x64xf32>
    %115 = vector.shape_cast %114 : vector<2x4x4x64xf32> to vector<32x64xf32>
    %116 = arith.truncf %115 : vector<32x64xf32> to vector<32x64xbf16>
    %c4_129 = arith.constant 4 : index
    %c0_130 = arith.constant 0 : index
    %c0_131 = arith.constant 0 : index
    %117 = vector.load %arg6[%c4_129, %c0_130, %c0_131] : memref<9x64x128xbf16, #tpu.memory_space<vmem>>, vector<1x64x128xbf16>
    %118 = vector.shape_cast %117 : vector<1x64x128xbf16> to vector<64x128xbf16>
    %cst_132 = arith.constant dense<0.000000e+00> : vector<32x128xf32>
    %119 = tpu.matmul %116, %118, %cst_132 {dimension_numbers = #tpu.dot_dimension_numbers<[1], [0], [0], [1], [0, 0, 1, 1], [], []>} : vector<32x64xbf16>, vector<64x128xbf16>, vector<32x128xf32> -> vector<32x128xf32>
    %120 = arith.addf %113, %119 : vector<32x128xf32>
    %c0_133 = arith.constant 0 : index
    %c1_134 = arith.constant 1 : index
    %c2_135 = arith.constant 2 : index
    %c0_136 = arith.constant 0 : index
    %121 = vector.load %arg12[%c0_133, %c1_134, %c2_135, %c0_136] : memref<2x6x6x64xf32, #tpu.memory_space<vmem>>, vector<2x4x4x64xf32>
    %122 = vector.shape_cast %121 : vector<2x4x4x64xf32> to vector<32x64xf32>
    %123 = arith.truncf %122 : vector<32x64xf32> to vector<32x64xbf16>
    %c5_137 = arith.constant 5 : index
    %c0_138 = arith.constant 0 : index
    %c0_139 = arith.constant 0 : index
    %124 = vector.load %arg6[%c5_137, %c0_138, %c0_139] : memref<9x64x128xbf16, #tpu.memory_space<vmem>>, vector<1x64x128xbf16>
    %125 = vector.shape_cast %124 : vector<1x64x128xbf16> to vector<64x128xbf16>
    %cst_140 = arith.constant dense<0.000000e+00> : vector<32x128xf32>
    %126 = tpu.matmul %123, %125, %cst_140 {dimension_numbers = #tpu.dot_dimension_numbers<[1], [0], [0], [1], [0, 0, 1, 1], [], []>} : vector<32x64xbf16>, vector<64x128xbf16>, vector<32x128xf32> -> vector<32x128xf32>
    %127 = arith.addf %120, %126 : vector<32x128xf32>
    %c0_141 = arith.constant 0 : index
    %c2_142 = arith.constant 2 : index
    %c0_143 = arith.constant 0 : index
    %c0_144 = arith.constant 0 : index
    %128 = vector.load %arg12[%c0_141, %c2_142, %c0_143, %c0_144] : memref<2x6x6x64xf32, #tpu.memory_space<vmem>>, vector<2x4x4x64xf32>
    %129 = vector.shape_cast %128 : vector<2x4x4x64xf32> to vector<32x64xf32>
    %130 = arith.truncf %129 : vector<32x64xf32> to vector<32x64xbf16>
    %c6_145 = arith.constant 6 : index
    %c0_146 = arith.constant 0 : index
    %c0_147 = arith.constant 0 : index
    %131 = vector.load %arg6[%c6_145, %c0_146, %c0_147] : memref<9x64x128xbf16, #tpu.memory_space<vmem>>, vector<1x64x128xbf16>
    %132 = vector.shape_cast %131 : vector<1x64x128xbf16> to vector<64x128xbf16>
    %cst_148 = arith.constant dense<0.000000e+00> : vector<32x128xf32>
    %133 = tpu.matmul %130, %132, %cst_148 {dimension_numbers = #tpu.dot_dimension_numbers<[1], [0], [0], [1], [0, 0, 1, 1], [], []>} : vector<32x64xbf16>, vector<64x128xbf16>, vector<32x128xf32> -> vector<32x128xf32>
    %134 = arith.addf %127, %133 : vector<32x128xf32>
    %c0_149 = arith.constant 0 : index
    %c2_150 = arith.constant 2 : index
    %c1_151 = arith.constant 1 : index
    %c0_152 = arith.constant 0 : index
    %135 = vector.load %arg12[%c0_149, %c2_150, %c1_151, %c0_152] : memref<2x6x6x64xf32, #tpu.memory_space<vmem>>, vector<2x4x4x64xf32>
    %136 = vector.shape_cast %135 : vector<2x4x4x64xf32> to vector<32x64xf32>
    %137 = arith.truncf %136 : vector<32x64xf32> to vector<32x64xbf16>
    %c7_153 = arith.constant 7 : index
    %c0_154 = arith.constant 0 : index
    %c0_155 = arith.constant 0 : index
    %138 = vector.load %arg6[%c7_153, %c0_154, %c0_155] : memref<9x64x128xbf16, #tpu.memory_space<vmem>>, vector<1x64x128xbf16>
    %139 = vector.shape_cast %138 : vector<1x64x128xbf16> to vector<64x128xbf16>
    %cst_156 = arith.constant dense<0.000000e+00> : vector<32x128xf32>
    %140 = tpu.matmul %137, %139, %cst_156 {dimension_numbers = #tpu.dot_dimension_numbers<[1], [0], [0], [1], [0, 0, 1, 1], [], []>} : vector<32x64xbf16>, vector<64x128xbf16>, vector<32x128xf32> -> vector<32x128xf32>
    %141 = arith.addf %134, %140 : vector<32x128xf32>
    %c0_157 = arith.constant 0 : index
    %c2_158 = arith.constant 2 : index
    %c2_159 = arith.constant 2 : index
    %c0_160 = arith.constant 0 : index
    %142 = vector.load %arg12[%c0_157, %c2_158, %c2_159, %c0_160] : memref<2x6x6x64xf32, #tpu.memory_space<vmem>>, vector<2x4x4x64xf32>
    %143 = vector.shape_cast %142 : vector<2x4x4x64xf32> to vector<32x64xf32>
    %144 = arith.truncf %143 : vector<32x64xf32> to vector<32x64xbf16>
    %c8_161 = arith.constant 8 : index
    %c0_162 = arith.constant 0 : index
    %c0_163 = arith.constant 0 : index
    %145 = vector.load %arg6[%c8_161, %c0_162, %c0_163] : memref<9x64x128xbf16, #tpu.memory_space<vmem>>, vector<1x64x128xbf16>
    %146 = vector.shape_cast %145 : vector<1x64x128xbf16> to vector<64x128xbf16>
    %cst_164 = arith.constant dense<0.000000e+00> : vector<32x128xf32>
    %147 = tpu.matmul %144, %146, %cst_164 {dimension_numbers = #tpu.dot_dimension_numbers<[1], [0], [0], [1], [0, 0, 1, 1], [], []>} : vector<32x64xbf16>, vector<64x128xbf16>, vector<32x128xf32> -> vector<32x128xf32>
    %148 = arith.addf %141, %147 : vector<32x128xf32>
    %c0_165 = arith.constant 0 : index
    %c0_166 = arith.constant 0 : index
    %149 = vector.load %arg7[%c0_165, %c0_166] : memref<1x128xf32, #tpu.memory_space<vmem>>, vector<1x128xf32>
    %150 = vector.broadcast %149 : vector<1x128xf32> to vector<32x128xf32>
    %151 = arith.addf %148, %150 : vector<32x128xf32>
    %cst_167 = arith.constant 0.000000e+00 : f32
    %152 = vector.broadcast %cst_167 : f32 to vector<32x128xf32>
    %153 = arith.maximumf %151, %152 : vector<32x128xf32>
    %154 = vector.extract_strided_slice %153 {offsets = [0, 0], sizes = [1, 128], strides = [1, 1]} : vector<32x128xf32> to vector<1x128xf32>
    %c0_168 = arith.constant 0 : index
    %c0_169 = arith.constant 0 : index
    %155 = vector.load %arg13[%c0_168, %c0_169] : memref<2x2048xf32, #tpu.memory_space<vmem>>, vector<1x128xf32>
    tpu.vector_store %arg13[%c0_168, %c0_169], %154 {strides = array<i32>} : memref<2x2048xf32, #tpu.memory_space<vmem>>, vector<1x128xf32>,
    %156 = vector.extract_strided_slice %153 {offsets = [1, 0], sizes = [1, 128], strides = [1, 1]} : vector<32x128xf32> to vector<1x128xf32>
    %c0_170 = arith.constant 0 : index
    %c128 = arith.constant 128 : index
    %157 = vector.load %arg13[%c0_170, %c128] : memref<2x2048xf32, #tpu.memory_space<vmem>>, vector<1x128xf32>
    tpu.vector_store %arg13[%c0_170, %c128], %156 {strides = array<i32>} : memref<2x2048xf32, #tpu.memory_space<vmem>>, vector<1x128xf32>,
    %158 = vector.extract_strided_slice %153 {offsets = [2, 0], sizes = [1, 128], strides = [1, 1]} : vector<32x128xf32> to vector<1x128xf32>
    %c0_171 = arith.constant 0 : index
    %c256 = arith.constant 256 : index
    %159 = vector.load %arg13[%c0_171, %c256] : memref<2x2048xf32, #tpu.memory_space<vmem>>, vector<1x128xf32>
    tpu.vector_store %arg13[%c0_171, %c256], %158 {strides = array<i32>} : memref<2x2048xf32, #tpu.memory_space<vmem>>, vector<1x128xf32>,
    %160 = vector.extract_strided_slice %153 {offsets = [3, 0], sizes = [1, 128], strides = [1, 1]} : vector<32x128xf32> to vector<1x128xf32>
    %c0_172 = arith.constant 0 : index
    %c384 = arith.constant 384 : index
    %161 = vector.load %arg13[%c0_172, %c384] : memref<2x2048xf32, #tpu.memory_space<vmem>>, vector<1x128xf32>
    tpu.vector_store %arg13[%c0_172, %c384], %160 {strides = array<i32>} : memref<2x2048xf32, #tpu.memory_space<vmem>>, vector<1x128xf32>,
    %162 = vector.extract_strided_slice %153 {offsets = [4, 0], sizes = [1, 128], strides = [1, 1]} : vector<32x128xf32> to vector<1x128xf32>
    %c0_173 = arith.constant 0 : index
    %c512 = arith.constant 512 : index
    %163 = vector.load %arg13[%c0_173, %c512] : memref<2x2048xf32, #tpu.memory_space<vmem>>, vector<1x128xf32>
    tpu.vector_store %arg13[%c0_173, %c512], %162 {strides = array<i32>} : memref<2x2048xf32, #tpu.memory_space<vmem>>, vector<1x128xf32>,
    %164 = vector.extract_strided_slice %153 {offsets = [5, 0], sizes = [1, 128], strides = [1, 1]} : vector<32x128xf32> to vector<1x128xf32>
    %c0_174 = arith.constant 0 : index
    %c640 = arith.constant 640 : index
    %165 = vector.load %arg13[%c0_174, %c640] : memref<2x2048xf32, #tpu.memory_space<vmem>>, vector<1x128xf32>
    tpu.vector_store %arg13[%c0_174, %c640], %164 {strides = array<i32>} : memref<2x2048xf32, #tpu.memory_space<vmem>>, vector<1x128xf32>,
    %166 = vector.extract_strided_slice %153 {offsets = [6, 0], sizes = [1, 128], strides = [1, 1]} : vector<32x128xf32> to vector<1x128xf32>
    %c0_175 = arith.constant 0 : index
    %c768 = arith.constant 768 : index
    %167 = vector.load %arg13[%c0_175, %c768] : memref<2x2048xf32, #tpu.memory_space<vmem>>, vector<1x128xf32>
    tpu.vector_store %arg13[%c0_175, %c768], %166 {strides = array<i32>} : memref<2x2048xf32, #tpu.memory_space<vmem>>, vector<1x128xf32>,
    %168 = vector.extract_strided_slice %153 {offsets = [7, 0], sizes = [1, 128], strides = [1, 1]} : vector<32x128xf32> to vector<1x128xf32>
    %c0_176 = arith.constant 0 : index
    %c896 = arith.constant 896 : index
    %169 = vector.load %arg13[%c0_176, %c896] : memref<2x2048xf32, #tpu.memory_space<vmem>>, vector<1x128xf32>
    tpu.vector_store %arg13[%c0_176, %c896], %168 {strides = array<i32>} : memref<2x2048xf32, #tpu.memory_space<vmem>>, vector<1x128xf32>,
    %170 = vector.extract_strided_slice %153 {offsets = [8, 0], sizes = [1, 128], strides = [1, 1]} : vector<32x128xf32> to vector<1x128xf32>
    %c0_177 = arith.constant 0 : index
    %c1024 = arith.constant 1024 : index
    %171 = vector.load %arg13[%c0_177, %c1024] : memref<2x2048xf32, #tpu.memory_space<vmem>>, vector<1x128xf32>
    tpu.vector_store %arg13[%c0_177, %c1024], %170 {strides = array<i32>} : memref<2x2048xf32, #tpu.memory_space<vmem>>, vector<1x128xf32>,
    %172 = vector.extract_strided_slice %153 {offsets = [9, 0], sizes = [1, 128], strides = [1, 1]} : vector<32x128xf32> to vector<1x128xf32>
    %c0_178 = arith.constant 0 : index
    %c1152 = arith.constant 1152 : index
    %173 = vector.load %arg13[%c0_178, %c1152] : memref<2x2048xf32, #tpu.memory_space<vmem>>, vector<1x128xf32>
    tpu.vector_store %arg13[%c0_178, %c1152], %172 {strides = array<i32>} : memref<2x2048xf32, #tpu.memory_space<vmem>>, vector<1x128xf32>,
    %174 = vector.extract_strided_slice %153 {offsets = [10, 0], sizes = [1, 128], strides = [1, 1]} : vector<32x128xf32> to vector<1x128xf32>
    %c0_179 = arith.constant 0 : index
    %c1280 = arith.constant 1280 : index
    %175 = vector.load %arg13[%c0_179, %c1280] : memref<2x2048xf32, #tpu.memory_space<vmem>>, vector<1x128xf32>
    tpu.vector_store %arg13[%c0_179, %c1280], %174 {strides = array<i32>} : memref<2x2048xf32, #tpu.memory_space<vmem>>, vector<1x128xf32>,
    %176 = vector.extract_strided_slice %153 {offsets = [11, 0], sizes = [1, 128], strides = [1, 1]} : vector<32x128xf32> to vector<1x128xf32>
    %c0_180 = arith.constant 0 : index
    %c1408 = arith.constant 1408 : index
    %177 = vector.load %arg13[%c0_180, %c1408] : memref<2x2048xf32, #tpu.memory_space<vmem>>, vector<1x128xf32>
    tpu.vector_store %arg13[%c0_180, %c1408], %176 {strides = array<i32>} : memref<2x2048xf32, #tpu.memory_space<vmem>>, vector<1x128xf32>,
    %178 = vector.extract_strided_slice %153 {offsets = [12, 0], sizes = [1, 128], strides = [1, 1]} : vector<32x128xf32> to vector<1x128xf32>
    %c0_181 = arith.constant 0 : index
    %c1536 = arith.constant 1536 : index
    %179 = vector.load %arg13[%c0_181, %c1536] : memref<2x2048xf32, #tpu.memory_space<vmem>>, vector<1x128xf32>
    tpu.vector_store %arg13[%c0_181, %c1536], %178 {strides = array<i32>} : memref<2x2048xf32, #tpu.memory_space<vmem>>, vector<1x128xf32>,
    %180 = vector.extract_strided_slice %153 {offsets = [13, 0], sizes = [1, 128], strides = [1, 1]} : vector<32x128xf32> to vector<1x128xf32>
    %c0_182 = arith.constant 0 : index
    %c1664 = arith.constant 1664 : index
    %181 = vector.load %arg13[%c0_182, %c1664] : memref<2x2048xf32, #tpu.memory_space<vmem>>, vector<1x128xf32>
    tpu.vector_store %arg13[%c0_182, %c1664], %180 {strides = array<i32>} : memref<2x2048xf32, #tpu.memory_space<vmem>>, vector<1x128xf32>,
    %182 = vector.extract_strided_slice %153 {offsets = [14, 0], sizes = [1, 128], strides = [1, 1]} : vector<32x128xf32> to vector<1x128xf32>
    %c0_183 = arith.constant 0 : index
    %c1792 = arith.constant 1792 : index
    %183 = vector.load %arg13[%c0_183, %c1792] : memref<2x2048xf32, #tpu.memory_space<vmem>>, vector<1x128xf32>
    tpu.vector_store %arg13[%c0_183, %c1792], %182 {strides = array<i32>} : memref<2x2048xf32, #tpu.memory_space<vmem>>, vector<1x128xf32>,
    %184 = vector.extract_strided_slice %153 {offsets = [15, 0], sizes = [1, 128], strides = [1, 1]} : vector<32x128xf32> to vector<1x128xf32>
    %c0_184 = arith.constant 0 : index
    %c1920 = arith.constant 1920 : index
    %185 = vector.load %arg13[%c0_184, %c1920] : memref<2x2048xf32, #tpu.memory_space<vmem>>, vector<1x128xf32>
    tpu.vector_store %arg13[%c0_184, %c1920], %184 {strides = array<i32>} : memref<2x2048xf32, #tpu.memory_space<vmem>>, vector<1x128xf32>,
    %186 = vector.extract_strided_slice %153 {offsets = [16, 0], sizes = [1, 128], strides = [1, 1]} : vector<32x128xf32> to vector<1x128xf32>
    %c1_185 = arith.constant 1 : index
    %c0_186 = arith.constant 0 : index
    %187 = vector.load %arg13[%c1_185, %c0_186] : memref<2x2048xf32, #tpu.memory_space<vmem>>, vector<1x128xf32>
    tpu.vector_store %arg13[%c1_185, %c0_186], %186 {strides = array<i32>} : memref<2x2048xf32, #tpu.memory_space<vmem>>, vector<1x128xf32>,
    %188 = vector.extract_strided_slice %153 {offsets = [17, 0], sizes = [1, 128], strides = [1, 1]} : vector<32x128xf32> to vector<1x128xf32>
    %c1_187 = arith.constant 1 : index
    %c128_188 = arith.constant 128 : index
    %189 = vector.load %arg13[%c1_187, %c128_188] : memref<2x2048xf32, #tpu.memory_space<vmem>>, vector<1x128xf32>
    tpu.vector_store %arg13[%c1_187, %c128_188], %188 {strides = array<i32>} : memref<2x2048xf32, #tpu.memory_space<vmem>>, vector<1x128xf32>,
    %190 = vector.extract_strided_slice %153 {offsets = [18, 0], sizes = [1, 128], strides = [1, 1]} : vector<32x128xf32> to vector<1x128xf32>
    %c1_189 = arith.constant 1 : index
    %c256_190 = arith.constant 256 : index
    %191 = vector.load %arg13[%c1_189, %c256_190] : memref<2x2048xf32, #tpu.memory_space<vmem>>, vector<1x128xf32>
    tpu.vector_store %arg13[%c1_189, %c256_190], %190 {strides = array<i32>} : memref<2x2048xf32, #tpu.memory_space<vmem>>, vector<1x128xf32>,
    %192 = vector.extract_strided_slice %153 {offsets = [19, 0], sizes = [1, 128], strides = [1, 1]} : vector<32x128xf32> to vector<1x128xf32>
    %c1_191 = arith.constant 1 : index
    %c384_192 = arith.constant 384 : index
    %193 = vector.load %arg13[%c1_191, %c384_192] : memref<2x2048xf32, #tpu.memory_space<vmem>>, vector<1x128xf32>
    tpu.vector_store %arg13[%c1_191, %c384_192], %192 {strides = array<i32>} : memref<2x2048xf32, #tpu.memory_space<vmem>>, vector<1x128xf32>,
    %194 = vector.extract_strided_slice %153 {offsets = [20, 0], sizes = [1, 128], strides = [1, 1]} : vector<32x128xf32> to vector<1x128xf32>
    %c1_193 = arith.constant 1 : index
    %c512_194 = arith.constant 512 : index
    %195 = vector.load %arg13[%c1_193, %c512_194] : memref<2x2048xf32, #tpu.memory_space<vmem>>, vector<1x128xf32>
    tpu.vector_store %arg13[%c1_193, %c512_194], %194 {strides = array<i32>} : memref<2x2048xf32, #tpu.memory_space<vmem>>, vector<1x128xf32>,
    %196 = vector.extract_strided_slice %153 {offsets = [21, 0], sizes = [1, 128], strides = [1, 1]} : vector<32x128xf32> to vector<1x128xf32>
    %c1_195 = arith.constant 1 : index
    %c640_196 = arith.constant 640 : index
    %197 = vector.load %arg13[%c1_195, %c640_196] : memref<2x2048xf32, #tpu.memory_space<vmem>>, vector<1x128xf32>
    tpu.vector_store %arg13[%c1_195, %c640_196], %196 {strides = array<i32>} : memref<2x2048xf32, #tpu.memory_space<vmem>>, vector<1x128xf32>,
    %198 = vector.extract_strided_slice %153 {offsets = [22, 0], sizes = [1, 128], strides = [1, 1]} : vector<32x128xf32> to vector<1x128xf32>
    %c1_197 = arith.constant 1 : index
    %c768_198 = arith.constant 768 : index
    %199 = vector.load %arg13[%c1_197, %c768_198] : memref<2x2048xf32, #tpu.memory_space<vmem>>, vector<1x128xf32>
    tpu.vector_store %arg13[%c1_197, %c768_198], %198 {strides = array<i32>} : memref<2x2048xf32, #tpu.memory_space<vmem>>, vector<1x128xf32>,
    %200 = vector.extract_strided_slice %153 {offsets = [23, 0], sizes = [1, 128], strides = [1, 1]} : vector<32x128xf32> to vector<1x128xf32>
    %c1_199 = arith.constant 1 : index
    %c896_200 = arith.constant 896 : index
    %201 = vector.load %arg13[%c1_199, %c896_200] : memref<2x2048xf32, #tpu.memory_space<vmem>>, vector<1x128xf32>
    tpu.vector_store %arg13[%c1_199, %c896_200], %200 {strides = array<i32>} : memref<2x2048xf32, #tpu.memory_space<vmem>>, vector<1x128xf32>,
    %202 = vector.extract_strided_slice %153 {offsets = [24, 0], sizes = [1, 128], strides = [1, 1]} : vector<32x128xf32> to vector<1x128xf32>
    %c1_201 = arith.constant 1 : index
    %c1024_202 = arith.constant 1024 : index
    %203 = vector.load %arg13[%c1_201, %c1024_202] : memref<2x2048xf32, #tpu.memory_space<vmem>>, vector<1x128xf32>
    tpu.vector_store %arg13[%c1_201, %c1024_202], %202 {strides = array<i32>} : memref<2x2048xf32, #tpu.memory_space<vmem>>, vector<1x128xf32>,
    %204 = vector.extract_strided_slice %153 {offsets = [25, 0], sizes = [1, 128], strides = [1, 1]} : vector<32x128xf32> to vector<1x128xf32>
    %c1_203 = arith.constant 1 : index
    %c1152_204 = arith.constant 1152 : index
    %205 = vector.load %arg13[%c1_203, %c1152_204] : memref<2x2048xf32, #tpu.memory_space<vmem>>, vector<1x128xf32>
    tpu.vector_store %arg13[%c1_203, %c1152_204], %204 {strides = array<i32>} : memref<2x2048xf32, #tpu.memory_space<vmem>>, vector<1x128xf32>,
    %206 = vector.extract_strided_slice %153 {offsets = [26, 0], sizes = [1, 128], strides = [1, 1]} : vector<32x128xf32> to vector<1x128xf32>
    %c1_205 = arith.constant 1 : index
    %c1280_206 = arith.constant 1280 : index
    %207 = vector.load %arg13[%c1_205, %c1280_206] : memref<2x2048xf32, #tpu.memory_space<vmem>>, vector<1x128xf32>
    tpu.vector_store %arg13[%c1_205, %c1280_206], %206 {strides = array<i32>} : memref<2x2048xf32, #tpu.memory_space<vmem>>, vector<1x128xf32>,
    %208 = vector.extract_strided_slice %153 {offsets = [27, 0], sizes = [1, 128], strides = [1, 1]} : vector<32x128xf32> to vector<1x128xf32>
    %c1_207 = arith.constant 1 : index
    %c1408_208 = arith.constant 1408 : index
    %209 = vector.load %arg13[%c1_207, %c1408_208] : memref<2x2048xf32, #tpu.memory_space<vmem>>, vector<1x128xf32>
    tpu.vector_store %arg13[%c1_207, %c1408_208], %208 {strides = array<i32>} : memref<2x2048xf32, #tpu.memory_space<vmem>>, vector<1x128xf32>,
    %210 = vector.extract_strided_slice %153 {offsets = [28, 0], sizes = [1, 128], strides = [1, 1]} : vector<32x128xf32> to vector<1x128xf32>
    %c1_209 = arith.constant 1 : index
    %c1536_210 = arith.constant 1536 : index
    %211 = vector.load %arg13[%c1_209, %c1536_210] : memref<2x2048xf32, #tpu.memory_space<vmem>>, vector<1x128xf32>
    tpu.vector_store %arg13[%c1_209, %c1536_210], %210 {strides = array<i32>} : memref<2x2048xf32, #tpu.memory_space<vmem>>, vector<1x128xf32>,
    %212 = vector.extract_strided_slice %153 {offsets = [29, 0], sizes = [1, 128], strides = [1, 1]} : vector<32x128xf32> to vector<1x128xf32>
    %c1_211 = arith.constant 1 : index
    %c1664_212 = arith.constant 1664 : index
    %213 = vector.load %arg13[%c1_211, %c1664_212] : memref<2x2048xf32, #tpu.memory_space<vmem>>, vector<1x128xf32>
    tpu.vector_store %arg13[%c1_211, %c1664_212], %212 {strides = array<i32>} : memref<2x2048xf32, #tpu.memory_space<vmem>>, vector<1x128xf32>,
    %214 = vector.extract_strided_slice %153 {offsets = [30, 0], sizes = [1, 128], strides = [1, 1]} : vector<32x128xf32> to vector<1x128xf32>
    %c1_213 = arith.constant 1 : index
    %c1792_214 = arith.constant 1792 : index
    %215 = vector.load %arg13[%c1_213, %c1792_214] : memref<2x2048xf32, #tpu.memory_space<vmem>>, vector<1x128xf32>
    tpu.vector_store %arg13[%c1_213, %c1792_214], %214 {strides = array<i32>} : memref<2x2048xf32, #tpu.memory_space<vmem>>, vector<1x128xf32>,
    %216 = vector.extract_strided_slice %153 {offsets = [31, 0], sizes = [1, 128], strides = [1, 1]} : vector<32x128xf32> to vector<1x128xf32>
    %c1_215 = arith.constant 1 : index
    %c1920_216 = arith.constant 1920 : index
    %217 = vector.load %arg13[%c1_215, %c1920_216] : memref<2x2048xf32, #tpu.memory_space<vmem>>, vector<1x128xf32>
    tpu.vector_store %arg13[%c1_215, %c1920_216], %216 {strides = array<i32>} : memref<2x2048xf32, #tpu.memory_space<vmem>>, vector<1x128xf32>,
    %c0_217 = arith.constant 0 : index
    %c0_218 = arith.constant 0 : index
    %218 = vector.load %arg13[%c0_217, %c0_218] : memref<2x2048xf32, #tpu.memory_space<vmem>>, vector<2x2048xf32>
    %219 = arith.truncf %218 : vector<2x2048xf32> to vector<2x2048xbf16>
    %c0_219 = arith.constant 0 : index
    %c0_220 = arith.constant 0 : index
    %220 = vector.load %arg8[%c0_219, %c0_220] : memref<2048x128xbf16, #tpu.memory_space<vmem>>, vector<2048x128xbf16>
    %cst_221 = arith.constant dense<0.000000e+00> : vector<2x128xf32>
    %221 = tpu.matmul %219, %220, %cst_221 {dimension_numbers = #tpu.dot_dimension_numbers<[1], [0], [0], [1], [0, 0, 1, 1], [], []>} : vector<2x2048xbf16>, vector<2048x128xbf16>, vector<2x128xf32> -> vector<2x128xf32>
    %c0_222 = arith.constant 0 : index
    %c0_223 = arith.constant 0 : index
    %222 = vector.load %arg9[%c0_222, %c0_223] : memref<1x128xf32, #tpu.memory_space<vmem>>, vector<1x128xf32>
    %223 = vector.broadcast %222 : vector<1x128xf32> to vector<2x128xf32>
    %224 = arith.addf %221, %223 : vector<2x128xf32>
    %c0_224 = arith.constant 0 : index
    %c0_225 = arith.constant 0 : index
    %225 = vector.load %arg10[%c0_224, %c0_225] : memref<2x128xf32, #tpu.memory_space<vmem>>, vector<2x128xf32>
    tpu.vector_store %arg10[%c0_224, %c0_225], %224 {strides = array<i32>} : memref<2x128xf32, #tpu.memory_space<vmem>>, vector<2x128xf32>,
    return
  }
  func.func @transform_0(%arg0: i32) -> (i32, i32) {
    %c0_i32 = arith.constant 0 : i32
    %c0_i32_0 = arith.constant 0 : i32
    %c0_i32_1 = arith.constant 0 : i32
    return %c0_i32, %c0_i32_0 : i32, i32
  }
  func.func @transform_1(%arg0: i32) -> (i32, i32) {
    %c0_i32 = arith.constant 0 : i32
    %c0_i32_0 = arith.constant 0 : i32
    %c0_i32_1 = arith.constant 0 : i32
    return %c0_i32, %c0_i32_0 : i32, i32
  }
  func.func @transform_2(%arg0: i32) -> (i32, i32) {
    %c0_i32 = arith.constant 0 : i32
    %c0_i32_0 = arith.constant 0 : i32
    %c0_i32_1 = arith.constant 0 : i32
    return %c0_i32, %c0_i32_0 : i32, i32
  }
  func.func @transform_3(%arg0: i32) -> (i32, i32, i32) {
    %c0_i32 = arith.constant 0 : i32
    %c0_i32_0 = arith.constant 0 : i32
    %c0_i32_1 = arith.constant 0 : i32
    %c0_i32_2 = arith.constant 0 : i32
    return %c0_i32, %c0_i32_0, %c0_i32_1 : i32, i32, i32
  }
  func.func @transform_4(%arg0: i32) -> (i32, i32) {
    %c0_i32 = arith.constant 0 : i32
    %c0_i32_0 = arith.constant 0 : i32
    %c0_i32_1 = arith.constant 0 : i32
    return %c0_i32, %c0_i32_0 : i32, i32
  }
  func.func @transform_5(%arg0: i32) -> (i32, i32, i32) {
    %c0_i32 = arith.constant 0 : i32
    %c0_i32_0 = arith.constant 0 : i32
    %c0_i32_1 = arith.constant 0 : i32
    %c0_i32_2 = arith.constant 0 : i32
    return %c0_i32, %c0_i32_0, %c0_i32_1 : i32, i32, i32
  }
  func.func @transform_6(%arg0: i32) -> (i32, i32) {
    %c0_i32 = arith.constant 0 : i32
    %c0_i32_0 = arith.constant 0 : i32
    %c0_i32_1 = arith.constant 0 : i32
    return %c0_i32, %c0_i32_0 : i32, i32
  }
  func.func @transform_7(%arg0: i32) -> (i32, i32) {
    %c0_i32 = arith.constant 0 : i32
    %c0_i32_0 = arith.constant 0 : i32
    %c0_i32_1 = arith.constant 0 : i32
    return %c0_i32, %c0_i32_0 : i32, i32
  }
  func.func @transform_8(%arg0: i32) -> (i32, i32) {
    %c0_i32 = arith.constant 0 : i32
    %c0_i32_0 = arith.constant 0 : i32
    %c0_i32_1 = arith.constant 0 : i32
    return %c0_i32, %c0_i32_0 : i32, i32
  }
  func.func @transform_9(%arg0: i32) -> (i32, i32) {
    %c0_i32 = arith.constant 0 : i32
    %c0_i32_0 = arith.constant 0 : i32
    %c0_i32_1 = arith.constant 0 : i32
    return %c0_i32, %c0_i32_0 : i32, i32
  }
}

</mosaic_0001>

<llo_original>
// kernel: autoencoder_forward.1
$region0: #{autoencoder_forward.1}
  #allocation0 [shape = 'u32[]', space=smem, size = 0x4, offset = 0x4, fixed_abs, tag = 'smem constant byte address 0x4 - core index']
  #allocation1 [shape = 'u32[144,128]{1,0:T(1,128)}', space=vmem, size = 0x12000, scoped, tag = 'internal scratch']
  #allocation2 [shape = 'f32[2,10,10,32]{3,2,1,0:T(8,128)}', space=vmem, size = 0x28000, scoped, tag = 'scratch operand']
  #allocation3 [shape = 'f32[2,6,6,64]{3,2,1,0:T(8,128)}', space=vmem, size = 0xc000, scoped, tag = 'scratch operand']
  #allocation4 [shape = 'f32[2,2048]{1,0:T(2,128)}', space=vmem, size = 0x4000, scoped, tag = 'scratch operand']
  %s0 = inlined_call_operand.vmem [shape: bf16[128,32], index: 0, kind: input, shape index: {}]
  %s1 = inlined_call_operand.vmem [shape: bf16[32,32], index: 1, kind: input, shape index: {}]
  %s2 = inlined_call_operand.vmem [shape: f32[1,32], index: 2, kind: input, shape index: {}]
  %s3 = inlined_call_operand.vmem [shape: bf16[9,32,64], index: 3, kind: input, shape index: {}]
  %s4 = inlined_call_operand.vmem [shape: f32[1,64], index: 4, kind: input, shape index: {}]
  %s5 = inlined_call_operand.vmem [shape: bf16[9,64,128], index: 5, kind: input, shape index: {}]
  %s6 = inlined_call_operand.vmem [shape: f32[1,128], index: 6, kind: input, shape index: {}]
  %s7 = inlined_call_operand.vmem [shape: bf16[2048,128], index: 7, kind: input, shape index: {}]
  %s8 = inlined_call_operand.vmem [shape: f32[1,128], index: 8, kind: input, shape index: {}]
  %s9 = inlined_call_operand.hbm [shape: f32[2,128], index: 9, kind: output, shape index: {}]
  %s10 = sld [smem:[#allocation0]]
  $region46: #{autoencoder_forward.1} parent=0
    _
  %s12 = ssub.s32 1, %s10
  %s13 = scalar_select 0, %s12, %s10
  $region1: #{autoencoder_forward.1} parent=0
    #allocation5 [shape = 'u8[1024]{0}', space=vmem, size = 0x400, scoped, tag = 'output window, operand 0, single buffered']
    #allocation6 [shape = 's32[1]{0}', space=sflag, size = 0x4, scoped, tag = 'scoped memory for autoencoder_forward.1']
    %14 = vsyncpa [#allocation6], 0
    // Predicated region
    $region2: #{autoencoder_forward.1} parent=1 // pred_check
      _
    $region3: #{autoencoder_forward.1} parent=1 // pred_check_branch
      %16 = sbr.rel (0) target = $region5
    $region4: #{autoencoder_forward.1} parent=1 // pred_region
      _
    $region5: #{autoencoder_forward.1} parent=1 // pred_fallthru
      _
    // Predicated region
    $region6: #{autoencoder_forward.1} parent=1 // pred_check
      _
    $region7: #{autoencoder_forward.1} parent=1 // pred_check_branch
      %18 = sbr.rel (0) target = $region9
    $region8: #{autoencoder_forward.1} parent=1 // pred_region
      _
    $region9: #{autoencoder_forward.1} parent=1 // pred_fallthru
      _
    // Predicated region
    $region10: #{autoencoder_forward.1} parent=1 // pred_check
      _
    $region11: #{autoencoder_forward.1} parent=1 // pred_check_branch
      %20 = sbr.rel (0) target = $region13
    $region12: #{autoencoder_forward.1} parent=1 // pred_region
      _
    $region13: #{autoencoder_forward.1} parent=1 // pred_fallthru
      _
    // Predicated region
    $region14: #{autoencoder_forward.1} parent=1 // pred_check
      _
    $region15: #{autoencoder_forward.1} parent=1 // pred_check_branch
      %22 = sbr.rel (0) target = $region17
    $region16: #{autoencoder_forward.1} parent=1 // pred_region
      _
    $region17: #{autoencoder_forward.1} parent=1 // pred_fallthru
      _
    // Predicated region
    $region18: #{autoencoder_forward.1} parent=1 // pred_check
      _
    $region19: #{autoencoder_forward.1} parent=1 // pred_check_branch
      %24 = sbr.rel (0) target = $region21
    $region20: #{autoencoder_forward.1} parent=1 // pred_region
      _
    $region21: #{autoencoder_forward.1} parent=1 // pred_fallthru
      _
    // Predicated region
    $region22: #{autoencoder_forward.1} parent=1 // pred_check
      _
    $region23: #{autoencoder_forward.1} parent=1 // pred_check_branch
      %26 = sbr.rel (0) target = $region25
    $region24: #{autoencoder_forward.1} parent=1 // pred_region
      _
    $region25: #{autoencoder_forward.1} parent=1 // pred_fallthru
      _
    // Predicated region
    $region26: #{autoencoder_forward.1} parent=1 // pred_check
      _
    $region27: #{autoencoder_forward.1} parent=1 // pred_check_branch
      %28 = sbr.rel (0) target = $region29
    $region28: #{autoencoder_forward.1} parent=1 // pred_region
      _
    $region29: #{autoencoder_forward.1} parent=1 // pred_fallthru
      _
    // Predicated region
    $region30: #{autoencoder_forward.1} parent=1 // pred_check
      _
    $region31: #{autoencoder_forward.1} parent=1 // pred_check_branch
      %30 = sbr.rel (0) target = $region33
    $region32: #{autoencoder_forward.1} parent=1 // pred_region
      _
    $region33: #{autoencoder_forward.1} parent=1 // pred_fallthru
      _
    // Predicated region
    $region34: #{autoencoder_forward.1} parent=1 // pred_check
      _
    $region35: #{autoencoder_forward.1} parent=1 // pred_check_branch
      %32 = sbr.rel (0) target = $region37
    $region36: #{autoencoder_forward.1} parent=1 // pred_region
      _
    $region37: #{autoencoder_forward.1} parent=1 // pred_fallthru
      _
    %v34 = vld [vmem:[%s0] sm:$0xf]
    %v35 = vld [vmem:[%s0 + $0x4] sm:$0xf]
    %v36 = vld [vmem:[%s0 + $0x8] sm:$0xf]
    %v37 = vld [vmem:[%s0 + $0xc] sm:$0xf]
    %v38 = vld [vmem:[%s0 + $0x10] sm:$0xf]
    %v39 = vld [vmem:[%s0 + $0x14] sm:$0xf]
    %v40 = vld [vmem:[%s0 + $0x18] sm:$0xf]
    %v41 = vld [vmem:[%s0 + $0x1c] sm:$0xf]
    %v42 = vld [vmem:[%s0 + $0x20] sm:$0xf]
    %v43 = vld [vmem:[%s0 + $0x24] sm:$0xf]
    %v44 = vld [vmem:[%s0 + $0x28] sm:$0xf]
    %v45 = vld [vmem:[%s0 + $0x2c] sm:$0xf]
    %v46 = vld [vmem:[%s0 + $0x30] sm:$0xf]
    %v47 = vld [vmem:[%s0 + $0x34] sm:$0xf]
    %v48 = vld [vmem:[%s0 + $0x38] sm:$0xf]
    %v49 = vld [vmem:[%s0 + $0x3c] sm:$0xf]
    %v50 = vld [vmem:[%s1] sm:$0xf]
    %v51 = vld [vmem:[%s1 + $0x4] sm:$0xf]
    %v52 = vld [vmem:[%s1 + $0x8] sm:$0xf]
    %v53 = vld [vmem:[%s1 + $0xc] sm:$0xf]
    %v54 = vld [vmem:[%s2] sm:$0x1]
    %v56 = vlaneseq
    %v57 = vshrl.u32 %v56, 7
    %v58 = vsub.s32 0, %v57
    %v59 = vrot.slane %v54, %v58
    %v77 = vunpack.c.l.b16 %v34
    %v78 = vunpack.c.l.b16 %v35
    %v79 = vunpack.c.l.b16 %v36
    %v80 = vunpack.c.l.b16 %v37
    %v81 = vunpack.c.l.b16 %v38
    %v82 = vunpack.c.l.b16 %v39
    %v83 = vunpack.c.l.b16 %v40
    %v84 = vunpack.c.l.b16 %v41
    %v85 = vunpack.c.l.b16 %v42
    %v86 = vunpack.c.l.b16 %v43
    %v87 = vunpack.c.l.b16 %v44
    %v88 = vunpack.c.l.b16 %v45
    %v89 = vunpack.c.l.b16 %v46
    %v90 = vunpack.c.l.b16 %v47
    %v91 = vunpack.c.l.b16 %v48
    %v92 = vunpack.c.l.b16 %v49
    %v93 = vpack.c.b16 %v78, %v77
    %v94 = vpack.c.b16 %v80, %v79
    %v95 = vpack.c.b16 %v82, %v81
    %v96 = vpack.c.b16 %v84, %v83
    %v97 = vpack.c.b16 %v86, %v85
    %v98 = vpack.c.b16 %v88, %v87
    %v99 = vpack.c.b16 %v90, %v89
    %v100 = vpack.c.b16 %v92, %v91
    %v105 = vunpack.c.l.b16 %v50
    %v106 = vunpack.c.l.b16 %v51
    %v107 = vunpack.c.l.b16 %v52
    %v108 = vunpack.c.l.b16 %v53
    %v109 = vpack.c.b16 %v106, %v105
    %v110 = vpack.c.b16 %v108, %v107
    %vm113 = vcmask 261120
    %v115 = vsel %vm113, %v93, 0
    %v118 = vsel %vm113, %v94, 0
    %v121 = vsel %vm113, %v95, 0
    %v124 = vsel %vm113, %v96, 0
    %v127 = vsel %vm113, %v97, 0
    %v130 = vsel %vm113, %v98, 0
    %v133 = vsel %vm113, %v99, 0
    %v136 = vsel %vm113, %v100, 0
    %138 = vmatprep.subr.bf16.mxu0 0
    %139 = vmatpush1.bf16.msra.mxu0 %v109
    %140 = vmatprep.subr.bf16.mxu0 0
    %141 = vmatpush1.bf16.msra.mxu0 %v110
    %142 = vmatprep.subr.bf16.mxu0 0
    %143 = vmatpush1.bf16.msra.mxu0 0
    %144 = vmatprep.subr.bf16.mxu0 0
    %145 = vmatpush1.bf16.msra.mxu0 0
    %146 = vmatprep.subr.bf16.mxu0 0
    %147 = vmatpush1.bf16.msra.mxu0 0
    %148 = vmatprep.subr.bf16.mxu0 0
    %149 = vmatpush1.bf16.msra.mxu0 0
    %150 = vmatprep.subr.bf16.mxu0 0
    %151 = vmatpush1.bf16.msra.mxu0 0
    %152 = vmatprep.subr.bf16.mxu0 0
    %153 = vmatpush1.bf16.msra.mxu0 0
    %154 = vmatprep.subr.bf16.mxu0 0
    %155 = vmatpush1.bf16.msra.mxu0 0
    %156 = vmatprep.subr.bf16.mxu0 0
    %157 = vmatpush1.bf16.msra.mxu0 0
    %158 = vmatprep.subr.bf16.mxu0 0
    %159 = vmatpush1.bf16.msra.mxu0 0
    %160 = vmatprep.subr.bf16.mxu0 0
    %161 = vmatpush1.bf16.msra.mxu0 0
    %162 = vmatprep.subr.bf16.mxu0 0
    %163 = vmatpush1.bf16.msra.mxu0 0
    %164 = vmatprep.subr.bf16.mxu0 0
    %165 = vmatpush1.bf16.msra.mxu0 0
    %166 = vmatprep.subr.bf16.mxu0 0
    %167 = vmatpush1.bf16.msra.mxu0 0
    %168 = vmatprep.subr.bf16.mxu0 0
    %169 = vmatpush1.bf16.msra.mxu0 0
    %170 = vmatprep.mubr.bf16.mxu0 0
    %171 = vmatmul.mubr.bf16.gmra.mrb[0].mxu0 %v115
    %v172 = vpop.f32.mrb[0].mxu0
    %v173 = vadd.f32 %v59, %v172
    %v174 = vpop.f32.mrb[0].mxu0
    %v175 = vpop.f32.mrb[0].mxu0
    %v176 = vadd.f32 %v59, %v175
    %v177 = vpop.f32.mrb[0].mxu0
    %178 = vmatprep.mubr.bf16.mxu0 0
    %179 = vmatmul.mubr.bf16.gmra.mrb[0].mxu0 %v118
    %v180 = vpop.f32.mrb[0].mxu0
    %v181 = vadd.f32 %v59, %v180
    %v182 = vpop.f32.mrb[0].mxu0
    %v183 = vpop.f32.mrb[0].mxu0
    %v184 = vadd.f32 %v59, %v183
    %v185 = vpop.f32.mrb[0].mxu0
    %186 = vmatprep.mubr.bf16.mxu0 0
    %187 = vmatmul.mubr.bf16.gmra.mrb[0].mxu0 %v121
    %v188 = vpop.f32.mrb[0].mxu0
    %v189 = vadd.f32 %v59, %v188
    %v190 = vpop.f32.mrb[0].mxu0
    %v191 = vpop.f32.mrb[0].mxu0
    %v192 = vadd.f32 %v59, %v191
    %v193 = vpop.f32.mrb[0].mxu0
    %194 = vmatprep.mubr.bf16.mxu0 0
    %195 = vmatmul.mubr.bf16.gmra.mrb[0].mxu0 %v124
    %v196 = vpop.f32.mrb[0].mxu0
    %v197 = vadd.f32 %v59, %v196
    %v198 = vpop.f32.mrb[0].mxu0
    %v199 = vpop.f32.mrb[0].mxu0
    %v200 = vadd.f32 %v59, %v199
    %v201 = vpop.f32.mrb[0].mxu0
    %202 = vmatprep.mubr.bf16.mxu0 0
    %203 = vmatmul.mubr.bf16.gmra.mrb[0].mxu0 %v127
    %v204 = vpop.f32.mrb[0].mxu0
    %v205 = vadd.f32 %v59, %v204
    %v206 = vpop.f32.mrb[0].mxu0
    %v207 = vpop.f32.mrb[0].mxu0
    %v208 = vadd.f32 %v59, %v207
    %v209 = vpop.f32.mrb[0].mxu0
    %210 = vmatprep.mubr.bf16.mxu0 0
    %211 = vmatmul.mubr.bf16.gmra.mrb[0].mxu0 %v130
    %v212 = vpop.f32.mrb[0].mxu0
    %v213 = vadd.f32 %v59, %v212
    %v214 = vpop.f32.mrb[0].mxu0
    %v215 = vpop.f32.mrb[0].mxu0
    %v216 = vadd.f32 %v59, %v215
    %v217 = vpop.f32.mrb[0].mxu0
    %218 = vmatprep.mubr.bf16.mxu0 0
    %219 = vmatmul.mubr.bf16.gmra.mrb[0].mxu0 %v133
    %v220 = vpop.f32.mrb[0].mxu0
    %v221 = vadd.f32 %v59, %v220
    %v222 = vpop.f32.mrb[0].mxu0
    %v223 = vpop.f32.mrb[0].mxu0
    %v224 = vadd.f32 %v59, %v223
    %v225 = vpop.f32.mrb[0].mxu0
    %226 = vmatprep.mubr.bf16.mxu0 0
    %227 = vmatmul.mubr.bf16.gmra.mrb[0].mxu0 %v136
    %v228 = vpop.f32.mrb[0].mxu0
    %v229 = vadd.f32 %v59, %v228
    %v230 = vpop.f32.mrb[0].mxu0
    %v231 = vpop.f32.mrb[0].mxu0
    %v232 = vadd.f32 %v59, %v231
    %v233 = vpop.f32.mrb[0].mxu0
    %234 = vdwg.mxu0
    %v235 = vmax.f32 %v173, 0.0
    %v236 = vmax.f32 %v176, 0.0
    %v237 = vmax.f32 %v181, 0.0
    %v238 = vmax.f32 %v184, 0.0
    %v239 = vmax.f32 %v189, 0.0
    %v240 = vmax.f32 %v192, 0.0
    %v241 = vmax.f32 %v197, 0.0
    %v242 = vmax.f32 %v200, 0.0
    %v243 = vmax.f32 %v205, 0.0
    %v244 = vmax.f32 %v208, 0.0
    %v245 = vmax.f32 %v213, 0.0
    %v246 = vmax.f32 %v216, 0.0
    %v247 = vmax.f32 %v221, 0.0
    %v248 = vmax.f32 %v224, 0.0
    %v249 = vmax.f32 %v229, 0.0
    %v250 = vmax.f32 %v232, 0.0
    %251 = vst.msk [vmem:[#allocation2] sm:$0xff] %vm113, 0.0
    %vm252 = vcmask 254976
    %253 = vst.msk [vmem:[#allocation2 + $0x8] sm:$0x3] %vm252, 0.0
    %254 = vst.msk [vmem:[#allocation2 + $0x10] sm:$0xff] %vm113, 0.0
    %255 = vst.msk [vmem:[#allocation2 + $0x18] sm:$0x3] %vm252, 0.0
    %256 = vst.msk [vmem:[#allocation2 + $0x20] sm:$0xff] %vm113, 0.0
    %257 = vst.msk [vmem:[#allocation2 + $0x28] sm:$0x3] %vm252, 0.0
    %258 = vst.msk [vmem:[#allocation2 + $0x30] sm:$0xff] %vm113, 0.0
    %259 = vst.msk [vmem:[#allocation2 + $0x38] sm:$0x3] %vm252, 0.0
    %260 = vst.msk [vmem:[#allocation2 + $0x40] sm:$0xff] %vm113, 0.0
    %261 = vst.msk [vmem:[#allocation2 + $0x48] sm:$0x3] %vm252, 0.0
    %262 = vst.msk [vmem:[#allocation2 + $0x50] sm:$0xff] %vm113, 0.0
    %263 = vst.msk [vmem:[#allocation2 + $0x58] sm:$0x3] %vm252, 0.0
    %264 = vst.msk [vmem:[#allocation2 + $0x60] sm:$0xff] %vm113, 0.0
    %265 = vst.msk [vmem:[#allocation2 + $0x68] sm:$0x3] %vm252, 0.0
    %266 = vst.msk [vmem:[#allocation2 + $0x70] sm:$0xff] %vm113, 0.0
    %267 = vst.msk [vmem:[#allocation2 + $0x78] sm:$0x3] %vm252, 0.0
    %268 = vst.msk [vmem:[#allocation2 + $0x80] sm:$0xff] %vm113, 0.0
    %269 = vst.msk [vmem:[#allocation2 + $0x88] sm:$0x3] %vm252, 0.0
    %270 = vst.msk [vmem:[#allocation2 + $0x90] sm:$0xff] %vm113, 0.0
    %271 = vst.msk [vmem:[#allocation2 + $0x98] sm:$0x3] %vm252, 0.0
    %272 = vst.msk [vmem:[#allocation2 + $0xa0] sm:$0xff] %vm113, 0.0
    %273 = vst.msk [vmem:[#allocation2 + $0xa8] sm:$0x3] %vm252, 0.0
    %274 = vst.msk [vmem:[#allocation2 + $0xb0] sm:$0xff] %vm113, 0.0
    %275 = vst.msk [vmem:[#allocation2 + $0xb8] sm:$0x3] %vm252, 0.0
    %276 = vst.msk [vmem:[#allocation2 + $0xc0] sm:$0xff] %vm113, 0.0
    %277 = vst.msk [vmem:[#allocation2 + $0xc8] sm:$0x3] %vm252, 0.0
    %278 = vst.msk [vmem:[#allocation2 + $0xd0] sm:$0xff] %vm113, 0.0
    %279 = vst.msk [vmem:[#allocation2 + $0xd8] sm:$0x3] %vm252, 0.0
    %280 = vst.msk [vmem:[#allocation2 + $0xe0] sm:$0xff] %vm113, 0.0
    %281 = vst.msk [vmem:[#allocation2 + $0xe8] sm:$0x3] %vm252, 0.0
    %282 = vst.msk [vmem:[#allocation2 + $0xf0] sm:$0xff] %vm113, 0.0
    %283 = vst.msk [vmem:[#allocation2 + $0xf8] sm:$0x3] %vm252, 0.0
    %284 = vst.msk [vmem:[#allocation2 + $0x100] sm:$0xff] %vm113, 0.0
    %285 = vst.msk [vmem:[#allocation2 + $0x108] sm:$0x3] %vm252, 0.0
    %286 = vst.msk [vmem:[#allocation2 + $0x110] sm:$0xff] %vm113, 0.0
    %287 = vst.msk [vmem:[#allocation2 + $0x118] sm:$0x3] %vm252, 0.0
    %288 = vst.msk [vmem:[#allocation2 + $0x120] sm:$0xff] %vm113, 0.0
    %289 = vst.msk [vmem:[#allocation2 + $0x128] sm:$0x3] %vm252, 0.0
    %290 = vst.msk [vmem:[#allocation2 + $0x130] sm:$0xff] %vm113, 0.0
    %291 = vst.msk [vmem:[#allocation2 + $0x138] sm:$0x3] %vm252, 0.0
    %s292 = scalar_lea.vmem [#allocation2], 16
    %293 = vst.msk [vmem:[%s292 + $0x1] sm:$0xff] %vm113, %v235
    %294 = vst.msk [vmem:[%s292 + $0x11] sm:$0xff] %vm113, %v236
    %295 = vst.msk [vmem:[%s292 + $0x21] sm:$0xff] %vm113, %v237
    %296 = vst.msk [vmem:[%s292 + $0x31] sm:$0xff] %vm113, %v238
    %297 = vst.msk [vmem:[%s292 + $0x41] sm:$0xff] %vm113, %v239
    %298 = vst.msk [vmem:[%s292 + $0x51] sm:$0xff] %vm113, %v240
    %299 = vst.msk [vmem:[%s292 + $0x61] sm:$0xff] %vm113, %v241
    %300 = vst.msk [vmem:[%s292 + $0x71] sm:$0xff] %vm113, %v242
    %301 = vst.msk [vmem:[%s292 + $0xa1] sm:$0xff] %vm113, %v243
    %302 = vst.msk [vmem:[%s292 + $0xb1] sm:$0xff] %vm113, %v244
    %303 = vst.msk [vmem:[%s292 + $0xc1] sm:$0xff] %vm113, %v245
    %304 = vst.msk [vmem:[%s292 + $0xd1] sm:$0xff] %vm113, %v246
    %305 = vst.msk [vmem:[%s292 + $0xe1] sm:$0xff] %vm113, %v247
    %306 = vst.msk [vmem:[%s292 + $0xf1] sm:$0xff] %vm113, %v248
    %307 = vst.msk [vmem:[%s292 + $0x101] sm:$0xff] %vm113, %v249
    %308 = vst.msk [vmem:[%s292 + $0x111] sm:$0xff] %vm113, %v250
    %v309 = vld [vmem:[#allocation2] sm:$0xf]
    %v310 = vld [vmem:[#allocation2 + $0x10] sm:$0xf]
    %v311 = vld [vmem:[#allocation2 + $0x20] sm:$0xf]
    %v312 = vld [vmem:[#allocation2 + $0x30] sm:$0xf]
    %v313 = vld [vmem:[#allocation2 + $0xa0] sm:$0xf]
    %v314 = vld [vmem:[#allocation2 + $0xb0] sm:$0xf]
    %v315 = vld [vmem:[#allocation2 + $0xc0] sm:$0xf]
    %v316 = vld [vmem:[#allocation2 + $0xd0] sm:$0xf]
    %v325 = vcombine.low %v309, %v310
    %v326 = vcombine.low %v311, %v312
    %v327 = vcombine.low %v313, %v314
    %v328 = vcombine.low %v315, %v316
    %v333 = vpack.c.bf16 %v326, %v325
    %v334 = vpack.c.bf16 %v328, %v327
    %v335 = vld [vmem:[%s3] sm:$0xf]
    %v336 = vld [vmem:[%s3 + $0x4] sm:$0xf]
    %v337 = vld [vmem:[%s3 + $0x8] sm:$0xf]
    %v338 = vld [vmem:[%s3 + $0xc] sm:$0xf]
    %v339 = vld [vmem:[#allocation2 + $0x5] sm:$0xf]
    %v340 = vld [vmem:[#allocation2 + $0x15] sm:$0xf]
    %v341 = vld [vmem:[#allocation2 + $0x25] sm:$0xf]
    %v342 = vld [vmem:[#allocation2 + $0x35] sm:$0xf]
    %v343 = vld [vmem:[#allocation2 + $0xa5] sm:$0xf]
    %v344 = vld [vmem:[#allocation2 + $0xb5] sm:$0xf]
    %v345 = vld [vmem:[#allocation2 + $0xc5] sm:$0xf]
    %v346 = vld [vmem:[#allocation2 + $0xd5] sm:$0xf]
    %v355 = vcombine.low %v339, %v340
    %v356 = vcombine.low %v341, %v342
    %v357 = vcombine.low %v343, %v344
    %v358 = vcombine.low %v345, %v346
    %v363 = vpack.c.bf16 %v356, %v355
    %v364 = vpack.c.bf16 %v358, %v357
    %s365 = scalar_lea.vmem %s3, 16
    %v366 = vld [vmem:[%s365] sm:$0xf]
    %v367 = vld [vmem:[%s365 + $0x4] sm:$0xf]
    %v368 = vld [vmem:[%s365 + $0x8] sm:$0xf]
    %v369 = vld [vmem:[%s365 + $0xc] sm:$0xf]
    %v374 = vunpack.c.l.b16 %v366
    %v375 = vunpack.c.l.b16 %v367
    %v376 = vunpack.c.l.b16 %v368
    %v377 = vunpack.c.l.b16 %v369
    %v378 = vpack.c.b16 %v375, %v374
    %v379 = vpack.c.b16 %v377, %v376
    %v383 = vsel %vm113, %v363, 0
    %v386 = vsel %vm113, %v364, 0
    %388 = vmatprep.subr.bf16.mxu0 0
    %389 = vmatpush1.bf16.msra.mxu0 %v378
    %390 = vmatprep.subr.bf16.mxu0 0
    %391 = vmatpush1.bf16.msra.mxu0 %v379
    %392 = vmatprep.subr.bf16.mxu0 0
    %393 = vmatpush1.bf16.msra.mxu0 0
    %394 = vmatprep.subr.bf16.mxu0 0
    %395 = vmatpush1.bf16.msra.mxu0 0
    %396 = vmatprep.subr.bf16.mxu0 0
    %397 = vmatpush1.bf16.msra.mxu0 0
    %398 = vmatprep.subr.bf16.mxu0 0
    %399 = vmatpush1.bf16.msra.mxu0 0
    %400 = vmatprep.subr.bf16.mxu0 0
    %401 = vmatpush1.bf16.msra.mxu0 0
    %402 = vmatprep.subr.bf16.mxu0 0
    %403 = vmatpush1.bf16.msra.mxu0 0
    %404 = vmatprep.subr.bf16.mxu0 0
    %405 = vmatpush1.bf16.msra.mxu0 0
    %406 = vmatprep.subr.bf16.mxu0 0
    %407 = vmatpush1.bf16.msra.mxu0 0
    %408 = vmatprep.subr.bf16.mxu0 0
    %409 = vmatpush1.bf16.msra.mxu0 0
    %410 = vmatprep.subr.bf16.mxu0 0
    %411 = vmatpush1.bf16.msra.mxu0 0
    %412 = vmatprep.subr.bf16.mxu0 0
    %413 = vmatpush1.bf16.msra.mxu0 0
    %414 = vmatprep.subr.bf16.mxu0 0
    %415 = vmatpush1.bf16.msra.mxu0 0
    %416 = vmatprep.subr.bf16.mxu0 0
    %417 = vmatpush1.bf16.msra.mxu0 0
    %418 = vmatprep.subr.bf16.mxu0 0
    %419 = vmatpush1.bf16.msra.mxu0 0
    %420 = vmatprep.mubr.bf16.mxu0 0
    %421 = vmatmul.mubr.bf16.gmra.mrb[0].mxu0 %v383
    %v422 = vpop.f32.mrb[0].mxu0
    %v423 = vadd.f32 0.0, %v422
    %v424 = vpop.f32.mrb[0].mxu0
    %v425 = vpop.f32.mrb[0].mxu0
    %v426 = vadd.f32 0.0, %v425
    %v427 = vpop.f32.mrb[0].mxu0
    %428 = vmatprep.mubr.bf16.mxu0 0
    %429 = vmatmul.mubr.bf16.gmra.mrb[0].mxu0 %v386
    %v430 = vpop.f32.mrb[0].mxu0
    %v431 = vadd.f32 0.0, %v430
    %v432 = vpop.f32.mrb[0].mxu0
    %v433 = vpop.f32.mrb[0].mxu0
    %v434 = vadd.f32 0.0, %v433
    %v435 = vpop.f32.mrb[0].mxu0
    %436 = vdwg.mxu0
    %v441 = vunpack.c.l.b16 %v335
    %v442 = vunpack.c.l.b16 %v336
    %v443 = vunpack.c.l.b16 %v337
    %v444 = vunpack.c.l.b16 %v338
    %v445 = vpack.c.b16 %v442, %v441
    %v446 = vpack.c.b16 %v444, %v443
    %v450 = vsel %vm113, %v333, 0
    %v453 = vsel %vm113, %v334, 0
    %455 = vmatprep.subr.bf16.mxu0 0
    %456 = vmatpush1.bf16.msra.mxu0 %v445
    %457 = vmatprep.subr.bf16.mxu0 0
    %458 = vmatpush1.bf16.msra.mxu0 %v446
    %459 = vmatprep.subr.bf16.mxu0 0
    %460 = vmatpush1.bf16.msra.mxu0 0
    %461 = vmatprep.subr.bf16.mxu0 0
    %462 = vmatpush1.bf16.msra.mxu0 0
    %463 = vmatprep.subr.bf16.mxu0 0
    %464 = vmatpush1.bf16.msra.mxu0 0
    %465 = vmatprep.subr.bf16.mxu0 0
    %466 = vmatpush1.bf16.msra.mxu0 0
    %467 = vmatprep.subr.bf16.mxu0 0
    %468 = vmatpush1.bf16.msra.mxu0 0
    %469 = vmatprep.subr.bf16.mxu0 0
    %470 = vmatpush1.bf16.msra.mxu0 0
    %471 = vmatprep.subr.bf16.mxu0 0
    %472 = vmatpush1.bf16.msra.mxu0 0
    %473 = vmatprep.subr.bf16.mxu0 0
    %474 = vmatpush1.bf16.msra.mxu0 0
    %475 = vmatprep.subr.bf16.mxu0 0
    %476 = vmatpush1.bf16.msra.mxu0 0
    %477 = vmatprep.subr.bf16.mxu0 0
    %478 = vmatpush1.bf16.msra.mxu0 0
    %479 = vmatprep.subr.bf16.mxu0 0
    %480 = vmatpush1.bf16.msra.mxu0 0
    %481 = vmatprep.subr.bf16.mxu0 0
    %482 = vmatpush1.bf16.msra.mxu0 0
    %483 = vmatprep.subr.bf16.mxu0 0
    %484 = vmatpush1.bf16.msra.mxu0 0
    %485 = vmatprep.subr.bf16.mxu0 0
    %486 = vmatpush1.bf16.msra.mxu0 0
    %487 = vmatprep.mubr.bf16.mxu0 0
    %488 = vmatmul.mubr.bf16.gmra.mrb[0].mxu0 %v450
    %v489 = vpop.f32.mrb[0].mxu0
    %v490 = vadd.f32 %v423, %v489
    %v491 = vpop.f32.mrb[0].mxu0
    %v492 = vpop.f32.mrb[0].mxu0
    %v493 = vadd.f32 %v426, %v492
    %v494 = vpop.f32.mrb[0].mxu0
    %495 = vmatprep.mubr.bf16.mxu0 0
    %496 = vmatmul.mubr.bf16.gmra.mrb[0].mxu0 %v453
    %v497 = vpop.f32.mrb[0].mxu0
    %v498 = vadd.f32 %v431, %v497
    %v499 = vpop.f32.mrb[0].mxu0
    %v500 = vpop.f32.mrb[0].mxu0
    %v501 = vadd.f32 %v434, %v500
    %v502 = vpop.f32.mrb[0].mxu0
    %503 = vdwg.mxu0
    %v504 = vld [vmem:[#allocation2 + $0x1] sm:$0xf]
    %v505 = vld [vmem:[#allocation2 + $0x11] sm:$0xf]
    %v506 = vld [vmem:[#allocation2 + $0x21] sm:$0xf]
    %v507 = vld [vmem:[#allocation2 + $0x31] sm:$0xf]
    %v508 = vld [vmem:[#allocation2 + $0xa1] sm:$0xf]
    %v509 = vld [vmem:[#allocation2 + $0xb1] sm:$0xf]
    %v510 = vld [vmem:[#allocation2 + $0xc1] sm:$0xf]
    %v511 = vld [vmem:[#allocation2 + $0xd1] sm:$0xf]
    %v520 = vcombine.low %v504, %v505
    %v521 = vcombine.low %v506, %v507
    %v522 = vcombine.low %v508, %v509
    %v523 = vcombine.low %v510, %v511
    %v528 = vpack.c.bf16 %v521, %v520
    %v529 = vpack.c.bf16 %v523, %v522
    %s530 = scalar_lea.vmem %s3, 32
    %v531 = vld [vmem:[%s530] sm:$0xf]
    %v532 = vld [vmem:[%s530 + $0x4] sm:$0xf]
    %v533 = vld [vmem:[%s530 + $0x8] sm:$0xf]
    %v534 = vld [vmem:[%s530 + $0xc] sm:$0xf]
    %v539 = vunpack.c.l.b16 %v531
    %v540 = vunpack.c.l.b16 %v532
    %v541 = vunpack.c.l.b16 %v533
    %v542 = vunpack.c.l.b16 %v534
    %v543 = vpack.c.b16 %v540, %v539
    %v544 = vpack.c.b16 %v542, %v541
    %v548 = vsel %vm113, %v528, 0
    %v551 = vsel %vm113, %v529, 0
    %553 = vmatprep.subr.bf16.mxu0 0
    %554 = vmatpush1.bf16.msra.mxu0 %v543
    %555 = vmatprep.subr.bf16.mxu0 0
    %556 = vmatpush1.bf16.msra.mxu0 %v544
    %557 = vmatprep.subr.bf16.mxu0 0
    %558 = vmatpush1.bf16.msra.mxu0 0
    %559 = vmatprep.subr.bf16.mxu0 0
    %560 = vmatpush1.bf16.msra.mxu0 0
    %561 = vmatprep.subr.bf16.mxu0 0
    %562 = vmatpush1.bf16.msra.mxu0 0
    %563 = vmatprep.subr.bf16.mxu0 0
    %564 = vmatpush1.bf16.msra.mxu0 0
    %565 = vmatprep.subr.bf16.mxu0 0
    %566 = vmatpush1.bf16.msra.mxu0 0
    %567 = vmatprep.subr.bf16.mxu0 0
    %568 = vmatpush1.bf16.msra.mxu0 0
    %569 = vmatprep.subr.bf16.mxu0 0
    %570 = vmatpush1.bf16.msra.mxu0 0
    %571 = vmatprep.subr.bf16.mxu0 0
    %572 = vmatpush1.bf16.msra.mxu0 0
    %573 = vmatprep.subr.bf16.mxu0 0
    %574 = vmatpush1.bf16.msra.mxu0 0
    %575 = vmatprep.subr.bf16.mxu0 0
    %576 = vmatpush1.bf16.msra.mxu0 0
    %577 = vmatprep.subr.bf16.mxu0 0
    %578 = vmatpush1.bf16.msra.mxu0 0
    %579 = vmatprep.subr.bf16.mxu0 0
    %580 = vmatpush1.bf16.msra.mxu0 0
    %581 = vmatprep.subr.bf16.mxu0 0
    %582 = vmatpush1.bf16.msra.mxu0 0
    %583 = vmatprep.subr.bf16.mxu0 0
    %584 = vmatpush1.bf16.msra.mxu0 0
    %585 = vmatprep.mubr.bf16.mxu0 0
    %586 = vmatmul.mubr.bf16.gmra.mrb[0].mxu0 %v548
    %v587 = vpop.f32.mrb[0].mxu0
    %v588 = vadd.f32 0.0, %v587
    %v589 = vpop.f32.mrb[0].mxu0
    %v590 = vpop.f32.mrb[0].mxu0
    %v591 = vadd.f32 0.0, %v590
    %v592 = vpop.f32.mrb[0].mxu0
    %593 = vmatprep.mubr.bf16.mxu0 0
    %594 = vmatmul.mubr.bf16.gmra.mrb[0].mxu0 %v551
    %v595 = vpop.f32.mrb[0].mxu0
    %v596 = vadd.f32 0.0, %v595
    %v597 = vpop.f32.mrb[0].mxu0
    %v598 = vpop.f32.mrb[0].mxu0
    %v599 = vadd.f32 0.0, %v598
    %v600 = vpop.f32.mrb[0].mxu0
    %601 = vdwg.mxu0
    %v602 = vadd.f32 %v490, %v588
    %v603 = vadd.f32 %v493, %v591
    %v604 = vadd.f32 %v498, %v596
    %v605 = vadd.f32 %v501, %v599
    %s606 = scalar_lea.vmem [#allocation2], 80
    %v607 = vld [vmem:[%s606] sm:$0xf]
    %v608 = vld [vmem:[%s606 + $0x10] sm:$0xf]
    %v609 = vld [vmem:[%s606 + $0x20] sm:$0xf]
    %v610 = vld [vmem:[%s606 + $0x30] sm:$0xf]
    %v611 = vld [vmem:[%s606 + $0xa0] sm:$0xf]
    %v612 = vld [vmem:[%s606 + $0xb0] sm:$0xf]
    %v613 = vld [vmem:[%s606 + $0xc0] sm:$0xf]
    %v614 = vld [vmem:[%s606 + $0xd0] sm:$0xf]
    %v623 = vcombine.low %v607, %v608
    %v624 = vcombine.low %v609, %v610
    %v625 = vcombine.low %v611, %v612
    %v626 = vcombine.low %v613, %v614
    %v631 = vpack.c.bf16 %v624, %v623
    %v632 = vpack.c.bf16 %v626, %v625
    %s633 = scalar_lea.vmem %s3, 48
    %v634 = vld [vmem:[%s633] sm:$0xf]
    %v635 = vld [vmem:[%s633 + $0x4] sm:$0xf]
    %v636 = vld [vmem:[%s633 + $0x8] sm:$0xf]
    %v637 = vld [vmem:[%s633 + $0xc] sm:$0xf]
    %v642 = vunpack.c.l.b16 %v634
    %v643 = vunpack.c.l.b16 %v635
    %v644 = vunpack.c.l.b16 %v636
    %v645 = vunpack.c.l.b16 %v637
    %v646 = vpack.c.b16 %v643, %v642
    %v647 = vpack.c.b16 %v645, %v644
    %v651 = vsel %vm113, %v631, 0
    %v654 = vsel %vm113, %v632, 0
    %656 = vmatprep.subr.bf16.mxu0 0
    %657 = vmatpush1.bf16.msra.mxu0 %v646
    %658 = vmatprep.subr.bf16.mxu0 0
    %659 = vmatpush1.bf16.msra.mxu0 %v647
    %660 = vmatprep.subr.bf16.mxu0 0
    %661 = vmatpush1.bf16.msra.mxu0 0
    %662 = vmatprep.subr.bf16.mxu0 0
    %663 = vmatpush1.bf16.msra.mxu0 0
    %664 = vmatprep.subr.bf16.mxu0 0
    %665 = vmatpush1.bf16.msra.mxu0 0
    %666 = vmatprep.subr.bf16.mxu0 0
    %667 = vmatpush1.bf16.msra.mxu0 0
    %668 = vmatprep.subr.bf16.mxu0 0
    %669 = vmatpush1.bf16.msra.mxu0 0
    %670 = vmatprep.subr.bf16.mxu0 0
    %671 = vmatpush1.bf16.msra.mxu0 0
    %672 = vmatprep.subr.bf16.mxu0 0
    %673 = vmatpush1.bf16.msra.mxu0 0
    %674 = vmatprep.subr.bf16.mxu0 0
    %675 = vmatpush1.bf16.msra.mxu0 0
    %676 = vmatprep.subr.bf16.mxu0 0
    %677 = vmatpush1.bf16.msra.mxu0 0
    %678 = vmatprep.subr.bf16.mxu0 0
    %679 = vmatpush1.bf16.msra.mxu0 0
    %680 = vmatprep.subr.bf16.mxu0 0
    %681 = vmatpush1.bf16.msra.mxu0 0
    %682 = vmatprep.subr.bf16.mxu0 0
    %683 = vmatpush1.bf16.msra.mxu0 0
    %684 = vmatprep.subr.bf16.mxu0 0
    %685 = vmatpush1.bf16.msra.mxu0 0
    %686 = vmatprep.subr.bf16.mxu0 0
    %687 = vmatpush1.bf16.msra.mxu0 0
    %688 = vmatprep.mubr.bf16.mxu0 0
    %689 = vmatmul.mubr.bf16.gmra.mrb[0].mxu0 %v651
    %v690 = vpop.f32.mrb[0].mxu0
    %v691 = vadd.f32 0.0, %v690
    %v692 = vpop.f32.mrb[0].mxu0
    %v693 = vpop.f32.mrb[0].mxu0
    %v694 = vadd.f32 0.0, %v693
    %v695 = vpop.f32.mrb[0].mxu0
    %696 = vmatprep.mubr.bf16.mxu0 0
    %697 = vmatmul.mubr.bf16.gmra.mrb[0].mxu0 %v654
    %v698 = vpop.f32.mrb[0].mxu0
    %v699 = vadd.f32 0.0, %v698
    %v700 = vpop.f32.mrb[0].mxu0
    %v701 = vpop.f32.mrb[0].mxu0
    %v702 = vadd.f32 0.0, %v701
    %v703 = vpop.f32.mrb[0].mxu0
    %704 = vdwg.mxu0
    %v705 = vadd.f32 %v602, %v691
    %v706 = vadd.f32 %v603, %v694
    %v707 = vadd.f32 %v604, %v699
    %v708 = vadd.f32 %v605, %v702
    %v709 = vld [vmem:[%s606 + $0x5] sm:$0xf]
    %v710 = vld [vmem:[%s606 + $0x15] sm:$0xf]
    %v711 = vld [vmem:[%s606 + $0x25] sm:$0xf]
    %v712 = vld [vmem:[%s606 + $0x35] sm:$0xf]
    %v713 = vld [vmem:[%s606 + $0xa5] sm:$0xf]
    %v714 = vld [vmem:[%s606 + $0xb5] sm:$0xf]
    %v715 = vld [vmem:[%s606 + $0xc5] sm:$0xf]
    %v716 = vld [vmem:[%s606 + $0xd5] sm:$0xf]
    %v725 = vcombine.low %v709, %v710
    %v726 = vcombine.low %v711, %v712
    %v727 = vcombine.low %v713, %v714
    %v728 = vcombine.low %v715, %v716
    %v733 = vpack.c.bf16 %v726, %v725
    %v734 = vpack.c.bf16 %v728, %v727
    %s735 = scalar_lea.vmem %s3, 64
    %v736 = vld [vmem:[%s735] sm:$0xf]
    %v737 = vld [vmem:[%s735 + $0x4] sm:$0xf]
    %v738 = vld [vmem:[%s735 + $0x8] sm:$0xf]
    %v739 = vld [vmem:[%s735 + $0xc] sm:$0xf]
    %v744 = vunpack.c.l.b16 %v736
    %v745 = vunpack.c.l.b16 %v737
    %v746 = vunpack.c.l.b16 %v738
    %v747 = vunpack.c.l.b16 %v739
    %v748 = vpack.c.b16 %v745, %v744
    %v749 = vpack.c.b16 %v747, %v746
    %v753 = vsel %vm113, %v733, 0
    %v756 = vsel %vm113, %v734, 0
    %758 = vmatprep.subr.bf16.mxu0 0
    %759 = vmatpush1.bf16.msra.mxu0 %v748
    %760 = vmatprep.subr.bf16.mxu0 0
    %761 = vmatpush1.bf16.msra.mxu0 %v749
    %762 = vmatprep.subr.bf16.mxu0 0
    %763 = vmatpush1.bf16.msra.mxu0 0
    %764 = vmatprep.subr.bf16.mxu0 0
    %765 = vmatpush1.bf16.msra.mxu0 0
    %766 = vmatprep.subr.bf16.mxu0 0
    %767 = vmatpush1.bf16.msra.mxu0 0
    %768 = vmatprep.subr.bf16.mxu0 0
    %769 = vmatpush1.bf16.msra.mxu0 0
    %770 = vmatprep.subr.bf16.mxu0 0
    %771 = vmatpush1.bf16.msra.mxu0 0
    %772 = vmatprep.subr.bf16.mxu0 0
    %773 = vmatpush1.bf16.msra.mxu0 0
    %774 = vmatprep.subr.bf16.mxu0 0
    %775 = vmatpush1.bf16.msra.mxu0 0
    %776 = vmatprep.subr.bf16.mxu0 0
    %777 = vmatpush1.bf16.msra.mxu0 0
    %778 = vmatprep.subr.bf16.mxu0 0
    %779 = vmatpush1.bf16.msra.mxu0 0
    %780 = vmatprep.subr.bf16.mxu0 0
    %781 = vmatpush1.bf16.msra.mxu0 0
    %782 = vmatprep.subr.bf16.mxu0 0
    %783 = vmatpush1.bf16.msra.mxu0 0
    %784 = vmatprep.subr.bf16.mxu0 0
    %785 = vmatpush1.bf16.msra.mxu0 0
    %786 = vmatprep.subr.bf16.mxu0 0
    %787 = vmatpush1.bf16.msra.mxu0 0
    %788 = vmatprep.subr.bf16.mxu0 0
    %789 = vmatpush1.bf16.msra.mxu0 0
    %790 = vmatprep.mubr.bf16.mxu0 0
    %791 = vmatmul.mubr.bf16.gmra.mrb[0].mxu0 %v753
    %v792 = vpop.f32.mrb[0].mxu0
    %v793 = vadd.f32 0.0, %v792
    %v794 = vpop.f32.mrb[0].mxu0
    %v795 = vpop.f32.mrb[0].mxu0
    %v796 = vadd.f32 0.0, %v795
    %v797 = vpop.f32.mrb[0].mxu0
    %798 = vmatprep.mubr.bf16.mxu0 0
    %799 = vmatmul.mubr.bf16.gmra.mrb[0].mxu0 %v756
    %v800 = vpop.f32.mrb[0].mxu0
    %v801 = vadd.f32 0.0, %v800
    %v802 = vpop.f32.mrb[0].mxu0
    %v803 = vpop.f32.mrb[0].mxu0
    %v804 = vadd.f32 0.0, %v803
    %v805 = vpop.f32.mrb[0].mxu0
    %806 = vdwg.mxu0
    %v807 = vadd.f32 %v705, %v793
    %v808 = vadd.f32 %v706, %v796
    %v809 = vadd.f32 %v707, %v801
    %v810 = vadd.f32 %v708, %v804
    %v811 = vld [vmem:[%s606 + $0x1] sm:$0xf]
    %v812 = vld [vmem:[%s606 + $0x11] sm:$0xf]
    %v813 = vld [vmem:[%s606 + $0x21] sm:$0xf]
    %v814 = vld [vmem:[%s606 + $0x31] sm:$0xf]
    %v815 = vld [vmem:[%s606 + $0xa1] sm:$0xf]
    %v816 = vld [vmem:[%s606 + $0xb1] sm:$0xf]
    %v817 = vld [vmem:[%s606 + $0xc1] sm:$0xf]
    %v818 = vld [vmem:[%s606 + $0xd1] sm:$0xf]
    %v827 = vcombine.low %v811, %v812
    %v828 = vcombine.low %v813, %v814
    %v829 = vcombine.low %v815, %v816
    %v830 = vcombine.low %v817, %v818
    %v835 = vpack.c.bf16 %v828, %v827
    %v836 = vpack.c.bf16 %v830, %v829
    %s837 = scalar_lea.vmem %s3, 80
    %v838 = vld [vmem:[%s837] sm:$0xf]
    %v839 = vld [vmem:[%s837 + $0x4] sm:$0xf]
    %v840 = vld [vmem:[%s837 + $0x8] sm:$0xf]
    %v841 = vld [vmem:[%s837 + $0xc] sm:$0xf]
    %v846 = vunpack.c.l.b16 %v838
    %v847 = vunpack.c.l.b16 %v839
    %v848 = vunpack.c.l.b16 %v840
    %v849 = vunpack.c.l.b16 %v841
    %v850 = vpack.c.b16 %v847, %v846
    %v851 = vpack.c.b16 %v849, %v848
    %v855 = vsel %vm113, %v835, 0
    %v858 = vsel %vm113, %v836, 0
    %860 = vmatprep.subr.bf16.mxu0 0
    %861 = vmatpush1.bf16.msra.mxu0 %v850
    %862 = vmatprep.subr.bf16.mxu0 0
    %863 = vmatpush1.bf16.msra.mxu0 %v851
    %864 = vmatprep.subr.bf16.mxu0 0
    %865 = vmatpush1.bf16.msra.mxu0 0
    %866 = vmatprep.subr.bf16.mxu0 0
    %867 = vmatpush1.bf16.msra.mxu0 0
    %868 = vmatprep.subr.bf16.mxu0 0
    %869 = vmatpush1.bf16.msra.mxu0 0
    %870 = vmatprep.subr.bf16.mxu0 0
    %871 = vmatpush1.bf16.msra.mxu0 0
    %872 = vmatprep.subr.bf16.mxu0 0
    %873 = vmatpush1.bf16.msra.mxu0 0
    %874 = vmatprep.subr.bf16.mxu0 0
    %875 = vmatpush1.bf16.msra.mxu0 0
    %876 = vmatprep.subr.bf16.mxu0 0
    %877 = vmatpush1.bf16.msra.mxu0 0
    %878 = vmatprep.subr.bf16.mxu0 0
    %879 = vmatpush1.bf16.msra.mxu0 0
    %880 = vmatprep.subr.bf16.mxu0 0
    %881 = vmatpush1.bf16.msra.mxu0 0
    %882 = vmatprep.subr.bf16.mxu0 0
    %883 = vmatpush1.bf16.msra.mxu0 0
    %884 = vmatprep.subr.bf16.mxu0 0
    %885 = vmatpush1.bf16.msra.mxu0 0
    %886 = vmatprep.subr.bf16.mxu0 0
    %887 = vmatpush1.bf16.msra.mxu0 0
    %888 = vmatprep.subr.bf16.mxu0 0
    %889 = vmatpush1.bf16.msra.mxu0 0
    %890 = vmatprep.subr.bf16.mxu0 0
    %891 = vmatpush1.bf16.msra.mxu0 0
    %892 = vmatprep.mubr.bf16.mxu0 0
    %893 = vmatmul.mubr.bf16.gmra.mrb[0].mxu0 %v855
    %v894 = vpop.f32.mrb[0].mxu0
    %v895 = vadd.f32 0.0, %v894
    %v896 = vpop.f32.mrb[0].mxu0
    %v897 = vpop.f32.mrb[0].mxu0
    %v898 = vadd.f32 0.0, %v897
    %v899 = vpop.f32.mrb[0].mxu0
    %900 = vmatprep.mubr.bf16.mxu0 0
    %901 = vmatmul.mubr.bf16.gmra.mrb[0].mxu0 %v858
    %v902 = vpop.f32.mrb[0].mxu0
    %v903 = vadd.f32 0.0, %v902
    %v904 = vpop.f32.mrb[0].mxu0
    %v905 = vpop.f32.mrb[0].mxu0
    %v906 = vadd.f32 0.0, %v905
    %v907 = vpop.f32.mrb[0].mxu0
    %908 = vdwg.mxu0
    %v909 = vadd.f32 %v807, %v895
    %v910 = vadd.f32 %v808, %v898
    %v911 = vadd.f32 %v809, %v903
    %v912 = vadd.f32 %v810, %v906
    %v913 = vld [vmem:[%s292] sm:$0xf]
    %v914 = vld [vmem:[%s292 + $0x10] sm:$0xf]
    %v915 = vld [vmem:[%s292 + $0x20] sm:$0xf]
    %v916 = vld [vmem:[%s292 + $0x30] sm:$0xf]
    %v917 = vld [vmem:[%s292 + $0xa0] sm:$0xf]
    %v918 = vld [vmem:[%s292 + $0xb0] sm:$0xf]
    %v919 = vld [vmem:[%s292 + $0xc0] sm:$0xf]
    %v920 = vld [vmem:[%s292 + $0xd0] sm:$0xf]
    %v929 = vcombine.low %v913, %v914
    %v930 = vcombine.low %v915, %v916
    %v931 = vcombine.low %v917, %v918
    %v932 = vcombine.low %v919, %v920
    %v937 = vpack.c.bf16 %v930, %v929
    %v938 = vpack.c.bf16 %v932, %v931
    %s939 = scalar_lea.vmem %s3, 96
    %v940 = vld [vmem:[%s939] sm:$0xf]
    %v941 = vld [vmem:[%s939 + $0x4] sm:$0xf]
    %v942 = vld [vmem:[%s939 + $0x8] sm:$0xf]
    %v943 = vld [vmem:[%s939 + $0xc] sm:$0xf]
    %v948 = vunpack.c.l.b16 %v940
    %v949 = vunpack.c.l.b16 %v941
    %v950 = vunpack.c.l.b16 %v942
    %v951 = vunpack.c.l.b16 %v943
    %v952 = vpack.c.b16 %v949, %v948
    %v953 = vpack.c.b16 %v951, %v950
    %v957 = vsel %vm113, %v937, 0
    %v960 = vsel %vm113, %v938, 0
    %962 = vmatprep.subr.bf16.mxu0 0
    %963 = vmatpush1.bf16.msra.mxu0 %v952
    %964 = vmatprep.subr.bf16.mxu0 0
    %965 = vmatpush1.bf16.msra.mxu0 %v953
    %966 = vmatprep.subr.bf16.mxu0 0
    %967 = vmatpush1.bf16.msra.mxu0 0
    %968 = vmatprep.subr.bf16.mxu0 0
    %969 = vmatpush1.bf16.msra.mxu0 0
    %970 = vmatprep.subr.bf16.mxu0 0
    %971 = vmatpush1.bf16.msra.mxu0 0
    %972 = vmatprep.subr.bf16.mxu0 0
    %973 = vmatpush1.bf16.msra.mxu0 0
    %974 = vmatprep.subr.bf16.mxu0 0
    %975 = vmatpush1.bf16.msra.mxu0 0
    %976 = vmatprep.subr.bf16.mxu0 0
    %977 = vmatpush1.bf16.msra.mxu0 0
    %978 = vmatprep.subr.bf16.mxu0 0
    %979 = vmatpush1.bf16.msra.mxu0 0
    %980 = vmatprep.subr.bf16.mxu0 0
    %981 = vmatpush1.bf16.msra.mxu0 0
    %982 = vmatprep.subr.bf16.mxu0 0
    %983 = vmatpush1.bf16.msra.mxu0 0
    %984 = vmatprep.subr.bf16.mxu0 0
    %985 = vmatpush1.bf16.msra.mxu0 0
    %986 = vmatprep.subr.bf16.mxu0 0
    %987 = vmatpush1.bf16.msra.mxu0 0
    %988 = vmatprep.subr.bf16.mxu0 0
    %989 = vmatpush1.bf16.msra.mxu0 0
    %990 = vmatprep.subr.bf16.mxu0 0
    %991 = vmatpush1.bf16.msra.mxu0 0
    %992 = vmatprep.subr.bf16.mxu0 0
    %993 = vmatpush1.bf16.msra.mxu0 0
    %994 = vmatprep.mubr.bf16.mxu0 0
    %995 = vmatmul.mubr.bf16.gmra.mrb[0].mxu0 %v957
    %v996 = vpop.f32.mrb[0].mxu0
    %v997 = vadd.f32 0.0, %v996
    %v998 = vpop.f32.mrb[0].mxu0
    %v999 = vpop.f32.mrb[0].mxu0
    %v1000 = vadd.f32 0.0, %v999
    %v1001 = vpop.f32.mrb[0].mxu0
    %1002 = vmatprep.mubr.bf16.mxu0 0
    %1003 = vmatmul.mubr.bf16.gmra.mrb[0].mxu0 %v960
    %v1004 = vpop.f32.mrb[0].mxu0
    %v1005 = vadd.f32 0.0, %v1004
    %v1006 = vpop.f32.mrb[0].mxu0
    %v1007 = vpop.f32.mrb[0].mxu0
    %v1008 = vadd.f32 0.0, %v1007
    %v1009 = vpop.f32.mrb[0].mxu0
    %1010 = vdwg.mxu0
    %v1011 = vadd.f32 %v909, %v997
    %v1012 = vadd.f32 %v910, %v1000
    %v1013 = vadd.f32 %v911, %v1005
    %v1014 = vadd.f32 %v912, %v1008
    %v1015 = vld [vmem:[%s292 + $0x5] sm:$0xf]
    %v1016 = vld [vmem:[%s292 + $0x15] sm:$0xf]
    %v1017 = vld [vmem:[%s292 + $0x25] sm:$0xf]
    %v1018 = vld [vmem:[%s292 + $0x35] sm:$0xf]
    %v1019 = vld [vmem:[%s292 + $0xa5] sm:$0xf]
    %v1020 = vld [vmem:[%s292 + $0xb5] sm:$0xf]
    %v1021 = vld [vmem:[%s292 + $0xc5] sm:$0xf]
    %v1022 = vld [vmem:[%s292 + $0xd5] sm:$0xf]
    %v1031 = vcombine.low %v1015, %v1016
    %v1032 = vcombine.low %v1017, %v1018
    %v1033 = vcombine.low %v1019, %v1020
    %v1034 = vcombine.low %v1021, %v1022
    %v1039 = vpack.c.bf16 %v1032, %v1031
    %v1040 = vpack.c.bf16 %v1034, %v1033
    %s1041 = scalar_lea.vmem %s3, 112
    %v1042 = vld [vmem:[%s1041] sm:$0xf]
    %v1043 = vld [vmem:[%s1041 + $0x4] sm:$0xf]
    %v1044 = vld [vmem:[%s1041 + $0x8] sm:$0xf]
    %v1045 = vld [vmem:[%s1041 + $0xc] sm:$0xf]
    %v1050 = vunpack.c.l.b16 %v1042
    %v1051 = vunpack.c.l.b16 %v1043
    %v1052 = vunpack.c.l.b16 %v1044
    %v1053 = vunpack.c.l.b16 %v1045
    %v1054 = vpack.c.b16 %v1051, %v1050
    %v1055 = vpack.c.b16 %v1053, %v1052
    %v1059 = vsel %vm113, %v1039, 0
    %v1062 = vsel %vm113, %v1040, 0
    %1064 = vmatprep.subr.bf16.mxu0 0
    %1065 = vmatpush1.bf16.msra.mxu0 %v1054
    %1066 = vmatprep.subr.bf16.mxu0 0
    %1067 = vmatpush1.bf16.msra.mxu0 %v1055
    %1068 = vmatprep.subr.bf16.mxu0 0
    %1069 = vmatpush1.bf16.msra.mxu0 0
    %1070 = vmatprep.subr.bf16.mxu0 0
    %1071 = vmatpush1.bf16.msra.mxu0 0
    %1072 = vmatprep.subr.bf16.mxu0 0
    %1073 = vmatpush1.bf16.msra.mxu0 0
    %1074 = vmatprep.subr.bf16.mxu0 0
    %1075 = vmatpush1.bf16.msra.mxu0 0
    %1076 = vmatprep.subr.bf16.mxu0 0
    %1077 = vmatpush1.bf16.msra.mxu0 0
    %1078 = vmatprep.subr.bf16.mxu0 0
    %1079 = vmatpush1.bf16.msra.mxu0 0
    %1080 = vmatprep.subr.bf16.mxu0 0
    %1081 = vmatpush1.bf16.msra.mxu0 0
    %1082 = vmatprep.subr.bf16.mxu0 0
    %1083 = vmatpush1.bf16.msra.mxu0 0
    %1084 = vmatprep.subr.bf16.mxu0 0
    %1085 = vmatpush1.bf16.msra.mxu0 0
    %1086 = vmatprep.subr.bf16.mxu0 0
    %1087 = vmatpush1.bf16.msra.mxu0 0
    %1088 = vmatprep.subr.bf16.mxu0 0
    %1089 = vmatpush1.bf16.msra.mxu0 0
    %1090 = vmatprep.subr.bf16.mxu0 0
    %1091 = vmatpush1.bf16.msra.mxu0 0
    %1092 = vmatprep.subr.bf16.mxu0 0
    %1093 = vmatpush1.bf16.msra.mxu0 0
    %1094 = vmatprep.subr.bf16.mxu0 0
    %1095 = vmatpush1.bf16.msra.mxu0 0
    %1096 = vmatprep.mubr.bf16.mxu0 0
    %1097 = vmatmul.mubr.bf16.gmra.mrb[0].mxu0 %v1059
    %v1098 = vpop.f32.mrb[0].mxu0
    %v1099 = vadd.f32 0.0, %v1098
    %v1100 = vpop.f32.mrb[0].mxu0
    %v1101 = vpop.f32.mrb[0].mxu0
    %v1102 = vadd.f32 0.0, %v1101
    %v1103 = vpop.f32.mrb[0].mxu0
    %1104 = vmatprep.mubr.bf16.mxu0 0
    %1105 = vmatmul.mubr.bf16.gmra.mrb[0].mxu0 %v1062
    %v1106 = vpop.f32.mrb[0].mxu0
    %v1107 = vadd.f32 0.0, %v1106
    %v1108 = vpop.f32.mrb[0].mxu0
    %v1109 = vpop.f32.mrb[0].mxu0
    %v1110 = vadd.f32 0.0, %v1109
    %v1111 = vpop.f32.mrb[0].mxu0
    %1112 = vdwg.mxu0
    %v1113 = vadd.f32 %v1011, %v1099
    %v1114 = vadd.f32 %v1012, %v1102
    %v1115 = vadd.f32 %v1013, %v1107
    %v1116 = vadd.f32 %v1014, %v1110
    %v1117 = vld [vmem:[%s292 + $0x1] sm:$0xf]
    %v1118 = vld [vmem:[%s292 + $0x11] sm:$0xf]
    %v1119 = vld [vmem:[%s292 + $0x21] sm:$0xf]
    %v1120 = vld [vmem:[%s292 + $0x31] sm:$0xf]
    %v1121 = vld [vmem:[%s292 + $0xa1] sm:$0xf]
    %v1122 = vld [vmem:[%s292 + $0xb1] sm:$0xf]
    %v1123 = vld [vmem:[%s292 + $0xc1] sm:$0xf]
    %v1124 = vld [vmem:[%s292 + $0xd1] sm:$0xf]
    %v1133 = vcombine.low %v1117, %v1118
    %v1134 = vcombine.low %v1119, %v1120
    %v1135 = vcombine.low %v1121, %v1122
    %v1136 = vcombine.low %v1123, %v1124
    %v1141 = vpack.c.bf16 %v1134, %v1133
    %v1142 = vpack.c.bf16 %v1136, %v1135
    %s1143 = scalar_lea.vmem %s3, 128
    %v1144 = vld [vmem:[%s1143] sm:$0xf]
    %v1145 = vld [vmem:[%s1143 + $0x4] sm:$0xf]
    %v1146 = vld [vmem:[%s1143 + $0x8] sm:$0xf]
    %v1147 = vld [vmem:[%s1143 + $0xc] sm:$0xf]
    %v1152 = vunpack.c.l.b16 %v1144
    %v1153 = vunpack.c.l.b16 %v1145
    %v1154 = vunpack.c.l.b16 %v1146
    %v1155 = vunpack.c.l.b16 %v1147
    %v1156 = vpack.c.b16 %v1153, %v1152
    %v1157 = vpack.c.b16 %v1155, %v1154
    %v1161 = vsel %vm113, %v1141, 0
    %v1164 = vsel %vm113, %v1142, 0
    %1166 = vmatprep.subr.bf16.mxu0 0
    %1167 = vmatpush1.bf16.msra.mxu0 %v1156
    %1168 = vmatprep.subr.bf16.mxu0 0
    %1169 = vmatpush1.bf16.msra.mxu0 %v1157
    %1170 = vmatprep.subr.bf16.mxu0 0
    %1171 = vmatpush1.bf16.msra.mxu0 0
    %1172 = vmatprep.subr.bf16.mxu0 0
    %1173 = vmatpush1.bf16.msra.mxu0 0
    %1174 = vmatprep.subr.bf16.mxu0 0
    %1175 = vmatpush1.bf16.msra.mxu0 0
    %1176 = vmatprep.subr.bf16.mxu0 0
    %1177 = vmatpush1.bf16.msra.mxu0 0
    %1178 = vmatprep.subr.bf16.mxu0 0
    %1179 = vmatpush1.bf16.msra.mxu0 0
    %1180 = vmatprep.subr.bf16.mxu0 0
    %1181 = vmatpush1.bf16.msra.mxu0 0
    %1182 = vmatprep.subr.bf16.mxu0 0
    %1183 = vmatpush1.bf16.msra.mxu0 0
    %1184 = vmatprep.subr.bf16.mxu0 0
    %1185 = vmatpush1.bf16.msra.mxu0 0
    %1186 = vmatprep.subr.bf16.mxu0 0
    %1187 = vmatpush1.bf16.msra.mxu0 0
    %1188 = vmatprep.subr.bf16.mxu0 0
    %1189 = vmatpush1.bf16.msra.mxu0 0
    %1190 = vmatprep.subr.bf16.mxu0 0
    %1191 = vmatpush1.bf16.msra.mxu0 0
    %1192 = vmatprep.subr.bf16.mxu0 0
    %1193 = vmatpush1.bf16.msra.mxu0 0
    %1194 = vmatprep.subr.bf16.mxu0 0
    %1195 = vmatpush1.bf16.msra.mxu0 0
    %1196 = vmatprep.subr.bf16.mxu0 0
    %1197 = vmatpush1.bf16.msra.mxu0 0
    %1198 = vmatprep.mubr.bf16.mxu0 0
    %1199 = vmatmul.mubr.bf16.gmra.mrb[0].mxu0 %v1161
    %v1200 = vpop.f32.mrb[0].mxu0
    %v1201 = vadd.f32 0.0, %v1200
    %v1202 = vpop.f32.mrb[0].mxu0
    %v1203 = vpop.f32.mrb[0].mxu0
    %v1204 = vadd.f32 0.0, %v1203
    %v1205 = vpop.f32.mrb[0].mxu0
    %1206 = vmatprep.mubr.bf16.mxu0 0
    %1207 = vmatmul.mubr.bf16.gmra.mrb[0].mxu0 %v1164
    %v1208 = vpop.f32.mrb[0].mxu0
    %v1209 = vadd.f32 0.0, %v1208
    %v1210 = vpop.f32.mrb[0].mxu0
    %v1211 = vpop.f32.mrb[0].mxu0
    %v1212 = vadd.f32 0.0, %v1211
    %v1213 = vpop.f32.mrb[0].mxu0
    %1214 = vdwg.mxu0
    %v1215 = vadd.f32 %v1113, %v1201
    %v1216 = vadd.f32 %v1114, %v1204
    %v1217 = vadd.f32 %v1115, %v1209
    %v1218 = vadd.f32 %v1116, %v1212
    %v1219 = vld [vmem:[%s4] sm:$0x1]
    %v1221 = vlaneseq
    %v1222 = vshrl.u32 %v1221, 7
    %v1223 = vsub.s32 0, %v1222
    %v1224 = vrot.slane %v1219, %v1223
    %v1226 = vadd.f32 %v1215, %v1224
    %v1227 = vadd.f32 %v1216, %v1224
    %v1228 = vadd.f32 %v1217, %v1224
    %v1229 = vadd.f32 %v1218, %v1224
    %v1230 = vmax.f32 %v1226, 0.0
    %v1231 = vmax.f32 %v1227, 0.0
    %v1232 = vmax.f32 %v1228, 0.0
    %v1233 = vmax.f32 %v1229, 0.0
    %vm1234 = vcmask 521216
    %1235 = vst.msk [vmem:[#allocation3] sm:$0x3f] %vm1234, 0.0
    %1236 = vst.msk [vmem:[#allocation3 + $0x8] sm:$0x3f] %vm1234, 0.0
    %1237 = vst.msk [vmem:[#allocation3 + $0x10] sm:$0x3f] %vm1234, 0.0
    %1238 = vst.msk [vmem:[#allocation3 + $0x18] sm:$0x3f] %vm1234, 0.0
    %1239 = vst.msk [vmem:[#allocation3 + $0x20] sm:$0x3f] %vm1234, 0.0
    %1240 = vst.msk [vmem:[#allocation3 + $0x28] sm:$0x3f] %vm1234, 0.0
    %1241 = vst.msk [vmem:[#allocation3 + $0x30] sm:$0x3f] %vm1234, 0.0
    %1242 = vst.msk [vmem:[#allocation3 + $0x38] sm:$0x3f] %vm1234, 0.0
    %1243 = vst.msk [vmem:[#allocation3 + $0x40] sm:$0x3f] %vm1234, 0.0
    %1244 = vst.msk [vmem:[#allocation3 + $0x48] sm:$0x3f] %vm1234, 0.0
    %1245 = vst.msk [vmem:[#allocation3 + $0x50] sm:$0x3f] %vm1234, 0.0
    %1246 = vst.msk [vmem:[#allocation3 + $0x58] sm:$0x3f] %vm1234, 0.0
    %v1251 = vcombine.high %v1230, %v1230
    %v1252 = vcombine.high %v1231, %v1231
    %v1253 = vcombine.high %v1232, %v1232
    %v1254 = vcombine.high %v1233, %v1233
    %s1259 = scalar_lea.vmem [#allocation3], 8
    %vm1260 = vcmask 519168
    %1261 = vst.msk [vmem:[%s1259 + $0x1] sm:$0xf] %vm1260, %v1230
    %1262 = vst.msk [vmem:[%s1259 + $0x9] sm:$0xf] %vm1260, %v1251
    %1263 = vst.msk [vmem:[%s1259 + $0x11] sm:$0xf] %vm1260, %v1231
    %1264 = vst.msk [vmem:[%s1259 + $0x19] sm:$0xf] %vm1260, %v1252
    %1265 = vst.msk [vmem:[%s1259 + $0x31] sm:$0xf] %vm1260, %v1232
    %1266 = vst.msk [vmem:[%s1259 + $0x39] sm:$0xf] %vm1260, %v1253
    %1267 = vst.msk [vmem:[%s1259 + $0x41] sm:$0xf] %vm1260, %v1233
    %1268 = vst.msk [vmem:[%s1259 + $0x49] sm:$0xf] %vm1260, %v1254
    %v1269 = vld [vmem:[#allocation3] sm:$0xf]
    %v1270 = vld [vmem:[#allocation3 + $0x8] sm:$0xf]
    %v1271 = vld [vmem:[#allocation3 + $0x10] sm:$0xf]
    %v1272 = vld [vmem:[#allocation3 + $0x18] sm:$0xf]
    %v1273 = vld [vmem:[#allocation3 + $0x30] sm:$0xf]
    %v1274 = vld [vmem:[#allocation3 + $0x38] sm:$0xf]
    %v1275 = vld [vmem:[#allocation3 + $0x40] sm:$0xf]
    %v1276 = vld [vmem:[#allocation3 + $0x48] sm:$0xf]
    %v1285 = vcombine.low %v1269, %v1270
    %v1286 = vcombine.low %v1271, %v1272
    %v1287 = vcombine.low %v1273, %v1274
    %v1288 = vcombine.low %v1275, %v1276
    %v1293 = vpack.c.bf16 %v1286, %v1285
    %v1294 = vpack.c.bf16 %v1288, %v1287
    %v1295 = vld [vmem:[%s5] sm:$0xf]
    %v1296 = vld [vmem:[%s5 + $0x4] sm:$0xf]
    %v1297 = vld [vmem:[%s5 + $0x8] sm:$0xf]
    %v1298 = vld [vmem:[%s5 + $0xc] sm:$0xf]
    %v1299 = vld [vmem:[%s5 + $0x10] sm:$0xf]
    %v1300 = vld [vmem:[%s5 + $0x14] sm:$0xf]
    %v1301 = vld [vmem:[%s5 + $0x18] sm:$0xf]
    %v1302 = vld [vmem:[%s5 + $0x1c] sm:$0xf]
    %v1303 = vld [vmem:[#allocation3 + $0x1] sm:$0xf]
    %v1304 = vld [vmem:[#allocation3 + $0x9] sm:$0xf]
    %v1305 = vld [vmem:[#allocation3 + $0x11] sm:$0xf]
    %v1306 = vld [vmem:[#allocation3 + $0x19] sm:$0xf]
    %v1307 = vld [vmem:[#allocation3 + $0x31] sm:$0xf]
    %v1308 = vld [vmem:[#allocation3 + $0x39] sm:$0xf]
    %v1309 = vld [vmem:[#allocation3 + $0x41] sm:$0xf]
    %v1310 = vld [vmem:[#allocation3 + $0x49] sm:$0xf]
    %v1319 = vcombine.low %v1303, %v1304
    %v1320 = vcombine.low %v1305, %v1306
    %v1321 = vcombine.low %v1307, %v1308
    %v1322 = vcombine.low %v1309, %v1310
    %v1327 = vpack.c.bf16 %v1320, %v1319
    %v1328 = vpack.c.bf16 %v1322, %v1321
    %s1329 = scalar_lea.vmem %s5, 32
    %v1330 = vld [vmem:[%s1329] sm:$0xf]
    %v1331 = vld [vmem:[%s1329 + $0x4] sm:$0xf]
    %v1332 = vld [vmem:[%s1329 + $0x8] sm:$0xf]
    %v1333 = vld [vmem:[%s1329 + $0xc] sm:$0xf]
    %v1334 = vld [vmem:[%s1329 + $0x10] sm:$0xf]
    %v1335 = vld [vmem:[%s1329 + $0x14] sm:$0xf]
    %v1336 = vld [vmem:[%s1329 + $0x18] sm:$0xf]
    %v1337 = vld [vmem:[%s1329 + $0x1c] sm:$0xf]
    %v1346 = vunpack.c.l.b16 %v1330
    %v1347 = vunpack.c.l.b16 %v1331
    %v1348 = vunpack.c.l.b16 %v1332
    %v1349 = vunpack.c.l.b16 %v1333
    %v1350 = vunpack.c.l.b16 %v1334
    %v1351 = vunpack.c.l.b16 %v1335
    %v1352 = vunpack.c.l.b16 %v1336
    %v1353 = vunpack.c.l.b16 %v1337
    %v1354 = vpack.c.b16 %v1347, %v1346
    %v1355 = vpack.c.b16 %v1349, %v1348
    %v1356 = vpack.c.b16 %v1351, %v1350
    %v1357 = vpack.c.b16 %v1353, %v1352
    %vm1362 = vcmask 523264
    %v1364 = vsel %vm1362, %v1327, 0
    %v1367 = vsel %vm1362, %v1328, 0
    %1369 = vmatprep.subr.bf16.mxu0 0
    %1370 = vmatpush1.bf16.msra.mxu0 %v1354
    %1371 = vmatprep.subr.bf16.mxu0 0
    %1372 = vmatpush1.bf16.msra.mxu0 %v1355
    %1373 = vmatprep.subr.bf16.mxu0 0
    %1374 = vmatpush1.bf16.msra.mxu0 %v1356
    %1375 = vmatprep.subr.bf16.mxu0 0
    %1376 = vmatpush1.bf16.msra.mxu0 %v1357
    %1377 = vmatprep.subr.bf16.mxu0 0
    %1378 = vmatpush1.bf16.msra.mxu0 0
    %1379 = vmatprep.subr.bf16.mxu0 0
    %1380 = vmatpush1.bf16.msra.mxu0 0
    %1381 = vmatprep.subr.bf16.mxu0 0
    %1382 = vmatpush1.bf16.msra.mxu0 0
    %1383 = vmatprep.subr.bf16.mxu0 0
    %1384 = vmatpush1.bf16.msra.mxu0 0
    %1385 = vmatprep.subr.bf16.mxu0 0
    %1386 = vmatpush1.bf16.msra.mxu0 0
    %1387 = vmatprep.subr.bf16.mxu0 0
    %1388 = vmatpush1.bf16.msra.mxu0 0
    %1389 = vmatprep.subr.bf16.mxu0 0
    %1390 = vmatpush1.bf16.msra.mxu0 0
    %1391 = vmatprep.subr.bf16.mxu0 0
    %1392 = vmatpush1.bf16.msra.mxu0 0
    %1393 = vmatprep.subr.bf16.mxu0 0
    %1394 = vmatpush1.bf16.msra.mxu0 0
    %1395 = vmatprep.subr.bf16.mxu0 0
    %1396 = vmatpush1.bf16.msra.mxu0 0
    %1397 = vmatprep.subr.bf16.mxu0 0
    %1398 = vmatpush1.bf16.msra.mxu0 0
    %1399 = vmatprep.subr.bf16.mxu0 0
    %1400 = vmatpush1.bf16.msra.mxu0 0
    %1401 = vmatprep.mubr.bf16.mxu0 0
    %1402 = vmatmul.mubr.bf16.gmra.mrb[0].mxu0 %v1364
    %v1403 = vpop.f32.mrb[0].mxu0
    %v1404 = vadd.f32 0.0, %v1403
    %v1405 = vpop.f32.mrb[0].mxu0
    %v1406 = vpop.f32.mrb[0].mxu0
    %v1407 = vadd.f32 0.0, %v1406
    %v1408 = vpop.f32.mrb[0].mxu0
    %1409 = vmatprep.mubr.bf16.mxu0 0
    %1410 = vmatmul.mubr.bf16.gmra.mrb[0].mxu0 %v1367
    %v1411 = vpop.f32.mrb[0].mxu0
    %v1412 = vadd.f32 0.0, %v1411
    %v1413 = vpop.f32.mrb[0].mxu0
    %v1414 = vpop.f32.mrb[0].mxu0
    %v1415 = vadd.f32 0.0, %v1414
    %v1416 = vpop.f32.mrb[0].mxu0
    %1417 = vdwg.mxu0
    %v1426 = vunpack.c.l.b16 %v1295
    %v1427 = vunpack.c.l.b16 %v1296
    %v1428 = vunpack.c.l.b16 %v1297
    %v1429 = vunpack.c.l.b16 %v1298
    %v1430 = vunpack.c.l.b16 %v1299
    %v1431 = vunpack.c.l.b16 %v1300
    %v1432 = vunpack.c.l.b16 %v1301
    %v1433 = vunpack.c.l.b16 %v1302
    %v1434 = vpack.c.b16 %v1427, %v1426
    %v1435 = vpack.c.b16 %v1429, %v1428
    %v1436 = vpack.c.b16 %v1431, %v1430
    %v1437 = vpack.c.b16 %v1433, %v1432
    %v1443 = vsel %vm1362, %v1293, 0
    %v1446 = vsel %vm1362, %v1294, 0
    %1448 = vmatprep.subr.bf16.mxu0 0
    %1449 = vmatpush1.bf16.msra.mxu0 %v1434
    %1450 = vmatprep.subr.bf16.mxu0 0
    %1451 = vmatpush1.bf16.msra.mxu0 %v1435
    %1452 = vmatprep.subr.bf16.mxu0 0
    %1453 = vmatpush1.bf16.msra.mxu0 %v1436
    %1454 = vmatprep.subr.bf16.mxu0 0
    %1455 = vmatpush1.bf16.msra.mxu0 %v1437
    %1456 = vmatprep.subr.bf16.mxu0 0
    %1457 = vmatpush1.bf16.msra.mxu0 0
    %1458 = vmatprep.subr.bf16.mxu0 0
    %1459 = vmatpush1.bf16.msra.mxu0 0
    %1460 = vmatprep.subr.bf16.mxu0 0
    %1461 = vmatpush1.bf16.msra.mxu0 0
    %1462 = vmatprep.subr.bf16.mxu0 0
    %1463 = vmatpush1.bf16.msra.mxu0 0
    %1464 = vmatprep.subr.bf16.mxu0 0
    %1465 = vmatpush1.bf16.msra.mxu0 0
    %1466 = vmatprep.subr.bf16.mxu0 0
    %1467 = vmatpush1.bf16.msra.mxu0 0
    %1468 = vmatprep.subr.bf16.mxu0 0
    %1469 = vmatpush1.bf16.msra.mxu0 0
    %1470 = vmatprep.subr.bf16.mxu0 0
    %1471 = vmatpush1.bf16.msra.mxu0 0
    %1472 = vmatprep.subr.bf16.mxu0 0
    %1473 = vmatpush1.bf16.msra.mxu0 0
    %1474 = vmatprep.subr.bf16.mxu0 0
    %1475 = vmatpush1.bf16.msra.mxu0 0
    %1476 = vmatprep.subr.bf16.mxu0 0
    %1477 = vmatpush1.bf16.msra.mxu0 0
    %1478 = vmatprep.subr.bf16.mxu0 0
    %1479 = vmatpush1.bf16.msra.mxu0 0
    %1480 = vmatprep.mubr.bf16.mxu0 0
    %1481 = vmatmul.mubr.bf16.gmra.mrb[0].mxu0 %v1443
    %v1482 = vpop.f32.mrb[0].mxu0
    %v1483 = vadd.f32 %v1404, %v1482
    %v1484 = vpop.f32.mrb[0].mxu0
    %v1485 = vpop.f32.mrb[0].mxu0
    %v1486 = vadd.f32 %v1407, %v1485
    %v1487 = vpop.f32.mrb[0].mxu0
    %1488 = vmatprep.mubr.bf16.mxu0 0
    %1489 = vmatmul.mubr.bf16.gmra.mrb[0].mxu0 %v1446
    %v1490 = vpop.f32.mrb[0].mxu0
    %v1491 = vadd.f32 %v1412, %v1490
    %v1492 = vpop.f32.mrb[0].mxu0
    %v1493 = vpop.f32.mrb[0].mxu0
    %v1494 = vadd.f32 %v1415, %v1493
    %v1495 = vpop.f32.mrb[0].mxu0
    %1496 = vdwg.mxu0
    %v1497 = vld [vmem:[#allocation3 + $0x2] sm:$0xf]
    %v1498 = vld [vmem:[#allocation3 + $0xa] sm:$0xf]
    %v1499 = vld [vmem:[#allocation3 + $0x12] sm:$0xf]
    %v1500 = vld [vmem:[#allocation3 + $0x1a] sm:$0xf]
    %v1501 = vld [vmem:[#allocation3 + $0x32] sm:$0xf]
    %v1502 = vld [vmem:[#allocation3 + $0x3a] sm:$0xf]
    %v1503 = vld [vmem:[#allocation3 + $0x42] sm:$0xf]
    %v1504 = vld [vmem:[#allocation3 + $0x4a] sm:$0xf]
    %v1513 = vcombine.low %v1497, %v1498
    %v1514 = vcombine.low %v1499, %v1500
    %v1515 = vcombine.low %v1501, %v1502
    %v1516 = vcombine.low %v1503, %v1504
    %v1521 = vpack.c.bf16 %v1514, %v1513
    %v1522 = vpack.c.bf16 %v1516, %v1515
    %s1523 = scalar_lea.vmem %s5, 64
    %v1524 = vld [vmem:[%s1523] sm:$0xf]
    %v1525 = vld [vmem:[%s1523 + $0x4] sm:$0xf]
    %v1526 = vld [vmem:[%s1523 + $0x8] sm:$0xf]
    %v1527 = vld [vmem:[%s1523 + $0xc] sm:$0xf]
    %v1528 = vld [vmem:[%s1523 + $0x10] sm:$0xf]
    %v1529 = vld [vmem:[%s1523 + $0x14] sm:$0xf]
    %v1530 = vld [vmem:[%s1523 + $0x18] sm:$0xf]
    %v1531 = vld [vmem:[%s1523 + $0x1c] sm:$0xf]
    %v1540 = vunpack.c.l.b16 %v1524
    %v1541 = vunpack.c.l.b16 %v1525
    %v1542 = vunpack.c.l.b16 %v1526
    %v1543 = vunpack.c.l.b16 %v1527
    %v1544 = vunpack.c.l.b16 %v1528
    %v1545 = vunpack.c.l.b16 %v1529
    %v1546 = vunpack.c.l.b16 %v1530
    %v1547 = vunpack.c.l.b16 %v1531
    %v1548 = vpack.c.b16 %v1541, %v1540
    %v1549 = vpack.c.b16 %v1543, %v1542
    %v1550 = vpack.c.b16 %v1545, %v1544
    %v1551 = vpack.c.b16 %v1547, %v1546
    %v1557 = vsel %vm1362, %v1521, 0
    %v1560 = vsel %vm1362, %v1522, 0
    %1562 = vmatprep.subr.bf16.mxu0 0
    %1563 = vmatpush1.bf16.msra.mxu0 %v1548
    %1564 = vmatprep.subr.bf16.mxu0 0
    %1565 = vmatpush1.bf16.msra.mxu0 %v1549
    %1566 = vmatprep.subr.bf16.mxu0 0
    %1567 = vmatpush1.bf16.msra.mxu0 %v1550
    %1568 = vmatprep.subr.bf16.mxu0 0
    %1569 = vmatpush1.bf16.msra.mxu0 %v1551
    %1570 = vmatprep.subr.bf16.mxu0 0
    %1571 = vmatpush1.bf16.msra.mxu0 0
    %1572 = vmatprep.subr.bf16.mxu0 0
    %1573 = vmatpush1.bf16.msra.mxu0 0
    %1574 = vmatprep.subr.bf16.mxu0 0
    %1575 = vmatpush1.bf16.msra.mxu0 0
    %1576 = vmatprep.subr.bf16.mxu0 0
    %1577 = vmatpush1.bf16.msra.mxu0 0
    %1578 = vmatprep.subr.bf16.mxu0 0
    %1579 = vmatpush1.bf16.msra.mxu0 0
    %1580 = vmatprep.subr.bf16.mxu0 0
    %1581 = vmatpush1.bf16.msra.mxu0 0
    %1582 = vmatprep.subr.bf16.mxu0 0
    %1583 = vmatpush1.bf16.msra.mxu0 0
    %1584 = vmatprep.subr.bf16.mxu0 0
    %1585 = vmatpush1.bf16.msra.mxu0 0
    %1586 = vmatprep.subr.bf16.mxu0 0
    %1587 = vmatpush1.bf16.msra.mxu0 0
    %1588 = vmatprep.subr.bf16.mxu0 0
    %1589 = vmatpush1.bf16.msra.mxu0 0
    %1590 = vmatprep.subr.bf16.mxu0 0
    %1591 = vmatpush1.bf16.msra.mxu0 0
    %1592 = vmatprep.subr.bf16.mxu0 0
    %1593 = vmatpush1.bf16.msra.mxu0 0
    %1594 = vmatprep.mubr.bf16.mxu0 0
    %1595 = vmatmul.mubr.bf16.gmra.mrb[0].mxu0 %v1557
    %v1596 = vpop.f32.mrb[0].mxu0
    %v1597 = vadd.f32 0.0, %v1596
    %v1598 = vpop.f32.mrb[0].mxu0
    %v1599 = vpop.f32.mrb[0].mxu0
    %v1600 = vadd.f32 0.0, %v1599
    %v1601 = vpop.f32.mrb[0].mxu0
    %1602 = vmatprep.mubr.bf16.mxu0 0
    %1603 = vmatmul.mubr.bf16.gmra.mrb[0].mxu0 %v1560
    %v1604 = vpop.f32.mrb[0].mxu0
    %v1605 = vadd.f32 0.0, %v1604
    %v1606 = vpop.f32.mrb[0].mxu0
    %v1607 = vpop.f32.mrb[0].mxu0
    %v1608 = vadd.f32 0.0, %v1607
    %v1609 = vpop.f32.mrb[0].mxu0
    %1610 = vdwg.mxu0
    %v1611 = vadd.f32 %v1483, %v1597
    %v1612 = vadd.f32 %v1486, %v1600
    %v1613 = vadd.f32 %v1491, %v1605
    %v1614 = vadd.f32 %v1494, %v1608
    %v1615 = vld [vmem:[%s1259] sm:$0xf]
    %v1616 = vld [vmem:[%s1259 + $0x8] sm:$0xf]
    %v1617 = vld [vmem:[%s1259 + $0x10] sm:$0xf]
    %v1618 = vld [vmem:[%s1259 + $0x18] sm:$0xf]
    %v1619 = vld [vmem:[%s1259 + $0x30] sm:$0xf]
    %v1620 = vld [vmem:[%s1259 + $0x38] sm:$0xf]
    %v1621 = vld [vmem:[%s1259 + $0x40] sm:$0xf]
    %v1622 = vld [vmem:[%s1259 + $0x48] sm:$0xf]
    %v1631 = vcombine.low %v1615, %v1616
    %v1632 = vcombine.low %v1617, %v1618
    %v1633 = vcombine.low %v1619, %v1620
    %v1634 = vcombine.low %v1621, %v1622
    %v1639 = vpack.c.bf16 %v1632, %v1631
    %v1640 = vpack.c.bf16 %v1634, %v1633
    %s1641 = scalar_lea.vmem %s5, 96
    %v1642 = vld [vmem:[%s1641] sm:$0xf]
    %v1643 = vld [vmem:[%s1641 + $0x4] sm:$0xf]
    %v1644 = vld [vmem:[%s1641 + $0x8] sm:$0xf]
    %v1645 = vld [vmem:[%s1641 + $0xc] sm:$0xf]
    %v1646 = vld [vmem:[%s1641 + $0x10] sm:$0xf]
    %v1647 = vld [vmem:[%s1641 + $0x14] sm:$0xf]
    %v1648 = vld [vmem:[%s1641 + $0x18] sm:$0xf]
    %v1649 = vld [vmem:[%s1641 + $0x1c] sm:$0xf]
    %v1658 = vunpack.c.l.b16 %v1642
    %v1659 = vunpack.c.l.b16 %v1643
    %v1660 = vunpack.c.l.b16 %v1644
    %v1661 = vunpack.c.l.b16 %v1645
    %v1662 = vunpack.c.l.b16 %v1646
    %v1663 = vunpack.c.l.b16 %v1647
    %v1664 = vunpack.c.l.b16 %v1648
    %v1665 = vunpack.c.l.b16 %v1649
    %v1666 = vpack.c.b16 %v1659, %v1658
    %v1667 = vpack.c.b16 %v1661, %v1660
    %v1668 = vpack.c.b16 %v1663, %v1662
    %v1669 = vpack.c.b16 %v1665, %v1664
    %v1675 = vsel %vm1362, %v1639, 0
    %v1678 = vsel %vm1362, %v1640, 0
    %1680 = vmatprep.subr.bf16.mxu0 0
    %1681 = vmatpush1.bf16.msra.mxu0 %v1666
    %1682 = vmatprep.subr.bf16.mxu0 0
    %1683 = vmatpush1.bf16.msra.mxu0 %v1667
    %1684 = vmatprep.subr.bf16.mxu0 0
    %1685 = vmatpush1.bf16.msra.mxu0 %v1668
    %1686 = vmatprep.subr.bf16.mxu0 0
    %1687 = vmatpush1.bf16.msra.mxu0 %v1669
    %1688 = vmatprep.subr.bf16.mxu0 0
    %1689 = vmatpush1.bf16.msra.mxu0 0
    %1690 = vmatprep.subr.bf16.mxu0 0
    %1691 = vmatpush1.bf16.msra.mxu0 0
    %1692 = vmatprep.subr.bf16.mxu0 0
    %1693 = vmatpush1.bf16.msra.mxu0 0
    %1694 = vmatprep.subr.bf16.mxu0 0
    %1695 = vmatpush1.bf16.msra.mxu0 0
    %1696 = vmatprep.subr.bf16.mxu0 0
    %1697 = vmatpush1.bf16.msra.mxu0 0
    %1698 = vmatprep.subr.bf16.mxu0 0
    %1699 = vmatpush1.bf16.msra.mxu0 0
    %1700 = vmatprep.subr.bf16.mxu0 0
    %1701 = vmatpush1.bf16.msra.mxu0 0
    %1702 = vmatprep.subr.bf16.mxu0 0
    %1703 = vmatpush1.bf16.msra.mxu0 0
    %1704 = vmatprep.subr.bf16.mxu0 0
    %1705 = vmatpush1.bf16.msra.mxu0 0
    %1706 = vmatprep.subr.bf16.mxu0 0
    %1707 = vmatpush1.bf16.msra.mxu0 0
    %1708 = vmatprep.subr.bf16.mxu0 0
    %1709 = vmatpush1.bf16.msra.mxu0 0
    %1710 = vmatprep.subr.bf16.mxu0 0
    %1711 = vmatpush1.bf16.msra.mxu0 0
    %1712 = vmatprep.mubr.bf16.mxu0 0
    %1713 = vmatmul.mubr.bf16.gmra.mrb[0].mxu0 %v1675
    %v1714 = vpop.f32.mrb[0].mxu0
    %v1715 = vadd.f32 0.0, %v1714
    %v1716 = vpop.f32.mrb[0].mxu0
    %v1717 = vpop.f32.mrb[0].mxu0
    %v1718 = vadd.f32 0.0, %v1717
    %v1719 = vpop.f32.mrb[0].mxu0
    %1720 = vmatprep.mubr.bf16.mxu0 0
    %1721 = vmatmul.mubr.bf16.gmra.mrb[0].mxu0 %v1678
    %v1722 = vpop.f32.mrb[0].mxu0
    %v1723 = vadd.f32 0.0, %v1722
    %v1724 = vpop.f32.mrb[0].mxu0
    %v1725 = vpop.f32.mrb[0].mxu0
    %v1726 = vadd.f32 0.0, %v1725
    %v1727 = vpop.f32.mrb[0].mxu0
    %1728 = vdwg.mxu0
    %v1729 = vadd.f32 %v1611, %v1715
    %v1730 = vadd.f32 %v1612, %v1718
    %v1731 = vadd.f32 %v1613, %v1723
    %v1732 = vadd.f32 %v1614, %v1726
    %v1733 = vld [vmem:[%s1259 + $0x1] sm:$0xf]
    %v1734 = vld [vmem:[%s1259 + $0x9] sm:$0xf]
    %v1735 = vld [vmem:[%s1259 + $0x11] sm:$0xf]
    %v1736 = vld [vmem:[%s1259 + $0x19] sm:$0xf]
    %v1737 = vld [vmem:[%s1259 + $0x31] sm:$0xf]
    %v1738 = vld [vmem:[%s1259 + $0x39] sm:$0xf]
    %v1739 = vld [vmem:[%s1259 + $0x41] sm:$0xf]
    %v1740 = vld [vmem:[%s1259 + $0x49] sm:$0xf]
    %v1749 = vcombine.low %v1733, %v1734
    %v1750 = vcombine.low %v1735, %v1736
    %v1751 = vcombine.low %v1737, %v1738
    %v1752 = vcombine.low %v1739, %v1740
    %v1757 = vpack.c.bf16 %v1750, %v1749
    %v1758 = vpack.c.bf16 %v1752, %v1751
    %s1759 = scalar_lea.vmem %s5, 128
    %v1760 = vld [vmem:[%s1759] sm:$0xf]
    %v1761 = vld [vmem:[%s1759 + $0x4] sm:$0xf]
    %v1762 = vld [vmem:[%s1759 + $0x8] sm:$0xf]
    %v1763 = vld [vmem:[%s1759 + $0xc] sm:$0xf]
    %v1764 = vld [vmem:[%s1759 + $0x10] sm:$0xf]
    %v1765 = vld [vmem:[%s1759 + $0x14] sm:$0xf]
    %v1766 = vld [vmem:[%s1759 + $0x18] sm:$0xf]
    %v1767 = vld [vmem:[%s1759 + $0x1c] sm:$0xf]
    %v1776 = vunpack.c.l.b16 %v1760
    %v1777 = vunpack.c.l.b16 %v1761
    %v1778 = vunpack.c.l.b16 %v1762
    %v1779 = vunpack.c.l.b16 %v1763
    %v1780 = vunpack.c.l.b16 %v1764
    %v1781 = vunpack.c.l.b16 %v1765
    %v1782 = vunpack.c.l.b16 %v1766
    %v1783 = vunpack.c.l.b16 %v1767
    %v1784 = vpack.c.b16 %v1777, %v1776
    %v1785 = vpack.c.b16 %v1779, %v1778
    %v1786 = vpack.c.b16 %v1781, %v1780
    %v1787 = vpack.c.b16 %v1783, %v1782
    %v1793 = vsel %vm1362, %v1757, 0
    %v1796 = vsel %vm1362, %v1758, 0
    %1798 = vmatprep.subr.bf16.mxu0 0
    %1799 = vmatpush1.bf16.msra.mxu0 %v1784
    %1800 = vmatprep.subr.bf16.mxu0 0
    %1801 = vmatpush1.bf16.msra.mxu0 %v1785
    %1802 = vmatprep.subr.bf16.mxu0 0
    %1803 = vmatpush1.bf16.msra.mxu0 %v1786
    %1804 = vmatprep.subr.bf16.mxu0 0
    %1805 = vmatpush1.bf16.msra.mxu0 %v1787
    %1806 = vmatprep.subr.bf16.mxu0 0
    %1807 = vmatpush1.bf16.msra.mxu0 0
    %1808 = vmatprep.subr.bf16.mxu0 0
    %1809 = vmatpush1.bf16.msra.mxu0 0
    %1810 = vmatprep.subr.bf16.mxu0 0
    %1811 = vmatpush1.bf16.msra.mxu0 0
    %1812 = vmatprep.subr.bf16.mxu0 0
    %1813 = vmatpush1.bf16.msra.mxu0 0
    %1814 = vmatprep.subr.bf16.mxu0 0
    %1815 = vmatpush1.bf16.msra.mxu0 0
    %1816 = vmatprep.subr.bf16.mxu0 0
    %1817 = vmatpush1.bf16.msra.mxu0 0
    %1818 = vmatprep.subr.bf16.mxu0 0
    %1819 = vmatpush1.bf16.msra.mxu0 0
    %1820 = vmatprep.subr.bf16.mxu0 0
    %1821 = vmatpush1.bf16.msra.mxu0 0
    %1822 = vmatprep.subr.bf16.mxu0 0
    %1823 = vmatpush1.bf16.msra.mxu0 0
    %1824 = vmatprep.subr.bf16.mxu0 0
    %1825 = vmatpush1.bf16.msra.mxu0 0
    %1826 = vmatprep.subr.bf16.mxu0 0
    %1827 = vmatpush1.bf16.msra.mxu0 0
    %1828 = vmatprep.subr.bf16.mxu0 0
    %1829 = vmatpush1.bf16.msra.mxu0 0
    %1830 = vmatprep.mubr.bf16.mxu0 0
    %1831 = vmatmul.mubr.bf16.gmra.mrb[0].mxu0 %v1793
    %v1832 = vpop.f32.mrb[0].mxu0
    %v1833 = vadd.f32 0.0, %v1832
    %v1834 = vpop.f32.mrb[0].mxu0
    %v1835 = vpop.f32.mrb[0].mxu0
    %v1836 = vadd.f32 0.0, %v1835
    %v1837 = vpop.f32.mrb[0].mxu0
    %1838 = vmatprep.mubr.bf16.mxu0 0
    %1839 = vmatmul.mubr.bf16.gmra.mrb[0].mxu0 %v1796
    %v1840 = vpop.f32.mrb[0].mxu0
    %v1841 = vadd.f32 0.0, %v1840
    %v1842 = vpop.f32.mrb[0].mxu0
    %v1843 = vpop.f32.mrb[0].mxu0
    %v1844 = vadd.f32 0.0, %v1843
    %v1845 = vpop.f32.mrb[0].mxu0
    %1846 = vdwg.mxu0
    %v1847 = vadd.f32 %v1729, %v1833
    %v1848 = vadd.f32 %v1730, %v1836
    %v1849 = vadd.f32 %v1731, %v1841
    %v1850 = vadd.f32 %v1732, %v1844
    %v1851 = vld [vmem:[%s1259 + $0x2] sm:$0xf]
    %v1852 = vld [vmem:[%s1259 + $0xa] sm:$0xf]
    %v1853 = vld [vmem:[%s1259 + $0x12] sm:$0xf]
    %v1854 = vld [vmem:[%s1259 + $0x1a] sm:$0xf]
    %v1855 = vld [vmem:[%s1259 + $0x32] sm:$0xf]
    %v1856 = vld [vmem:[%s1259 + $0x3a] sm:$0xf]
    %v1857 = vld [vmem:[%s1259 + $0x42] sm:$0xf]
    %v1858 = vld [vmem:[%s1259 + $0x4a] sm:$0xf]
    %v1867 = vcombine.low %v1851, %v1852
    %v1868 = vcombine.low %v1853, %v1854
    %v1869 = vcombine.low %v1855, %v1856
    %v1870 = vcombine.low %v1857, %v1858
    %v1875 = vpack.c.bf16 %v1868, %v1867
    %v1876 = vpack.c.bf16 %v1870, %v1869
    %s1877 = scalar_lea.vmem %s5, 160
    %v1878 = vld [vmem:[%s1877] sm:$0xf]
    %v1879 = vld [vmem:[%s1877 + $0x4] sm:$0xf]
    %v1880 = vld [vmem:[%s1877 + $0x8] sm:$0xf]
    %v1881 = vld [vmem:[%s1877 + $0xc] sm:$0xf]
    %v1882 = vld [vmem:[%s1877 + $0x10] sm:$0xf]
    %v1883 = vld [vmem:[%s1877 + $0x14] sm:$0xf]
    %v1884 = vld [vmem:[%s1877 + $0x18] sm:$0xf]
    %v1885 = vld [vmem:[%s1877 + $0x1c] sm:$0xf]
    %v1894 = vunpack.c.l.b16 %v1878
    %v1895 = vunpack.c.l.b16 %v1879
    %v1896 = vunpack.c.l.b16 %v1880
    %v1897 = vunpack.c.l.b16 %v1881
    %v1898 = vunpack.c.l.b16 %v1882
    %v1899 = vunpack.c.l.b16 %v1883
    %v1900 = vunpack.c.l.b16 %v1884
    %v1901 = vunpack.c.l.b16 %v1885
    %v1902 = vpack.c.b16 %v1895, %v1894
    %v1903 = vpack.c.b16 %v1897, %v1896
    %v1904 = vpack.c.b16 %v1899, %v1898
    %v1905 = vpack.c.b16 %v1901, %v1900
    %v1911 = vsel %vm1362, %v1875, 0
    %v1914 = vsel %vm1362, %v1876, 0
    %1916 = vmatprep.subr.bf16.mxu0 0
    %1917 = vmatpush1.bf16.msra.mxu0 %v1902
    %1918 = vmatprep.subr.bf16.mxu0 0
    %1919 = vmatpush1.bf16.msra.mxu0 %v1903
    %1920 = vmatprep.subr.bf16.mxu0 0
    %1921 = vmatpush1.bf16.msra.mxu0 %v1904
    %1922 = vmatprep.subr.bf16.mxu0 0
    %1923 = vmatpush1.bf16.msra.mxu0 %v1905
    %1924 = vmatprep.subr.bf16.mxu0 0
    %1925 = vmatpush1.bf16.msra.mxu0 0
    %1926 = vmatprep.subr.bf16.mxu0 0
    %1927 = vmatpush1.bf16.msra.mxu0 0
    %1928 = vmatprep.subr.bf16.mxu0 0
    %1929 = vmatpush1.bf16.msra.mxu0 0
    %1930 = vmatprep.subr.bf16.mxu0 0
    %1931 = vmatpush1.bf16.msra.mxu0 0
    %1932 = vmatprep.subr.bf16.mxu0 0
    %1933 = vmatpush1.bf16.msra.mxu0 0
    %1934 = vmatprep.subr.bf16.mxu0 0
    %1935 = vmatpush1.bf16.msra.mxu0 0
    %1936 = vmatprep.subr.bf16.mxu0 0
    %1937 = vmatpush1.bf16.msra.mxu0 0
    %1938 = vmatprep.subr.bf16.mxu0 0
    %1939 = vmatpush1.bf16.msra.mxu0 0
    %1940 = vmatprep.subr.bf16.mxu0 0
    %1941 = vmatpush1.bf16.msra.mxu0 0
    %1942 = vmatprep.subr.bf16.mxu0 0
    %1943 = vmatpush1.bf16.msra.mxu0 0
    %1944 = vmatprep.subr.bf16.mxu0 0
    %1945 = vmatpush1.bf16.msra.mxu0 0
    %1946 = vmatprep.subr.bf16.mxu0 0
    %1947 = vmatpush1.bf16.msra.mxu0 0
    %1948 = vmatprep.mubr.bf16.mxu0 0
    %1949 = vmatmul.mubr.bf16.gmra.mrb[0].mxu0 %v1911
    %v1950 = vpop.f32.mrb[0].mxu0
    %v1951 = vadd.f32 0.0, %v1950
    %v1952 = vpop.f32.mrb[0].mxu0
    %v1953 = vpop.f32.mrb[0].mxu0
    %v1954 = vadd.f32 0.0, %v1953
    %v1955 = vpop.f32.mrb[0].mxu0
    %1956 = vmatprep.mubr.bf16.mxu0 0
    %1957 = vmatmul.mubr.bf16.gmra.mrb[0].mxu0 %v1914
    %v1958 = vpop.f32.mrb[0].mxu0
    %v1959 = vadd.f32 0.0, %v1958
    %v1960 = vpop.f32.mrb[0].mxu0
    %v1961 = vpop.f32.mrb[0].mxu0
    %v1962 = vadd.f32 0.0, %v1961
    %v1963 = vpop.f32.mrb[0].mxu0
    %1964 = vdwg.mxu0
    %v1965 = vadd.f32 %v1847, %v1951
    %v1966 = vadd.f32 %v1848, %v1954
    %v1967 = vadd.f32 %v1849, %v1959
    %v1968 = vadd.f32 %v1850, %v1962
    %s1969 = scalar_lea.vmem [#allocation3], 16
    %v1970 = vld [vmem:[%s1969] sm:$0xf]
    %v1971 = vld [vmem:[%s1969 + $0x8] sm:$0xf]
    %v1972 = vld [vmem:[%s1969 + $0x10] sm:$0xf]
    %v1973 = vld [vmem:[%s1969 + $0x18] sm:$0xf]
    %v1974 = vld [vmem:[%s1969 + $0x30] sm:$0xf]
    %v1975 = vld [vmem:[%s1969 + $0x38] sm:$0xf]
    %v1976 = vld [vmem:[%s1969 + $0x40] sm:$0xf]
    %v1977 = vld [vmem:[%s1969 + $0x48] sm:$0xf]
    %v1986 = vcombine.low %v1970, %v1971
    %v1987 = vcombine.low %v1972, %v1973
    %v1988 = vcombine.low %v1974, %v1975
    %v1989 = vcombine.low %v1976, %v1977
    %v1994 = vpack.c.bf16 %v1987, %v1986
    %v1995 = vpack.c.bf16 %v1989, %v1988
    %s1996 = scalar_lea.vmem %s5, 192
    %v1997 = vld [vmem:[%s1996] sm:$0xf]
    %v1998 = vld [vmem:[%s1996 + $0x4] sm:$0xf]
    %v1999 = vld [vmem:[%s1996 + $0x8] sm:$0xf]
    %v2000 = vld [vmem:[%s1996 + $0xc] sm:$0xf]
    %v2001 = vld [vmem:[%s1996 + $0x10] sm:$0xf]
    %v2002 = vld [vmem:[%s1996 + $0x14] sm:$0xf]
    %v2003 = vld [vmem:[%s1996 + $0x18] sm:$0xf]
    %v2004 = vld [vmem:[%s1996 + $0x1c] sm:$0xf]
    %v2013 = vunpack.c.l.b16 %v1997
    %v2014 = vunpack.c.l.b16 %v1998
    %v2015 = vunpack.c.l.b16 %v1999
    %v2016 = vunpack.c.l.b16 %v2000
    %v2017 = vunpack.c.l.b16 %v2001
    %v2018 = vunpack.c.l.b16 %v2002
    %v2019 = vunpack.c.l.b16 %v2003
    %v2020 = vunpack.c.l.b16 %v2004
    %v2021 = vpack.c.b16 %v2014, %v2013
    %v2022 = vpack.c.b16 %v2016, %v2015
    %v2023 = vpack.c.b16 %v2018, %v2017
    %v2024 = vpack.c.b16 %v2020, %v2019
    %v2030 = vsel %vm1362, %v1994, 0
    %v2033 = vsel %vm1362, %v1995, 0
    %2035 = vmatprep.subr.bf16.mxu0 0
    %2036 = vmatpush1.bf16.msra.mxu0 %v2021
    %2037 = vmatprep.subr.bf16.mxu0 0
    %2038 = vmatpush1.bf16.msra.mxu0 %v2022
    %2039 = vmatprep.subr.bf16.mxu0 0
    %2040 = vmatpush1.bf16.msra.mxu0 %v2023
    %2041 = vmatprep.subr.bf16.mxu0 0
    %2042 = vmatpush1.bf16.msra.mxu0 %v2024
    %2043 = vmatprep.subr.bf16.mxu0 0
    %2044 = vmatpush1.bf16.msra.mxu0 0
    %2045 = vmatprep.subr.bf16.mxu0 0
    %2046 = vmatpush1.bf16.msra.mxu0 0
    %2047 = vmatprep.subr.bf16.mxu0 0
    %2048 = vmatpush1.bf16.msra.mxu0 0
    %2049 = vmatprep.subr.bf16.mxu0 0
    %2050 = vmatpush1.bf16.msra.mxu0 0
    %2051 = vmatprep.subr.bf16.mxu0 0
    %2052 = vmatpush1.bf16.msra.mxu0 0
    %2053 = vmatprep.subr.bf16.mxu0 0
    %2054 = vmatpush1.bf16.msra.mxu0 0
    %2055 = vmatprep.subr.bf16.mxu0 0
    %2056 = vmatpush1.bf16.msra.mxu0 0
    %2057 = vmatprep.subr.bf16.mxu0 0
    %2058 = vmatpush1.bf16.msra.mxu0 0
    %2059 = vmatprep.subr.bf16.mxu0 0
    %2060 = vmatpush1.bf16.msra.mxu0 0
    %2061 = vmatprep.subr.bf16.mxu0 0
    %2062 = vmatpush1.bf16.msra.mxu0 0
    %2063 = vmatprep.subr.bf16.mxu0 0
    %2064 = vmatpush1.bf16.msra.mxu0 0
    %2065 = vmatprep.subr.bf16.mxu0 0
    %2066 = vmatpush1.bf16.msra.mxu0 0
    %2067 = vmatprep.mubr.bf16.mxu0 0
    %2068 = vmatmul.mubr.bf16.gmra.mrb[0].mxu0 %v2030
    %v2069 = vpop.f32.mrb[0].mxu0
    %v2070 = vadd.f32 0.0, %v2069
    %v2071 = vpop.f32.mrb[0].mxu0
    %v2072 = vpop.f32.mrb[0].mxu0
    %v2073 = vadd.f32 0.0, %v2072
    %v2074 = vpop.f32.mrb[0].mxu0
    %2075 = vmatprep.mubr.bf16.mxu0 0
    %2076 = vmatmul.mubr.bf16.gmra.mrb[0].mxu0 %v2033
    %v2077 = vpop.f32.mrb[0].mxu0
    %v2078 = vadd.f32 0.0, %v2077
    %v2079 = vpop.f32.mrb[0].mxu0
    %v2080 = vpop.f32.mrb[0].mxu0
    %v2081 = vadd.f32 0.0, %v2080
    %v2082 = vpop.f32.mrb[0].mxu0
    %2083 = vdwg.mxu0
    %v2084 = vadd.f32 %v1965, %v2070
    %v2085 = vadd.f32 %v1966, %v2073
    %v2086 = vadd.f32 %v1967, %v2078
    %v2087 = vadd.f32 %v1968, %v2081
    %v2088 = vld [vmem:[%s1969 + $0x1] sm:$0xf]
    %v2089 = vld [vmem:[%s1969 + $0x9] sm:$0xf]
    %v2090 = vld [vmem:[%s1969 + $0x11] sm:$0xf]
    %v2091 = vld [vmem:[%s1969 + $0x19] sm:$0xf]
    %v2092 = vld [vmem:[%s1969 + $0x31] sm:$0xf]
    %v2093 = vld [vmem:[%s1969 + $0x39] sm:$0xf]
    %v2094 = vld [vmem:[%s1969 + $0x41] sm:$0xf]
    %v2095 = vld [vmem:[%s1969 + $0x49] sm:$0xf]
    %v2104 = vcombine.low %v2088, %v2089
    %v2105 = vcombine.low %v2090, %v2091
    %v2106 = vcombine.low %v2092, %v2093
    %v2107 = vcombine.low %v2094, %v2095
    %v2112 = vpack.c.bf16 %v2105, %v2104
    %v2113 = vpack.c.bf16 %v2107, %v2106
    %s2114 = scalar_lea.vmem %s5, 224
    %v2115 = vld [vmem:[%s2114] sm:$0xf]
    %v2116 = vld [vmem:[%s2114 + $0x4] sm:$0xf]
    %v2117 = vld [vmem:[%s2114 + $0x8] sm:$0xf]
    %v2118 = vld [vmem:[%s2114 + $0xc] sm:$0xf]
    %v2119 = vld [vmem:[%s2114 + $0x10] sm:$0xf]
    %v2120 = vld [vmem:[%s2114 + $0x14] sm:$0xf]
    %v2121 = vld [vmem:[%s2114 + $0x18] sm:$0xf]
    %v2122 = vld [vmem:[%s2114 + $0x1c] sm:$0xf]
    %v2131 = vunpack.c.l.b16 %v2115
    %v2132 = vunpack.c.l.b16 %v2116
    %v2133 = vunpack.c.l.b16 %v2117
    %v2134 = vunpack.c.l.b16 %v2118
    %v2135 = vunpack.c.l.b16 %v2119
    %v2136 = vunpack.c.l.b16 %v2120
    %v2137 = vunpack.c.l.b16 %v2121
    %v2138 = vunpack.c.l.b16 %v2122
    %v2139 = vpack.c.b16 %v2132, %v2131
    %v2140 = vpack.c.b16 %v2134, %v2133
    %v2141 = vpack.c.b16 %v2136, %v2135
    %v2142 = vpack.c.b16 %v2138, %v2137
    %v2148 = vsel %vm1362, %v2112, 0
    %v2151 = vsel %vm1362, %v2113, 0
    %2153 = vmatprep.subr.bf16.mxu0 0
    %2154 = vmatpush1.bf16.msra.mxu0 %v2139
    %2155 = vmatprep.subr.bf16.mxu0 0
    %2156 = vmatpush1.bf16.msra.mxu0 %v2140
    %2157 = vmatprep.subr.bf16.mxu0 0
    %2158 = vmatpush1.bf16.msra.mxu0 %v2141
    %2159 = vmatprep.subr.bf16.mxu0 0
    %2160 = vmatpush1.bf16.msra.mxu0 %v2142
    %2161 = vmatprep.subr.bf16.mxu0 0
    %2162 = vmatpush1.bf16.msra.mxu0 0
    %2163 = vmatprep.subr.bf16.mxu0 0
    %2164 = vmatpush1.bf16.msra.mxu0 0
    %2165 = vmatprep.subr.bf16.mxu0 0
    %2166 = vmatpush1.bf16.msra.mxu0 0
    %2167 = vmatprep.subr.bf16.mxu0 0
    %2168 = vmatpush1.bf16.msra.mxu0 0
    %2169 = vmatprep.subr.bf16.mxu0 0
    %2170 = vmatpush1.bf16.msra.mxu0 0
    %2171 = vmatprep.subr.bf16.mxu0 0
    %2172 = vmatpush1.bf16.msra.mxu0 0
    %2173 = vmatprep.subr.bf16.mxu0 0
    %2174 = vmatpush1.bf16.msra.mxu0 0
    %2175 = vmatprep.subr.bf16.mxu0 0
    %2176 = vmatpush1.bf16.msra.mxu0 0
    %2177 = vmatprep.subr.bf16.mxu0 0
    %2178 = vmatpush1.bf16.msra.mxu0 0
    %2179 = vmatprep.subr.bf16.mxu0 0
    %2180 = vmatpush1.bf16.msra.mxu0 0
    %2181 = vmatprep.subr.bf16.mxu0 0
    %2182 = vmatpush1.bf16.msra.mxu0 0
    %2183 = vmatprep.subr.bf16.mxu0 0
    %2184 = vmatpush1.bf16.msra.mxu0 0
    %2185 = vmatprep.mubr.bf16.mxu0 0
    %2186 = vmatmul.mubr.bf16.gmra.mrb[0].mxu0 %v2148
    %v2187 = vpop.f32.mrb[0].mxu0
    %v2188 = vadd.f32 0.0, %v2187
    %v2189 = vpop.f32.mrb[0].mxu0
    %v2190 = vpop.f32.mrb[0].mxu0
    %v2191 = vadd.f32 0.0, %v2190
    %v2192 = vpop.f32.mrb[0].mxu0
    %2193 = vmatprep.mubr.bf16.mxu0 0
    %2194 = vmatmul.mubr.bf16.gmra.mrb[0].mxu0 %v2151
    %v2195 = vpop.f32.mrb[0].mxu0
    %v2196 = vadd.f32 0.0, %v2195
    %v2197 = vpop.f32.mrb[0].mxu0
    %v2198 = vpop.f32.mrb[0].mxu0
    %v2199 = vadd.f32 0.0, %v2198
    %v2200 = vpop.f32.mrb[0].mxu0
    %2201 = vdwg.mxu0
    %v2202 = vadd.f32 %v2084, %v2188
    %v2203 = vadd.f32 %v2085, %v2191
    %v2204 = vadd.f32 %v2086, %v2196
    %v2205 = vadd.f32 %v2087, %v2199
    %v2206 = vld [vmem:[%s1969 + $0x2] sm:$0xf]
    %v2207 = vld [vmem:[%s1969 + $0xa] sm:$0xf]
    %v2208 = vld [vmem:[%s1969 + $0x12] sm:$0xf]
    %v2209 = vld [vmem:[%s1969 + $0x1a] sm:$0xf]
    %v2210 = vld [vmem:[%s1969 + $0x32] sm:$0xf]
    %v2211 = vld [vmem:[%s1969 + $0x3a] sm:$0xf]
    %v2212 = vld [vmem:[%s1969 + $0x42] sm:$0xf]
    %v2213 = vld [vmem:[%s1969 + $0x4a] sm:$0xf]
    %v2222 = vcombine.low %v2206, %v2207
    %v2223 = vcombine.low %v2208, %v2209
    %v2224 = vcombine.low %v2210, %v2211
    %v2225 = vcombine.low %v2212, %v2213
    %v2230 = vpack.c.bf16 %v2223, %v2222
    %v2231 = vpack.c.bf16 %v2225, %v2224
    %s2232 = scalar_lea.vmem %s5, 256
    %v2233 = vld [vmem:[%s2232] sm:$0xf]
    %v2234 = vld [vmem:[%s2232 + $0x4] sm:$0xf]
    %v2235 = vld [vmem:[%s2232 + $0x8] sm:$0xf]
    %v2236 = vld [vmem:[%s2232 + $0xc] sm:$0xf]
    %v2237 = vld [vmem:[%s2232 + $0x10] sm:$0xf]
    %v2238 = vld [vmem:[%s2232 + $0x14] sm:$0xf]
    %v2239 = vld [vmem:[%s2232 + $0x18] sm:$0xf]
    %v2240 = vld [vmem:[%s2232 + $0x1c] sm:$0xf]
    %v2249 = vunpack.c.l.b16 %v2233
    %v2250 = vunpack.c.l.b16 %v2234
    %v2251 = vunpack.c.l.b16 %v2235
    %v2252 = vunpack.c.l.b16 %v2236
    %v2253 = vunpack.c.l.b16 %v2237
    %v2254 = vunpack.c.l.b16 %v2238
    %v2255 = vunpack.c.l.b16 %v2239
    %v2256 = vunpack.c.l.b16 %v2240
    %v2257 = vpack.c.b16 %v2250, %v2249
    %v2258 = vpack.c.b16 %v2252, %v2251
    %v2259 = vpack.c.b16 %v2254, %v2253
    %v2260 = vpack.c.b16 %v2256, %v2255
    %v2266 = vsel %vm1362, %v2230, 0
    %v2269 = vsel %vm1362, %v2231, 0
    %2271 = vmatprep.subr.bf16.mxu0 0
    %2272 = vmatpush1.bf16.msra.mxu0 %v2257
    %2273 = vmatprep.subr.bf16.mxu0 0
    %2274 = vmatpush1.bf16.msra.mxu0 %v2258
    %2275 = vmatprep.subr.bf16.mxu0 0
    %2276 = vmatpush1.bf16.msra.mxu0 %v2259
    %2277 = vmatprep.subr.bf16.mxu0 0
    %2278 = vmatpush1.bf16.msra.mxu0 %v2260
    %2279 = vmatprep.subr.bf16.mxu0 0
    %2280 = vmatpush1.bf16.msra.mxu0 0
    %2281 = vmatprep.subr.bf16.mxu0 0
    %2282 = vmatpush1.bf16.msra.mxu0 0
    %2283 = vmatprep.subr.bf16.mxu0 0
    %2284 = vmatpush1.bf16.msra.mxu0 0
    %2285 = vmatprep.subr.bf16.mxu0 0
    %2286 = vmatpush1.bf16.msra.mxu0 0
    %2287 = vmatprep.subr.bf16.mxu0 0
    %2288 = vmatpush1.bf16.msra.mxu0 0
    %2289 = vmatprep.subr.bf16.mxu0 0
    %2290 = vmatpush1.bf16.msra.mxu0 0
    %2291 = vmatprep.subr.bf16.mxu0 0
    %2292 = vmatpush1.bf16.msra.mxu0 0
    %2293 = vmatprep.subr.bf16.mxu0 0
    %2294 = vmatpush1.bf16.msra.mxu0 0
    %2295 = vmatprep.subr.bf16.mxu0 0
    %2296 = vmatpush1.bf16.msra.mxu0 0
    %2297 = vmatprep.subr.bf16.mxu0 0
    %2298 = vmatpush1.bf16.msra.mxu0 0
    %2299 = vmatprep.subr.bf16.mxu0 0
    %2300 = vmatpush1.bf16.msra.mxu0 0
    %2301 = vmatprep.subr.bf16.mxu0 0
    %2302 = vmatpush1.bf16.msra.mxu0 0
    %2303 = vmatprep.mubr.bf16.mxu0 0
    %2304 = vmatmul.mubr.bf16.gmra.mrb[0].mxu0 %v2266
    %v2305 = vpop.f32.mrb[0].mxu0
    %v2306 = vadd.f32 0.0, %v2305
    %v2307 = vpop.f32.mrb[0].mxu0
    %v2308 = vpop.f32.mrb[0].mxu0
    %v2309 = vadd.f32 0.0, %v2308
    %v2310 = vpop.f32.mrb[0].mxu0
    %2311 = vmatprep.mubr.bf16.mxu0 0
    %2312 = vmatmul.mubr.bf16.gmra.mrb[0].mxu0 %v2269
    %v2313 = vpop.f32.mrb[0].mxu0
    %v2314 = vadd.f32 0.0, %v2313
    %v2315 = vpop.f32.mrb[0].mxu0
    %v2316 = vpop.f32.mrb[0].mxu0
    %v2317 = vadd.f32 0.0, %v2316
    %v2318 = vpop.f32.mrb[0].mxu0
    %2319 = vdwg.mxu0
    %v2320 = vadd.f32 %v2202, %v2306
    %v2321 = vadd.f32 %v2203, %v2309
    %v2322 = vadd.f32 %v2204, %v2314
    %v2323 = vadd.f32 %v2205, %v2317
    %v2324 = vld [vmem:[%s6] sm:$0x1]
    %v2326 = vlaneseq
    %v2327 = vshrl.u32 %v2326, 7
    %v2328 = vsub.s32 0, %v2327
    %v2329 = vrot.slane %v2324, %v2328
    %v2331 = vadd.f32 %v2320, %v2329
    %v2332 = vadd.f32 %v2321, %v2329
    %v2333 = vadd.f32 %v2322, %v2329
    %v2334 = vadd.f32 %v2323, %v2329
    %v2335 = vmax.f32 %v2331, 0.0
    %v2336 = vmax.f32 %v2332, 0.0
    %v2337 = vmax.f32 %v2333, 0.0
    %v2338 = vmax.f32 %v2334, 0.0
    %2339 = vst [vmem:[#allocation4] sm:$0x1] %v2335
    %v2342 = vunpack.c.l.s4 1983009808
    %v2343 = vunpack.c.0.s8 %v2342
    %v2344 = vlaneseq
    %v2345 = vshrl.u32 %v2344, 7
    %v2346 = vsub.s32 %v2343, %v2345
    %v2347 = vrot.slane %v2335, %v2346
    %v2348 = vrot.slane %v2347, 7
    %v2349 = vrot.slane %v2348, 2
    %2351 = vst [vmem:[#allocation4 + $0x2] sm:$0x1] %v2349
    %v2352 = vcombine.high %v2347, %v2347
    %2354 = vst [vmem:[#allocation4 + $0x4] sm:$0x1] %v2352
    %v2355 = vrot.slane %v2352, 7
    %v2356 = vrot.slane %v2355, 2
    %2358 = vst [vmem:[#allocation4 + $0x6] sm:$0x1] %v2356
    %v2359 = vcombine.high %v2335, %v2335
    %v2361 = vunpack.c.l.s4 1983009808
    %v2362 = vunpack.c.0.s8 %v2361
    %v2363 = vlaneseq
    %v2364 = vshrl.u32 %v2363, 7
    %v2365 = vsub.s32 %v2362, %v2364
    %v2366 = vrot.slane %v2359, %v2365
    %2368 = vst [vmem:[#allocation4 + $0x8] sm:$0x1] %v2366
    %v2369 = vrot.slane %v2366, 7
    %v2370 = vrot.slane %v2369, 2
    %2372 = vst [vmem:[#allocation4 + $0xa] sm:$0x1] %v2370
    %v2373 = vcombine.high %v2366, %v2366
    %2375 = vst [vmem:[#allocation4 + $0xc] sm:$0x1] %v2373
    %v2376 = vrot.slane %v2373, 7
    %v2377 = vrot.slane %v2376, 2
    %2379 = vst [vmem:[#allocation4 + $0xe] sm:$0x1] %v2377
    %2380 = vst [vmem:[#allocation4 + $0x10] sm:$0x1] %v2336
    %v2383 = vunpack.c.l.s4 1983009808
    %v2384 = vunpack.c.0.s8 %v2383
    %v2385 = vlaneseq
    %v2386 = vshrl.u32 %v2385, 7
    %v2387 = vsub.s32 %v2384, %v2386
    %v2388 = vrot.slane %v2336, %v2387
    %v2389 = vrot.slane %v2388, 7
    %v2390 = vrot.slane %v2389, 2
    %2392 = vst [vmem:[#allocation4 + $0x12] sm:$0x1] %v2390
    %v2393 = vcombine.high %v2388, %v2388
    %2395 = vst [vmem:[#allocation4 + $0x14] sm:$0x1] %v2393
    %v2396 = vrot.slane %v2393, 7
    %v2397 = vrot.slane %v2396, 2
    %2399 = vst [vmem:[#allocation4 + $0x16] sm:$0x1] %v2397
    %v2400 = vcombine.high %v2336, %v2336
    %v2402 = vunpack.c.l.s4 1983009808
    %v2403 = vunpack.c.0.s8 %v2402
    %v2404 = vlaneseq
    %v2405 = vshrl.u32 %v2404, 7
    %v2406 = vsub.s32 %v2403, %v2405
    %v2407 = vrot.slane %v2400, %v2406
    %2409 = vst [vmem:[#allocation4 + $0x18] sm:$0x1] %v2407
    %v2410 = vrot.slane %v2407, 7
    %v2411 = vrot.slane %v2410, 2
    %2413 = vst [vmem:[#allocation4 + $0x1a] sm:$0x1] %v2411
    %v2414 = vcombine.high %v2407, %v2407
    %2416 = vst [vmem:[#allocation4 + $0x1c] sm:$0x1] %v2414
    %v2417 = vrot.slane %v2414, 7
    %v2418 = vrot.slane %v2417, 2
    %2420 = vst [vmem:[#allocation4 + $0x1e] sm:$0x1] %v2418
    %2421 = vst [vmem:[#allocation4 + $0x1] sm:$0x1] %v2337
    %v2424 = vunpack.c.l.s4 1983009808
    %v2425 = vunpack.c.0.s8 %v2424
    %v2426 = vlaneseq
    %v2427 = vshrl.u32 %v2426, 7
    %v2428 = vsub.s32 %v2425, %v2427
    %v2429 = vrot.slane %v2337, %v2428
    %v2430 = vrot.slane %v2429, 7
    %v2431 = vrot.slane %v2430, 2
    %2433 = vst [vmem:[#allocation4 + $0x3] sm:$0x1] %v2431
    %v2434 = vcombine.high %v2429, %v2429
    %2436 = vst [vmem:[#allocation4 + $0x5] sm:$0x1] %v2434
    %v2437 = vrot.slane %v2434, 7
    %v2438 = vrot.slane %v2437, 2
    %2440 = vst [vmem:[#allocation4 + $0x7] sm:$0x1] %v2438
    %v2441 = vcombine.high %v2337, %v2337
    %v2443 = vunpack.c.l.s4 1983009808
    %v2444 = vunpack.c.0.s8 %v2443
    %v2445 = vlaneseq
    %v2446 = vshrl.u32 %v2445, 7
    %v2447 = vsub.s32 %v2444, %v2446
    %v2448 = vrot.slane %v2441, %v2447
    %2450 = vst [vmem:[#allocation4 + $0x9] sm:$0x1] %v2448
    %v2451 = vrot.slane %v2448, 7
    %v2452 = vrot.slane %v2451, 2
    %2454 = vst [vmem:[#allocation4 + $0xb] sm:$0x1] %v2452
    %v2455 = vcombine.high %v2448, %v2448
    %2457 = vst [vmem:[#allocation4 + $0xd] sm:$0x1] %v2455
    %v2458 = vrot.slane %v2455, 7
    %v2459 = vrot.slane %v2458, 2
    %2461 = vst [vmem:[#allocation4 + $0xf] sm:$0x1] %v2459
    %2462 = vst [vmem:[#allocation4 + $0x11] sm:$0x1] %v2338
    %v2465 = vunpack.c.l.s4 1983009808
    %v2466 = vunpack.c.0.s8 %v2465
    %v2467 = vlaneseq
    %v2468 = vshrl.u32 %v2467, 7
    %v2469 = vsub.s32 %v2466, %v2468
    %v2470 = vrot.slane %v2338, %v2469
    %v2471 = vrot.slane %v2470, 7
    %v2472 = vrot.slane %v2471, 2
    %2474 = vst [vmem:[#allocation4 + $0x13] sm:$0x1] %v2472
    %v2475 = vcombine.high %v2470, %v2470
    %2477 = vst [vmem:[#allocation4 + $0x15] sm:$0x1] %v2475
    %v2478 = vrot.slane %v2475, 7
    %v2479 = vrot.slane %v2478, 2
    %2481 = vst [vmem:[#allocation4 + $0x17] sm:$0x1] %v2479
    %v2482 = vcombine.high %v2338, %v2338
    %v2484 = vunpack.c.l.s4 1983009808
    %v2485 = vunpack.c.0.s8 %v2484
    %v2486 = vlaneseq
    %v2487 = vshrl.u32 %v2486, 7
    %v2488 = vsub.s32 %v2485, %v2487
    %v2489 = vrot.slane %v2482, %v2488
    %2491 = vst [vmem:[#allocation4 + $0x19] sm:$0x1] %v2489
    %v2492 = vrot.slane %v2489, 7
    %v2493 = vrot.slane %v2492, 2
    %2495 = vst [vmem:[#allocation4 + $0x1b] sm:$0x1] %v2493
    %v2496 = vcombine.high %v2489, %v2489
    %2498 = vst [vmem:[#allocation4 + $0x1d] sm:$0x1] %v2496
    %v2499 = vrot.slane %v2496, 7
    %v2500 = vrot.slane %v2499, 2
    %2502 = vst [vmem:[#allocation4 + $0x1f] sm:$0x1] %v2500
    %v2503 = vld [vmem:[#allocation4] sm:$0xff]
    %v2504 = vld [vmem:[#allocation4 + $0x8] sm:$0xff]
    %v2505 = vld [vmem:[#allocation4 + $0x10] sm:$0xff]
    %v2506 = vld [vmem:[#allocation4 + $0x18] sm:$0xff]
    %v2511 = vcombine.high %v2503, %v2503
    %v2513 = vunpack.c.l.s4 1983009808
    %v2514 = vunpack.c.0.s8 %v2513
    %v2515 = vlaneseq
    %v2516 = vshrl.u32 %v2515, 7
    %v2517 = vsub.s32 %v2514, %v2516
    %v2518 = vrot.slane %v2503, %v2517
    %v2520 = vunpack.c.l.s4 1983009808
    %v2521 = vunpack.c.0.s8 %v2520
    %v2522 = vlaneseq
    %v2523 = vshrl.u32 %v2522, 7
    %v2524 = vsub.s32 %v2521, %v2523
    %v2525 = vrot.slane %v2511, %v2524
    %v2526 = vcombine.high %v2518, %v2518
    %v2527 = vcombine.high %v2525, %v2525
    %v2528 = vcombine.high %v2504, %v2504
    %v2530 = vunpack.c.l.s4 1983009808
    %v2531 = vunpack.c.0.s8 %v2530
    %v2532 = vlaneseq
    %v2533 = vshrl.u32 %v2532, 7
    %v2534 = vsub.s32 %v2531, %v2533
    %v2535 = vrot.slane %v2504, %v2534
    %v2537 = vunpack.c.l.s4 1983009808
    %v2538 = vunpack.c.0.s8 %v2537
    %v2539 = vlaneseq
    %v2540 = vshrl.u32 %v2539, 7
    %v2541 = vsub.s32 %v2538, %v2540
    %v2542 = vrot.slane %v2528, %v2541
    %v2543 = vcombine.high %v2535, %v2535
    %v2544 = vcombine.high %v2542, %v2542
    %v2545 = vcombine.high %v2505, %v2505
    %v2547 = vunpack.c.l.s4 1983009808
    %v2548 = vunpack.c.0.s8 %v2547
    %v2549 = vlaneseq
    %v2550 = vshrl.u32 %v2549, 7
    %v2551 = vsub.s32 %v2548, %v2550
    %v2552 = vrot.slane %v2505, %v2551
    %v2554 = vunpack.c.l.s4 1983009808
    %v2555 = vunpack.c.0.s8 %v2554
    %v2556 = vlaneseq
    %v2557 = vshrl.u32 %v2556, 7
    %v2558 = vsub.s32 %v2555, %v2557
    %v2559 = vrot.slane %v2545, %v2558
    %v2560 = vcombine.high %v2552, %v2552
    %v2561 = vcombine.high %v2559, %v2559
    %v2562 = vcombine.high %v2506, %v2506
    %v2564 = vunpack.c.l.s4 1983009808
    %v2565 = vunpack.c.0.s8 %v2564
    %v2566 = vlaneseq
    %v2567 = vshrl.u32 %v2566, 7
    %v2568 = vsub.s32 %v2565, %v2567
    %v2569 = vrot.slane %v2506, %v2568
    %v2571 = vunpack.c.l.s4 1983009808
    %v2572 = vunpack.c.0.s8 %v2571
    %v2573 = vlaneseq
    %v2574 = vshrl.u32 %v2573, 7
    %v2575 = vsub.s32 %v2572, %v2574
    %v2576 = vrot.slane %v2562, %v2575
    %v2577 = vcombine.high %v2569, %v2569
    %v2578 = vcombine.high %v2576, %v2576
    %v2595 = vpack.c.bf16 %v2518, %v2518
    %v2596 = vpack.c.bf16 %v2526, %v2526
    %v2597 = vpack.c.bf16 %v2525, %v2525
    %v2598 = vpack.c.bf16 %v2527, %v2527
    %v2599 = vpack.c.bf16 %v2535, %v2535
    %v2600 = vpack.c.bf16 %v2543, %v2543
    %v2601 = vpack.c.bf16 %v2542, %v2542
    %v2602 = vpack.c.bf16 %v2544, %v2544
    %v2603 = vpack.c.bf16 %v2552, %v2552
    %v2604 = vpack.c.bf16 %v2560, %v2560
    %v2605 = vpack.c.bf16 %v2559, %v2559
    %v2606 = vpack.c.bf16 %v2561, %v2561
    %v2607 = vpack.c.bf16 %v2569, %v2569
    %v2608 = vpack.c.bf16 %v2577, %v2577
    %v2609 = vpack.c.bf16 %v2576, %v2576
    %v2610 = vpack.c.bf16 %v2578, %v2578
    %v2611 = vld [vmem:[%s7] sm:$0xf]
    %v2612 = vld [vmem:[%s7 + $0x4] sm:$0xf]
    %v2613 = vld [vmem:[%s7 + $0x8] sm:$0xf]
    %v2614 = vld [vmem:[%s7 + $0xc] sm:$0xf]
    %v2615 = vld [vmem:[%s7 + $0x10] sm:$0xf]
    %v2616 = vld [vmem:[%s7 + $0x14] sm:$0xf]
    %v2617 = vld [vmem:[%s7 + $0x18] sm:$0xf]
    %v2618 = vld [vmem:[%s7 + $0x1c] sm:$0xf]
    %v2619 = vld [vmem:[%s7 + $0x20] sm:$0xf]
    %v2620 = vld [vmem:[%s7 + $0x24] sm:$0xf]
    %v2621 = vld [vmem:[%s7 + $0x28] sm:$0xf]
    %v2622 = vld [vmem:[%s7 + $0x2c] sm:$0xf]
    %v2623 = vld [vmem:[%s7 + $0x30] sm:$0xf]
    %v2624 = vld [vmem:[%s7 + $0x34] sm:$0xf]
    %v2625 = vld [vmem:[%s7 + $0x38] sm:$0xf]
    %v2626 = vld [vmem:[%s7 + $0x3c] sm:$0xf]
    %v2627 = vld [vmem:[%s7 + $0x40] sm:$0xf]
    %v2628 = vld [vmem:[%s7 + $0x44] sm:$0xf]
    %v2629 = vld [vmem:[%s7 + $0x48] sm:$0xf]
    %v2630 = vld [vmem:[%s7 + $0x4c] sm:$0xf]
    %v2631 = vld [vmem:[%s7 + $0x50] sm:$0xf]
    %v2632 = vld [vmem:[%s7 + $0x54] sm:$0xf]
    %v2633 = vld [vmem:[%s7 + $0x58] sm:$0xf]
    %v2634 = vld [vmem:[%s7 + $0x5c] sm:$0xf]
    %v2635 = vld [vmem:[%s7 + $0x60] sm:$0xf]
    %v2636 = vld [vmem:[%s7 + $0x64] sm:$0xf]
    %v2637 = vld [vmem:[%s7 + $0x68] sm:$0xf]
    %v2638 = vld [vmem:[%s7 + $0x6c] sm:$0xf]
    %v2639 = vld [vmem:[%s7 + $0x70] sm:$0xf]
    %v2640 = vld [vmem:[%s7 + $0x74] sm:$0xf]
    %v2641 = vld [vmem:[%s7 + $0x78] sm:$0xf]
    %v2642 = vld [vmem:[%s7 + $0x7c] sm:$0xf]
    %v2643 = vld [vmem:[%s7 + $0x80] sm:$0xf]
    %v2644 = vld [vmem:[%s7 + $0x84] sm:$0xf]
    %v2645 = vld [vmem:[%s7 + $0x88] sm:$0xf]
    %v2646 = vld [vmem:[%s7 + $0x8c] sm:$0xf]
    %v2647 = vld [vmem:[%s7 + $0x90] sm:$0xf]
    %v2648 = vld [vmem:[%s7 + $0x94] sm:$0xf]
    %v2649 = vld [vmem:[%s7 + $0x98] sm:$0xf]
    %v2650 = vld [vmem:[%s7 + $0x9c] sm:$0xf]
    %v2651 = vld [vmem:[%s7 + $0xa0] sm:$0xf]
    %v2652 = vld [vmem:[%s7 + $0xa4] sm:$0xf]
    %v2653 = vld [vmem:[%s7 + $0xa8] sm:$0xf]
    %v2654 = vld [vmem:[%s7 + $0xac] sm:$0xf]
    %v2655 = vld [vmem:[%s7 + $0xb0] sm:$0xf]
    %v2656 = vld [vmem:[%s7 + $0xb4] sm:$0xf]
    %v2657 = vld [vmem:[%s7 + $0xb8] sm:$0xf]
    %v2658 = vld [vmem:[%s7 + $0xbc] sm:$0xf]
    %v2659 = vld [vmem:[%s7 + $0xc0] sm:$0xf]
    %v2660 = vld [vmem:[%s7 + $0xc4] sm:$0xf]
    %v2661 = vld [vmem:[%s7 + $0xc8] sm:$0xf]
    %v2662 = vld [vmem:[%s7 + $0xcc] sm:$0xf]
    %v2663 = vld [vmem:[%s7 + $0xd0] sm:$0xf]
    %v2664 = vld [vmem:[%s7 + $0xd4] sm:$0xf]
    %v2665 = vld [vmem:[%s7 + $0xd8] sm:$0xf]
    %v2666 = vld [vmem:[%s7 + $0xdc] sm:$0xf]
    %v2667 = vld [vmem:[%s7 + $0xe0] sm:$0xf]
    %v2668 = vld [vmem:[%s7 + $0xe4] sm:$0xf]
    %v2669 = vld [vmem:[%s7 + $0xe8] sm:$0xf]
    %v2670 = vld [vmem:[%s7 + $0xec] sm:$0xf]
    %v2671 = vld [vmem:[%s7 + $0xf0] sm:$0xf]
    %v2672 = vld [vmem:[%s7 + $0xf4] sm:$0xf]
    %v2673 = vld [vmem:[%s7 + $0xf8] sm:$0xf]
    %v2674 = vld [vmem:[%s7 + $0xfc] sm:$0xf]
    %v2675 = vld [vmem:[%s7 + $0x100] sm:$0xf]
    %v2676 = vld [vmem:[%s7 + $0x104] sm:$0xf]
    %v2677 = vld [vmem:[%s7 + $0x108] sm:$0xf]
    %v2678 = vld [vmem:[%s7 + $0x10c] sm:$0xf]
    %v2679 = vld [vmem:[%s7 + $0x110] sm:$0xf]
    %v2680 = vld [vmem:[%s7 + $0x114] sm:$0xf]
    %v2681 = vld [vmem:[%s7 + $0x118] sm:$0xf]
    %v2682 = vld [vmem:[%s7 + $0x11c] sm:$0xf]
    %v2683 = vld [vmem:[%s7 + $0x120] sm:$0xf]
    %v2684 = vld [vmem:[%s7 + $0x124] sm:$0xf]
    %v2685 = vld [vmem:[%s7 + $0x128] sm:$0xf]
    %v2686 = vld [vmem:[%s7 + $0x12c] sm:$0xf]
    %v2687 = vld [vmem:[%s7 + $0x130] sm:$0xf]
    %v2688 = vld [vmem:[%s7 + $0x134] sm:$0xf]
    %v2689 = vld [vmem:[%s7 + $0x138] sm:$0xf]
    %v2690 = vld [vmem:[%s7 + $0x13c] sm:$0xf]
    %v2691 = vld [vmem:[%s7 + $0x140] sm:$0xf]
    %v2692 = vld [vmem:[%s7 + $0x144] sm:$0xf]
    %v2693 = vld [vmem:[%s7 + $0x148] sm:$0xf]
    %v2694 = vld [vmem:[%s7 + $0x14c] sm:$0xf]
    %v2695 = vld [vmem:[%s7 + $0x150] sm:$0xf]
    %v2696 = vld [vmem:[%s7 + $0x154] sm:$0xf]
    %v2697 = vld [vmem:[%s7 + $0x158] sm:$0xf]
    %v2698 = vld [vmem:[%s7 + $0x15c] sm:$0xf]
    %v2699 = vld [vmem:[%s7 + $0x160] sm:$0xf]
    %v2700 = vld [vmem:[%s7 + $0x164] sm:$0xf]
    %v2701 = vld [vmem:[%s7 + $0x168] sm:$0xf]
    %v2702 = vld [vmem:[%s7 + $0x16c] sm:$0xf]
    %v2703 = vld [vmem:[%s7 + $0x170] sm:$0xf]
    %v2704 = vld [vmem:[%s7 + $0x174] sm:$0xf]
    %v2705 = vld [vmem:[%s7 + $0x178] sm:$0xf]
    %v2706 = vld [vmem:[%s7 + $0x17c] sm:$0xf]
    %v2707 = vld [vmem:[%s7 + $0x180] sm:$0xf]
    %v2708 = vld [vmem:[%s7 + $0x184] sm:$0xf]
    %v2709 = vld [vmem:[%s7 + $0x188] sm:$0xf]
    %v2710 = vld [vmem:[%s7 + $0x18c] sm:$0xf]
    %v2711 = vld [vmem:[%s7 + $0x190] sm:$0xf]
    %v2712 = vld [vmem:[%s7 + $0x194] sm:$0xf]
    %v2713 = vld [vmem:[%s7 + $0x198] sm:$0xf]
    %v2714 = vld [vmem:[%s7 + $0x19c] sm:$0xf]
    %v2715 = vld [vmem:[%s7 + $0x1a0] sm:$0xf]
    %v2716 = vld [vmem:[%s7 + $0x1a4] sm:$0xf]
    %v2717 = vld [vmem:[%s7 + $0x1a8] sm:$0xf]
    %v2718 = vld [vmem:[%s7 + $0x1ac] sm:$0xf]
    %v2719 = vld [vmem:[%s7 + $0x1b0] sm:$0xf]
    %v2720 = vld [vmem:[%s7 + $0x1b4] sm:$0xf]
    %v2721 = vld [vmem:[%s7 + $0x1b8] sm:$0xf]
    %v2722 = vld [vmem:[%s7 + $0x1bc] sm:$0xf]
    %v2723 = vld [vmem:[%s7 + $0x1c0] sm:$0xf]
    %v2724 = vld [vmem:[%s7 + $0x1c4] sm:$0xf]
    %v2725 = vld [vmem:[%s7 + $0x1c8] sm:$0xf]
    %v2726 = vld [vmem:[%s7 + $0x1cc] sm:$0xf]
    %v2727 = vld [vmem:[%s7 + $0x1d0] sm:$0xf]
    %v2728 = vld [vmem:[%s7 + $0x1d4] sm:$0xf]
    %v2729 = vld [vmem:[%s7 + $0x1d8] sm:$0xf]
    %v2730 = vld [vmem:[%s7 + $0x1dc] sm:$0xf]
    %v2731 = vld [vmem:[%s7 + $0x1e0] sm:$0xf]
    %v2732 = vld [vmem:[%s7 + $0x1e4] sm:$0xf]
    %v2733 = vld [vmem:[%s7 + $0x1e8] sm:$0xf]
    %v2734 = vld [vmem:[%s7 + $0x1ec] sm:$0xf]
    %v2735 = vld [vmem:[%s7 + $0x1f0] sm:$0xf]
    %v2736 = vld [vmem:[%s7 + $0x1f4] sm:$0xf]
    %v2737 = vld [vmem:[%s7 + $0x1f8] sm:$0xf]
    %v2738 = vld [vmem:[%s7 + $0x1fc] sm:$0xf]
    %v2739 = vld [vmem:[%s7 + $0x200] sm:$0xf]
    %v2740 = vld [vmem:[%s7 + $0x204] sm:$0xf]
    %v2741 = vld [vmem:[%s7 + $0x208] sm:$0xf]
    %v2742 = vld [vmem:[%s7 + $0x20c] sm:$0xf]
    %v2743 = vld [vmem:[%s7 + $0x210] sm:$0xf]
    %v2744 = vld [vmem:[%s7 + $0x214] sm:$0xf]
    %v2745 = vld [vmem:[%s7 + $0x218] sm:$0xf]
    %v2746 = vld [vmem:[%s7 + $0x21c] sm:$0xf]
    %v2747 = vld [vmem:[%s7 + $0x220] sm:$0xf]
    %v2748 = vld [vmem:[%s7 + $0x224] sm:$0xf]
    %v2749 = vld [vmem:[%s7 + $0x228] sm:$0xf]
    %v2750 = vld [vmem:[%s7 + $0x22c] sm:$0xf]
    %v2751 = vld [vmem:[%s7 + $0x230] sm:$0xf]
    %v2752 = vld [vmem:[%s7 + $0x234] sm:$0xf]
    %v2753 = vld [vmem:[%s7 + $0x238] sm:$0xf]
    %v2754 = vld [vmem:[%s7 + $0x23c] sm:$0xf]
    %v2755 = vld [vmem:[%s7 + $0x240] sm:$0xf]
    %v2756 = vld [vmem:[%s7 + $0x244] sm:$0xf]
    %v2757 = vld [vmem:[%s7 + $0x248] sm:$0xf]
    %v2758 = vld [vmem:[%s7 + $0x24c] sm:$0xf]
    %v2759 = vld [vmem:[%s7 + $0x250] sm:$0xf]
    %v2760 = vld [vmem:[%s7 + $0x254] sm:$0xf]
    %v2761 = vld [vmem:[%s7 + $0x258] sm:$0xf]
    %v2762 = vld [vmem:[%s7 + $0x25c] sm:$0xf]
    %v2763 = vld [vmem:[%s7 + $0x260] sm:$0xf]
    %v2764 = vld [vmem:[%s7 + $0x264] sm:$0xf]
    %v2765 = vld [vmem:[%s7 + $0x268] sm:$0xf]
    %v2766 = vld [vmem:[%s7 + $0x26c] sm:$0xf]
    %v2767 = vld [vmem:[%s7 + $0x270] sm:$0xf]
    %v2768 = vld [vmem:[%s7 + $0x274] sm:$0xf]
    %v2769 = vld [vmem:[%s7 + $0x278] sm:$0xf]
    %v2770 = vld [vmem:[%s7 + $0x27c] sm:$0xf]
    %v2771 = vld [vmem:[%s7 + $0x280] sm:$0xf]
    %v2772 = vld [vmem:[%s7 + $0x284] sm:$0xf]
    %v2773 = vld [vmem:[%s7 + $0x288] sm:$0xf]
    %v2774 = vld [vmem:[%s7 + $0x28c] sm:$0xf]
    %v2775 = vld [vmem:[%s7 + $0x290] sm:$0xf]
    %v2776 = vld [vmem:[%s7 + $0x294] sm:$0xf]
    %v2777 = vld [vmem:[%s7 + $0x298] sm:$0xf]
    %v2778 = vld [vmem:[%s7 + $0x29c] sm:$0xf]
    %v2779 = vld [vmem:[%s7 + $0x2a0] sm:$0xf]
    %v2780 = vld [vmem:[%s7 + $0x2a4] sm:$0xf]
    %v2781 = vld [vmem:[%s7 + $0x2a8] sm:$0xf]
    %v2782 = vld [vmem:[%s7 + $0x2ac] sm:$0xf]
    %v2783 = vld [vmem:[%s7 + $0x2b0] sm:$0xf]
    %v2784 = vld [vmem:[%s7 + $0x2b4] sm:$0xf]
    %v2785 = vld [vmem:[%s7 + $0x2b8] sm:$0xf]
    %v2786 = vld [vmem:[%s7 + $0x2bc] sm:$0xf]
    %v2787 = vld [vmem:[%s7 + $0x2c0] sm:$0xf]
    %v2788 = vld [vmem:[%s7 + $0x2c4] sm:$0xf]
    %v2789 = vld [vmem:[%s7 + $0x2c8] sm:$0xf]
    %v2790 = vld [vmem:[%s7 + $0x2cc] sm:$0xf]
    %v2791 = vld [vmem:[%s7 + $0x2d0] sm:$0xf]
    %v2792 = vld [vmem:[%s7 + $0x2d4] sm:$0xf]
    %v2793 = vld [vmem:[%s7 + $0x2d8] sm:$0xf]
    %v2794 = vld [vmem:[%s7 + $0x2dc] sm:$0xf]
    %v2795 = vld [vmem:[%s7 + $0x2e0] sm:$0xf]
    %v2796 = vld [vmem:[%s7 + $0x2e4] sm:$0xf]
    %v2797 = vld [vmem:[%s7 + $0x2e8] sm:$0xf]
    %v2798 = vld [vmem:[%s7 + $0x2ec] sm:$0xf]
    %v2799 = vld [vmem:[%s7 + $0x2f0] sm:$0xf]
    %v2800 = vld [vmem:[%s7 + $0x2f4] sm:$0xf]
    %v2801 = vld [vmem:[%s7 + $0x2f8] sm:$0xf]
    %v2802 = vld [vmem:[%s7 + $0x2fc] sm:$0xf]
    %v2803 = vld [vmem:[%s7 + $0x300] sm:$0xf]
    %v2804 = vld [vmem:[%s7 + $0x304] sm:$0xf]
    %v2805 = vld [vmem:[%s7 + $0x308] sm:$0xf]
    %v2806 = vld [vmem:[%s7 + $0x30c] sm:$0xf]
    %v2807 = vld [vmem:[%s7 + $0x310] sm:$0xf]
    %v2808 = vld [vmem:[%s7 + $0x314] sm:$0xf]
    %v2809 = vld [vmem:[%s7 + $0x318] sm:$0xf]
    %v2810 = vld [vmem:[%s7 + $0x31c] sm:$0xf]
    %v2811 = vld [vmem:[%s7 + $0x320] sm:$0xf]
    %v2812 = vld [vmem:[%s7 + $0x324] sm:$0xf]
    %v2813 = vld [vmem:[%s7 + $0x328] sm:$0xf]
    %v2814 = vld [vmem:[%s7 + $0x32c] sm:$0xf]
    %v2815 = vld [vmem:[%s7 + $0x330] sm:$0xf]
    %v2816 = vld [vmem:[%s7 + $0x334] sm:$0xf]
    %v2817 = vld [vmem:[%s7 + $0x338] sm:$0xf]
    %v2818 = vld [vmem:[%s7 + $0x33c] sm:$0xf]
    %v2819 = vld [vmem:[%s7 + $0x340] sm:$0xf]
    %v2820 = vld [vmem:[%s7 + $0x344] sm:$0xf]
    %v2821 = vld [vmem:[%s7 + $0x348] sm:$0xf]
    %v2822 = vld [vmem:[%s7 + $0x34c] sm:$0xf]
    %v2823 = vld [vmem:[%s7 + $0x350] sm:$0xf]
    %v2824 = vld [vmem:[%s7 + $0x354] sm:$0xf]
    %v2825 = vld [vmem:[%s7 + $0x358] sm:$0xf]
    %v2826 = vld [vmem:[%s7 + $0x35c] sm:$0xf]
    %v2827 = vld [vmem:[%s7 + $0x360] sm:$0xf]
    %v2828 = vld [vmem:[%s7 + $0x364] sm:$0xf]
    %v2829 = vld [vmem:[%s7 + $0x368] sm:$0xf]
    %v2830 = vld [vmem:[%s7 + $0x36c] sm:$0xf]
    %v2831 = vld [vmem:[%s7 + $0x370] sm:$0xf]
    %v2832 = vld [vmem:[%s7 + $0x374] sm:$0xf]
    %v2833 = vld [vmem:[%s7 + $0x378] sm:$0xf]
    %v2834 = vld [vmem:[%s7 + $0x37c] sm:$0xf]
    %v2835 = vld [vmem:[%s7 + $0x380] sm:$0xf]
    %v2836 = vld [vmem:[%s7 + $0x384] sm:$0xf]
    %v2837 = vld [vmem:[%s7 + $0x388] sm:$0xf]
    %v2838 = vld [vmem:[%s7 + $0x38c] sm:$0xf]
    %v2839 = vld [vmem:[%s7 + $0x390] sm:$0xf]
    %v2840 = vld [vmem:[%s7 + $0x394] sm:$0xf]
    %v2841 = vld [vmem:[%s7 + $0x398] sm:$0xf]
    %v2842 = vld [vmem:[%s7 + $0x39c] sm:$0xf]
    %v2843 = vld [vmem:[%s7 + $0x3a0] sm:$0xf]
    %v2844 = vld [vmem:[%s7 + $0x3a4] sm:$0xf]
    %v2845 = vld [vmem:[%s7 + $0x3a8] sm:$0xf]
    %v2846 = vld [vmem:[%s7 + $0x3ac] sm:$0xf]
    %v2847 = vld [vmem:[%s7 + $0x3b0] sm:$0xf]
    %v2848 = vld [vmem:[%s7 + $0x3b4] sm:$0xf]
    %v2849 = vld [vmem:[%s7 + $0x3b8] sm:$0xf]
    %v2850 = vld [vmem:[%s7 + $0x3bc] sm:$0xf]
    %v2851 = vld [vmem:[%s7 + $0x3c0] sm:$0xf]
    %v2852 = vld [vmem:[%s7 + $0x3c4] sm:$0xf]
    %v2853 = vld [vmem:[%s7 + $0x3c8] sm:$0xf]
    %v2854 = vld [vmem:[%s7 + $0x3cc] sm:$0xf]
    %v2855 = vld [vmem:[%s7 + $0x3d0] sm:$0xf]
    %v2856 = vld [vmem:[%s7 + $0x3d4] sm:$0xf]
    %v2857 = vld [vmem:[%s7 + $0x3d8] sm:$0xf]
    %v2858 = vld [vmem:[%s7 + $0x3dc] sm:$0xf]
    %v2859 = vld [vmem:[%s7 + $0x3e0] sm:$0xf]
    %v2860 = vld [vmem:[%s7 + $0x3e4] sm:$0xf]
    %v2861 = vld [vmem:[%s7 + $0x3e8] sm:$0xf]
    %v2862 = vld [vmem:[%s7 + $0x3ec] sm:$0xf]
    %v2863 = vld [vmem:[%s7 + $0x3f0] sm:$0xf]
    %v2864 = vld [vmem:[%s7 + $0x3f4] sm:$0xf]
    %v2865 = vld [vmem:[%s7 + $0x3f8] sm:$0xf]
    %v2866 = vld [vmem:[%s7 + $0x3fc] sm:$0xf]
    %v2867 = vld [vmem:[%s8] sm:$0x1]
    %v2869 = vlaneseq
    %v2870 = vshrl.u32 %v2869, 7
    %v2871 = vsub.s32 0, %v2870
    %v2872 = vrot.slane %v2867, %v2871
    %v3130 = vunpack.c.l.b16 %v2611
    %v3131 = vunpack.c.l.b16 %v2612
    %v3132 = vunpack.c.l.b16 %v2613
    %v3133 = vunpack.c.l.b16 %v2614
    %v3134 = vunpack.c.l.b16 %v2615
    %v3135 = vunpack.c.l.b16 %v2616
    %v3136 = vunpack.c.l.b16 %v2617
    %v3137 = vunpack.c.l.b16 %v2618
    %v3138 = vunpack.c.l.b16 %v2619
    %v3139 = vunpack.c.l.b16 %v2620
    %v3140 = vunpack.c.l.b16 %v2621
    %v3141 = vunpack.c.l.b16 %v2622
    %v3142 = vunpack.c.l.b16 %v2623
    %v3143 = vunpack.c.l.b16 %v2624
    %v3144 = vunpack.c.l.b16 %v2625
    %v3145 = vunpack.c.l.b16 %v2626
    %v3146 = vunpack.c.l.b16 %v2627
    %v3147 = vunpack.c.l.b16 %v2628
    %v3148 = vunpack.c.l.b16 %v2629
    %v3149 = vunpack.c.l.b16 %v2630
    %v3150 = vunpack.c.l.b16 %v2631
    %v3151 = vunpack.c.l.b16 %v2632
    %v3152 = vunpack.c.l.b16 %v2633
    %v3153 = vunpack.c.l.b16 %v2634
    %v3154 = vunpack.c.l.b16 %v2635
    %v3155 = vunpack.c.l.b16 %v2636
    %v3156 = vunpack.c.l.b16 %v2637
    %v3157 = vunpack.c.l.b16 %v2638
    %v3158 = vunpack.c.l.b16 %v2639
    %v3159 = vunpack.c.l.b16 %v2640
    %v3160 = vunpack.c.l.b16 %v2641
    %v3161 = vunpack.c.l.b16 %v2642
    %v3162 = vunpack.c.l.b16 %v2643
    %v3163 = vunpack.c.l.b16 %v2644
    %v3164 = vunpack.c.l.b16 %v2645
    %v3165 = vunpack.c.l.b16 %v2646
    %v3166 = vunpack.c.l.b16 %v2647
    %v3167 = vunpack.c.l.b16 %v2648
    %v3168 = vunpack.c.l.b16 %v2649
    %v3169 = vunpack.c.l.b16 %v2650
    %v3170 = vunpack.c.l.b16 %v2651
    %v3171 = vunpack.c.l.b16 %v2652
    %v3172 = vunpack.c.l.b16 %v2653
    %v3173 = vunpack.c.l.b16 %v2654
    %v3174 = vunpack.c.l.b16 %v2655
    %v3175 = vunpack.c.l.b16 %v2656
    %v3176 = vunpack.c.l.b16 %v2657
    %v3177 = vunpack.c.l.b16 %v2658
    %v3178 = vunpack.c.l.b16 %v2659
    %v3179 = vunpack.c.l.b16 %v2660
    %v3180 = vunpack.c.l.b16 %v2661
    %v3181 = vunpack.c.l.b16 %v2662
    %v3182 = vunpack.c.l.b16 %v2663
    %v3183 = vunpack.c.l.b16 %v2664
    %v3184 = vunpack.c.l.b16 %v2665
    %v3185 = vunpack.c.l.b16 %v2666
    %v3186 = vunpack.c.l.b16 %v2667
    %v3187 = vunpack.c.l.b16 %v2668
    %v3188 = vunpack.c.l.b16 %v2669
    %v3189 = vunpack.c.l.b16 %v2670
    %v3190 = vunpack.c.l.b16 %v2671
    %v3191 = vunpack.c.l.b16 %v2672
    %v3192 = vunpack.c.l.b16 %v2673
    %v3193 = vunpack.c.l.b16 %v2674
    %v3194 = vunpack.c.l.b16 %v2675
    %v3195 = vunpack.c.l.b16 %v2676
    %v3196 = vunpack.c.l.b16 %v2677
    %v3197 = vunpack.c.l.b16 %v2678
    %v3198 = vunpack.c.l.b16 %v2679
    %v3199 = vunpack.c.l.b16 %v2680
    %v3200 = vunpack.c.l.b16 %v2681
    %v3201 = vunpack.c.l.b16 %v2682
    %v3202 = vunpack.c.l.b16 %v2683
    %v3203 = vunpack.c.l.b16 %v2684
    %v3204 = vunpack.c.l.b16 %v2685
    %v3205 = vunpack.c.l.b16 %v2686
    %v3206 = vunpack.c.l.b16 %v2687
    %v3207 = vunpack.c.l.b16 %v2688
    %v3208 = vunpack.c.l.b16 %v2689
    %v3209 = vunpack.c.l.b16 %v2690
    %v3210 = vunpack.c.l.b16 %v2691
    %v3211 = vunpack.c.l.b16 %v2692
    %v3212 = vunpack.c.l.b16 %v2693
    %v3213 = vunpack.c.l.b16 %v2694
    %v3214 = vunpack.c.l.b16 %v2695
    %v3215 = vunpack.c.l.b16 %v2696
    %v3216 = vunpack.c.l.b16 %v2697
    %v3217 = vunpack.c.l.b16 %v2698
    %v3218 = vunpack.c.l.b16 %v2699
    %v3219 = vunpack.c.l.b16 %v2700
    %v3220 = vunpack.c.l.b16 %v2701
    %v3221 = vunpack.c.l.b16 %v2702
    %v3222 = vunpack.c.l.b16 %v2703
    %v3223 = vunpack.c.l.b16 %v2704
    %v3224 = vunpack.c.l.b16 %v2705
    %v3225 = vunpack.c.l.b16 %v2706
    %v3226 = vunpack.c.l.b16 %v2707
    %v3227 = vunpack.c.l.b16 %v2708
    %v3228 = vunpack.c.l.b16 %v2709
    %v3229 = vunpack.c.l.b16 %v2710
    %v3230 = vunpack.c.l.b16 %v2711
    %v3231 = vunpack.c.l.b16 %v2712
    %v3232 = vunpack.c.l.b16 %v2713
    %v3233 = vunpack.c.l.b16 %v2714
    %v3234 = vunpack.c.l.b16 %v2715
    %v3235 = vunpack.c.l.b16 %v2716
    %v3236 = vunpack.c.l.b16 %v2717
    %v3237 = vunpack.c.l.b16 %v2718
    %v3238 = vunpack.c.l.b16 %v2719
    %v3239 = vunpack.c.l.b16 %v2720
    %v3240 = vunpack.c.l.b16 %v2721
    %v3241 = vunpack.c.l.b16 %v2722
    %v3242 = vunpack.c.l.b16 %v2723
    %v3243 = vunpack.c.l.b16 %v2724
    %v3244 = vunpack.c.l.b16 %v2725
    %v3245 = vunpack.c.l.b16 %v2726
    %v3246 = vunpack.c.l.b16 %v2727
    %v3247 = vunpack.c.l.b16 %v2728
    %v3248 = vunpack.c.l.b16 %v2729
    %v3249 = vunpack.c.l.b16 %v2730
    %v3250 = vunpack.c.l.b16 %v2731
    %v3251 = vunpack.c.l.b16 %v2732
    %v3252 = vunpack.c.l.b16 %v2733
    %v3253 = vunpack.c.l.b16 %v2734
    %v3254 = vunpack.c.l.b16 %v2735
    %v3255 = vunpack.c.l.b16 %v2736
    %v3256 = vunpack.c.l.b16 %v2737
    %v3257 = vunpack.c.l.b16 %v2738
    %v3258 = vunpack.c.l.b16 %v2739
    %v3259 = vunpack.c.l.b16 %v2740
    %v3260 = vunpack.c.l.b16 %v2741
    %v3261 = vunpack.c.l.b16 %v2742
    %v3262 = vunpack.c.l.b16 %v2743
    %v3263 = vunpack.c.l.b16 %v2744
    %v3264 = vunpack.c.l.b16 %v2745
    %v3265 = vunpack.c.l.b16 %v2746
    %v3266 = vunpack.c.l.b16 %v2747
    %v3267 = vunpack.c.l.b16 %v2748
    %v3268 = vunpack.c.l.b16 %v2749
    %v3269 = vunpack.c.l.b16 %v2750
    %v3270 = vunpack.c.l.b16 %v2751
    %v3271 = vunpack.c.l.b16 %v2752
    %v3272 = vunpack.c.l.b16 %v2753
    %v3273 = vunpack.c.l.b16 %v2754
    %v3274 = vunpack.c.l.b16 %v2755
    %v3275 = vunpack.c.l.b16 %v2756
    %v3276 = vunpack.c.l.b16 %v2757
    %v3277 = vunpack.c.l.b16 %v2758
    %v3278 = vunpack.c.l.b16 %v2759
    %v3279 = vunpack.c.l.b16 %v2760
    %v3280 = vunpack.c.l.b16 %v2761
    %v3281 = vunpack.c.l.b16 %v2762
    %v3282 = vunpack.c.l.b16 %v2763
    %v3283 = vunpack.c.l.b16 %v2764
    %v3284 = vunpack.c.l.b16 %v2765
    %v3285 = vunpack.c.l.b16 %v2766
    %v3286 = vunpack.c.l.b16 %v2767
    %v3287 = vunpack.c.l.b16 %v2768
    %v3288 = vunpack.c.l.b16 %v2769
    %v3289 = vunpack.c.l.b16 %v2770
    %v3290 = vunpack.c.l.b16 %v2771
    %v3291 = vunpack.c.l.b16 %v2772
    %v3292 = vunpack.c.l.b16 %v2773
    %v3293 = vunpack.c.l.b16 %v2774
    %v3294 = vunpack.c.l.b16 %v2775
    %v3295 = vunpack.c.l.b16 %v2776
    %v3296 = vunpack.c.l.b16 %v2777
    %v3297 = vunpack.c.l.b16 %v2778
    %v3298 = vunpack.c.l.b16 %v2779
    %v3299 = vunpack.c.l.b16 %v2780
    %v3300 = vunpack.c.l.b16 %v2781
    %v3301 = vunpack.c.l.b16 %v2782
    %v3302 = vunpack.c.l.b16 %v2783
    %v3303 = vunpack.c.l.b16 %v2784
    %v3304 = vunpack.c.l.b16 %v2785
    %v3305 = vunpack.c.l.b16 %v2786
    %v3306 = vunpack.c.l.b16 %v2787
    %v3307 = vunpack.c.l.b16 %v2788
    %v3308 = vunpack.c.l.b16 %v2789
    %v3309 = vunpack.c.l.b16 %v2790
    %v3310 = vunpack.c.l.b16 %v2791
    %v3311 = vunpack.c.l.b16 %v2792
    %v3312 = vunpack.c.l.b16 %v2793
    %v3313 = vunpack.c.l.b16 %v2794
    %v3314 = vunpack.c.l.b16 %v2795
    %v3315 = vunpack.c.l.b16 %v2796
    %v3316 = vunpack.c.l.b16 %v2797
    %v3317 = vunpack.c.l.b16 %v2798
    %v3318 = vunpack.c.l.b16 %v2799
    %v3319 = vunpack.c.l.b16 %v2800
    %v3320 = vunpack.c.l.b16 %v2801
    %v3321 = vunpack.c.l.b16 %v2802
    %v3322 = vunpack.c.l.b16 %v2803
    %v3323 = vunpack.c.l.b16 %v2804
    %v3324 = vunpack.c.l.b16 %v2805
    %v3325 = vunpack.c.l.b16 %v2806
    %v3326 = vunpack.c.l.b16 %v2807
    %v3327 = vunpack.c.l.b16 %v2808
    %v3328 = vunpack.c.l.b16 %v2809
    %v3329 = vunpack.c.l.b16 %v2810
    %v3330 = vunpack.c.l.b16 %v2811
    %v3331 = vunpack.c.l.b16 %v2812
    %v3332 = vunpack.c.l.b16 %v2813
    %v3333 = vunpack.c.l.b16 %v2814
    %v3334 = vunpack.c.l.b16 %v2815
    %v3335 = vunpack.c.l.b16 %v2816
    %v3336 = vunpack.c.l.b16 %v2817
    %v3337 = vunpack.c.l.b16 %v2818
    %v3338 = vunpack.c.l.b16 %v2819
    %v3339 = vunpack.c.l.b16 %v2820
    %v3340 = vunpack.c.l.b16 %v2821
    %v3341 = vunpack.c.l.b16 %v2822
    %v3342 = vunpack.c.l.b16 %v2823
    %v3343 = vunpack.c.l.b16 %v2824
    %v3344 = vunpack.c.l.b16 %v2825
    %v3345 = vunpack.c.l.b16 %v2826
    %v3346 = vunpack.c.l.b16 %v2827
    %v3347 = vunpack.c.l.b16 %v2828
    %v3348 = vunpack.c.l.b16 %v2829
    %v3349 = vunpack.c.l.b16 %v2830
    %v3350 = vunpack.c.l.b16 %v2831
    %v3351 = vunpack.c.l.b16 %v2832
    %v3352 = vunpack.c.l.b16 %v2833
    %v3353 = vunpack.c.l.b16 %v2834
    %v3354 = vunpack.c.l.b16 %v2835
    %v3355 = vunpack.c.l.b16 %v2836
    %v3356 = vunpack.c.l.b16 %v2837
    %v3357 = vunpack.c.l.b16 %v2838
    %v3358 = vunpack.c.l.b16 %v2839
    %v3359 = vunpack.c.l.b16 %v2840
    %v3360 = vunpack.c.l.b16 %v2841
    %v3361 = vunpack.c.l.b16 %v2842
    %v3362 = vunpack.c.l.b16 %v2843
    %v3363 = vunpack.c.l.b16 %v2844
    %v3364 = vunpack.c.l.b16 %v2845
    %v3365 = vunpack.c.l.b16 %v2846
    %v3366 = vunpack.c.l.b16 %v2847
    %v3367 = vunpack.c.l.b16 %v2848
    %v3368 = vunpack.c.l.b16 %v2849
    %v3369 = vunpack.c.l.b16 %v2850
    %v3370 = vunpack.c.l.b16 %v2851
    %v3371 = vunpack.c.l.b16 %v2852
    %v3372 = vunpack.c.l.b16 %v2853
    %v3373 = vunpack.c.l.b16 %v2854
    %v3374 = vunpack.c.l.b16 %v2855
    %v3375 = vunpack.c.l.b16 %v2856
    %v3376 = vunpack.c.l.b16 %v2857
    %v3377 = vunpack.c.l.b16 %v2858
    %v3378 = vunpack.c.l.b16 %v2859
    %v3379 = vunpack.c.l.b16 %v2860
    %v3380 = vunpack.c.l.b16 %v2861
    %v3381 = vunpack.c.l.b16 %v2862
    %v3382 = vunpack.c.l.b16 %v2863
    %v3383 = vunpack.c.l.b16 %v2864
    %v3384 = vunpack.c.l.b16 %v2865
    %v3385 = vunpack.c.l.b16 %v2866
    %v3386 = vpack.c.b16 %v3131, %v3130
    %v3387 = vpack.c.b16 %v3133, %v3132
    %v3388 = vpack.c.b16 %v3135, %v3134
    %v3389 = vpack.c.b16 %v3137, %v3136
    %v3390 = vpack.c.b16 %v3139, %v3138
    %v3391 = vpack.c.b16 %v3141, %v3140
    %v3392 = vpack.c.b16 %v3143, %v3142
    %v3393 = vpack.c.b16 %v3145, %v3144
    %v3394 = vpack.c.b16 %v3147, %v3146
    %v3395 = vpack.c.b16 %v3149, %v3148
    %v3396 = vpack.c.b16 %v3151, %v3150
    %v3397 = vpack.c.b16 %v3153, %v3152
    %v3398 = vpack.c.b16 %v3155, %v3154
    %v3399 = vpack.c.b16 %v3157, %v3156
    %v3400 = vpack.c.b16 %v3159, %v3158
    %v3401 = vpack.c.b16 %v3161, %v3160
    %v3402 = vpack.c.b16 %v3163, %v3162
    %v3403 = vpack.c.b16 %v3165, %v3164
    %v3404 = vpack.c.b16 %v3167, %v3166
    %v3405 = vpack.c.b16 %v3169, %v3168
    %v3406 = vpack.c.b16 %v3171, %v3170
    %v3407 = vpack.c.b16 %v3173, %v3172
    %v3408 = vpack.c.b16 %v3175, %v3174
    %v3409 = vpack.c.b16 %v3177, %v3176
    %v3410 = vpack.c.b16 %v3179, %v3178
    %v3411 = vpack.c.b16 %v3181, %v3180
    %v3412 = vpack.c.b16 %v3183, %v3182
    %v3413 = vpack.c.b16 %v3185, %v3184
    %v3414 = vpack.c.b16 %v3187, %v3186
    %v3415 = vpack.c.b16 %v3189, %v3188
    %v3416 = vpack.c.b16 %v3191, %v3190
    %v3417 = vpack.c.b16 %v3193, %v3192
    %v3418 = vpack.c.b16 %v3195, %v3194
    %v3419 = vpack.c.b16 %v3197, %v3196
    %v3420 = vpack.c.b16 %v3199, %v3198
    %v3421 = vpack.c.b16 %v3201, %v3200
    %v3422 = vpack.c.b16 %v3203, %v3202
    %v3423 = vpack.c.b16 %v3205, %v3204
    %v3424 = vpack.c.b16 %v3207, %v3206
    %v3425 = vpack.c.b16 %v3209, %v3208
    %v3426 = vpack.c.b16 %v3211, %v3210
    %v3427 = vpack.c.b16 %v3213, %v3212
    %v3428 = vpack.c.b16 %v3215, %v3214
    %v3429 = vpack.c.b16 %v3217, %v3216
    %v3430 = vpack.c.b16 %v3219, %v3218
    %v3431 = vpack.c.b16 %v3221, %v3220
    %v3432 = vpack.c.b16 %v3223, %v3222
    %v3433 = vpack.c.b16 %v3225, %v3224
    %v3434 = vpack.c.b16 %v3227, %v3226
    %v3435 = vpack.c.b16 %v3229, %v3228
    %v3436 = vpack.c.b16 %v3231, %v3230
    %v3437 = vpack.c.b16 %v3233, %v3232
    %v3438 = vpack.c.b16 %v3235, %v3234
    %v3439 = vpack.c.b16 %v3237, %v3236
    %v3440 = vpack.c.b16 %v3239, %v3238
    %v3441 = vpack.c.b16 %v3241, %v3240
    %v3442 = vpack.c.b16 %v3243, %v3242
    %v3443 = vpack.c.b16 %v3245, %v3244
    %v3444 = vpack.c.b16 %v3247, %v3246
    %v3445 = vpack.c.b16 %v3249, %v3248
    %v3446 = vpack.c.b16 %v3251, %v3250
    %v3447 = vpack.c.b16 %v3253, %v3252
    %v3448 = vpack.c.b16 %v3255, %v3254
    %v3449 = vpack.c.b16 %v3257, %v3256
    %v3450 = vpack.c.b16 %v3259, %v3258
    %v3451 = vpack.c.b16 %v3261, %v3260
    %v3452 = vpack.c.b16 %v3263, %v3262
    %v3453 = vpack.c.b16 %v3265, %v3264
    %v3454 = vpack.c.b16 %v3267, %v3266
    %v3455 = vpack.c.b16 %v3269, %v3268
    %v3456 = vpack.c.b16 %v3271, %v3270
    %v3457 = vpack.c.b16 %v3273, %v3272
    %v3458 = vpack.c.b16 %v3275, %v3274
    %v3459 = vpack.c.b16 %v3277, %v3276
    %v3460 = vpack.c.b16 %v3279, %v3278
    %v3461 = vpack.c.b16 %v3281, %v3280
    %v3462 = vpack.c.b16 %v3283, %v3282
    %v3463 = vpack.c.b16 %v3285, %v3284
    %v3464 = vpack.c.b16 %v3287, %v3286
    %v3465 = vpack.c.b16 %v3289, %v3288
    %v3466 = vpack.c.b16 %v3291, %v3290
    %v3467 = vpack.c.b16 %v3293, %v3292
    %v3468 = vpack.c.b16 %v3295, %v3294
    %v3469 = vpack.c.b16 %v3297, %v3296
    %v3470 = vpack.c.b16 %v3299, %v3298
    %v3471 = vpack.c.b16 %v3301, %v3300
    %v3472 = vpack.c.b16 %v3303, %v3302
    %v3473 = vpack.c.b16 %v3305, %v3304
    %v3474 = vpack.c.b16 %v3307, %v3306
    %v3475 = vpack.c.b16 %v3309, %v3308
    %v3476 = vpack.c.b16 %v3311, %v3310
    %v3477 = vpack.c.b16 %v3313, %v3312
    %v3478 = vpack.c.b16 %v3315, %v3314
    %v3479 = vpack.c.b16 %v3317, %v3316
    %v3480 = vpack.c.b16 %v3319, %v3318
    %v3481 = vpack.c.b16 %v3321, %v3320
    %v3482 = vpack.c.b16 %v3323, %v3322
    %v3483 = vpack.c.b16 %v3325, %v3324
    %v3484 = vpack.c.b16 %v3327, %v3326
    %v3485 = vpack.c.b16 %v3329, %v3328
    %v3486 = vpack.c.b16 %v3331, %v3330
    %v3487 = vpack.c.b16 %v3333, %v3332
    %v3488 = vpack.c.b16 %v3335, %v3334
    %v3489 = vpack.c.b16 %v3337, %v3336
    %v3490 = vpack.c.b16 %v3339, %v3338
    %v3491 = vpack.c.b16 %v3341, %v3340
    %v3492 = vpack.c.b16 %v3343, %v3342
    %v3493 = vpack.c.b16 %v3345, %v3344
    %v3494 = vpack.c.b16 %v3347, %v3346
    %v3495 = vpack.c.b16 %v3349, %v3348
    %v3496 = vpack.c.b16 %v3351, %v3350
    %v3497 = vpack.c.b16 %v3353, %v3352
    %v3498 = vpack.c.b16 %v3355, %v3354
    %v3499 = vpack.c.b16 %v3357, %v3356
    %v3500 = vpack.c.b16 %v3359, %v3358
    %v3501 = vpack.c.b16 %v3361, %v3360
    %v3502 = vpack.c.b16 %v3363, %v3362
    %v3503 = vpack.c.b16 %v3365, %v3364
    %v3504 = vpack.c.b16 %v3367, %v3366
    %v3505 = vpack.c.b16 %v3369, %v3368
    %v3506 = vpack.c.b16 %v3371, %v3370
    %v3507 = vpack.c.b16 %v3373, %v3372
    %v3508 = vpack.c.b16 %v3375, %v3374
    %v3509 = vpack.c.b16 %v3377, %v3376
    %v3510 = vpack.c.b16 %v3379, %v3378
    %v3511 = vpack.c.b16 %v3381, %v3380
    %v3512 = vpack.c.b16 %v3383, %v3382
    %v3513 = vpack.c.b16 %v3385, %v3384
    %3642 = vmatprep.subr.bf16.mxu0 0
    %3643 = vmatpush1.bf16.msra.mxu0 %v3386
    %3644 = vmatprep.subr.bf16.mxu0 0
    %3645 = vmatpush1.bf16.msra.mxu0 %v3387
    %3646 = vmatprep.subr.bf16.mxu0 0
    %3647 = vmatpush1.bf16.msra.mxu0 %v3388
    %3648 = vmatprep.subr.bf16.mxu0 0
    %3649 = vmatpush1.bf16.msra.mxu0 %v3389
    %3650 = vmatprep.subr.bf16.mxu0 0
    %3651 = vmatpush1.bf16.msra.mxu0 %v3390
    %3652 = vmatprep.subr.bf16.mxu0 0
    %3653 = vmatpush1.bf16.msra.mxu0 %v3391
    %3654 = vmatprep.subr.bf16.mxu0 0
    %3655 = vmatpush1.bf16.msra.mxu0 %v3392
    %3656 = vmatprep.subr.bf16.mxu0 0
    %3657 = vmatpush1.bf16.msra.mxu0 %v3393
    %3658 = vmatprep.subr.bf16.mxu0 0
    %3659 = vmatpush1.bf16.msra.mxu0 %v3394
    %3660 = vmatprep.subr.bf16.mxu0 0
    %3661 = vmatpush1.bf16.msra.mxu0 %v3395
    %3662 = vmatprep.subr.bf16.mxu0 0
    %3663 = vmatpush1.bf16.msra.mxu0 %v3396
    %3664 = vmatprep.subr.bf16.mxu0 0
    %3665 = vmatpush1.bf16.msra.mxu0 %v3397
    %3666 = vmatprep.subr.bf16.mxu0 0
    %3667 = vmatpush1.bf16.msra.mxu0 %v3398
    %3668 = vmatprep.subr.bf16.mxu0 0
    %3669 = vmatpush1.bf16.msra.mxu0 %v3399
    %3670 = vmatprep.subr.bf16.mxu0 0
    %3671 = vmatpush1.bf16.msra.mxu0 %v3400
    %3672 = vmatprep.subr.bf16.mxu0 0
    %3673 = vmatpush1.bf16.msra.mxu0 %v3401
    %3674 = vmatprep.mubr.bf16.mxu0 %v2596
    %3675 = vmatmul.mubr.bf16.gmra.mrb[0].mxu0 %v2595
    %v3676 = vpop.f32.mrb[0].mxu0
    %v3677 = vadd.f32 %v2872, %v3676
    %v3678 = vpop.f32.mrb[0].mxu0
    %v3679 = vpop.f32.mrb[0].mxu0
    %v3680 = vpop.f32.mrb[0].mxu0
    %3681 = vdwg.mxu0
    %3682 = vmatprep.subr.bf16.mxu0 0
    %3683 = vmatpush1.bf16.msra.mxu0 %v3402
    %3684 = vmatprep.subr.bf16.mxu0 0
    %3685 = vmatpush1.bf16.msra.mxu0 %v3403
    %3686 = vmatprep.subr.bf16.mxu0 0
    %3687 = vmatpush1.bf16.msra.mxu0 %v3404
    %3688 = vmatprep.subr.bf16.mxu0 0
    %3689 = vmatpush1.bf16.msra.mxu0 %v3405
    %3690 = vmatprep.subr.bf16.mxu0 0
    %3691 = vmatpush1.bf16.msra.mxu0 %v3406
    %3692 = vmatprep.subr.bf16.mxu0 0
    %3693 = vmatpush1.bf16.msra.mxu0 %v3407
    %3694 = vmatprep.subr.bf16.mxu0 0
    %3695 = vmatpush1.bf16.msra.mxu0 %v3408
    %3696 = vmatprep.subr.bf16.mxu0 0
    %3697 = vmatpush1.bf16.msra.mxu0 %v3409
    %3698 = vmatprep.subr.bf16.mxu0 0
    %3699 = vmatpush1.bf16.msra.mxu0 %v3410
    %3700 = vmatprep.subr.bf16.mxu0 0
    %3701 = vmatpush1.bf16.msra.mxu0 %v3411
    %3702 = vmatprep.subr.bf16.mxu0 0
    %3703 = vmatpush1.bf16.msra.mxu0 %v3412
    %3704 = vmatprep.subr.bf16.mxu0 0
    %3705 = vmatpush1.bf16.msra.mxu0 %v3413
    %3706 = vmatprep.subr.bf16.mxu0 0
    %3707 = vmatpush1.bf16.msra.mxu0 %v3414
    %3708 = vmatprep.subr.bf16.mxu0 0
    %3709 = vmatpush1.bf16.msra.mxu0 %v3415
    %3710 = vmatprep.subr.bf16.mxu0 0
    %3711 = vmatpush1.bf16.msra.mxu0 %v3416
    %3712 = vmatprep.subr.bf16.mxu0 0
    %3713 = vmatpush1.bf16.msra.mxu0 %v3417
    %3714 = vmatprep.mubr.bf16.mxu0 %v2598
    %3715 = vmatmul.mubr.bf16.gmra.mrb[0].mxu0 %v2597
    %v3716 = vpop.f32.mrb[0].mxu0
    %v3717 = vadd.f32 %v3677, %v3716
    %v3718 = vpop.f32.mrb[0].mxu0
    %v3719 = vpop.f32.mrb[0].mxu0
    %v3720 = vpop.f32.mrb[0].mxu0
    %3721 = vdwg.mxu0
    %3722 = vmatprep.subr.bf16.mxu0 0
    %3723 = vmatpush1.bf16.msra.mxu0 %v3418
    %3724 = vmatprep.subr.bf16.mxu0 0
    %3725 = vmatpush1.bf16.msra.mxu0 %v3419
    %3726 = vmatprep.subr.bf16.mxu0 0
    %3727 = vmatpush1.bf16.msra.mxu0 %v3420
    %3728 = vmatprep.subr.bf16.mxu0 0
    %3729 = vmatpush1.bf16.msra.mxu0 %v3421
    %3730 = vmatprep.subr.bf16.mxu0 0
    %3731 = vmatpush1.bf16.msra.mxu0 %v3422
    %3732 = vmatprep.subr.bf16.mxu0 0
    %3733 = vmatpush1.bf16.msra.mxu0 %v3423
    %3734 = vmatprep.subr.bf16.mxu0 0
    %3735 = vmatpush1.bf16.msra.mxu0 %v3424
    %3736 = vmatprep.subr.bf16.mxu0 0
    %3737 = vmatpush1.bf16.msra.mxu0 %v3425
    %3738 = vmatprep.subr.bf16.mxu0 0
    %3739 = vmatpush1.bf16.msra.mxu0 %v3426
    %3740 = vmatprep.subr.bf16.mxu0 0
    %3741 = vmatpush1.bf16.msra.mxu0 %v3427
    %3742 = vmatprep.subr.bf16.mxu0 0
    %3743 = vmatpush1.bf16.msra.mxu0 %v3428
    %3744 = vmatprep.subr.bf16.mxu0 0
    %3745 = vmatpush1.bf16.msra.mxu0 %v3429
    %3746 = vmatprep.subr.bf16.mxu0 0
    %3747 = vmatpush1.bf16.msra.mxu0 %v3430
    %3748 = vmatprep.subr.bf16.mxu0 0
    %3749 = vmatpush1.bf16.msra.mxu0 %v3431
    %3750 = vmatprep.subr.bf16.mxu0 0
    %3751 = vmatpush1.bf16.msra.mxu0 %v3432
    %3752 = vmatprep.subr.bf16.mxu0 0
    %3753 = vmatpush1.bf16.msra.mxu0 %v3433
    %3754 = vmatprep.mubr.bf16.mxu0 %v2600
    %3755 = vmatmul.mubr.bf16.gmra.mrb[0].mxu0 %v2599
    %v3756 = vpop.f32.mrb[0].mxu0
    %v3757 = vadd.f32 %v3717, %v3756
    %v3758 = vpop.f32.mrb[0].mxu0
    %v3759 = vpop.f32.mrb[0].mxu0
    %v3760 = vpop.f32.mrb[0].mxu0
    %3761 = vdwg.mxu0
    %3762 = vmatprep.subr.bf16.mxu0 0
    %3763 = vmatpush1.bf16.msra.mxu0 %v3434
    %3764 = vmatprep.subr.bf16.mxu0 0
    %3765 = vmatpush1.bf16.msra.mxu0 %v3435
    %3766 = vmatprep.subr.bf16.mxu0 0
    %3767 = vmatpush1.bf16.msra.mxu0 %v3436
    %3768 = vmatprep.subr.bf16.mxu0 0
    %3769 = vmatpush1.bf16.msra.mxu0 %v3437
    %3770 = vmatprep.subr.bf16.mxu0 0
    %3771 = vmatpush1.bf16.msra.mxu0 %v3438
    %3772 = vmatprep.subr.bf16.mxu0 0
    %3773 = vmatpush1.bf16.msra.mxu0 %v3439
    %3774 = vmatprep.subr.bf16.mxu0 0
    %3775 = vmatpush1.bf16.msra.mxu0 %v3440
    %3776 = vmatprep.subr.bf16.mxu0 0
    %3777 = vmatpush1.bf16.msra.mxu0 %v3441
    %3778 = vmatprep.subr.bf16.mxu0 0
    %3779 = vmatpush1.bf16.msra.mxu0 %v3442
    %3780 = vmatprep.subr.bf16.mxu0 0
    %3781 = vmatpush1.bf16.msra.mxu0 %v3443
    %3782 = vmatprep.subr.bf16.mxu0 0
    %3783 = vmatpush1.bf16.msra.mxu0 %v3444
    %3784 = vmatprep.subr.bf16.mxu0 0
    %3785 = vmatpush1.bf16.msra.mxu0 %v3445
    %3786 = vmatprep.subr.bf16.mxu0 0
    %3787 = vmatpush1.bf16.msra.mxu0 %v3446
    %3788 = vmatprep.subr.bf16.mxu0 0
    %3789 = vmatpush1.bf16.msra.mxu0 %v3447
    %3790 = vmatprep.subr.bf16.mxu0 0
    %3791 = vmatpush1.bf16.msra.mxu0 %v3448
    %3792 = vmatprep.subr.bf16.mxu0 0
    %3793 = vmatpush1.bf16.msra.mxu0 %v3449
    %3794 = vmatprep.mubr.bf16.mxu0 %v2602
    %3795 = vmatmul.mubr.bf16.gmra.mrb[0].mxu0 %v2601
    %v3796 = vpop.f32.mrb[0].mxu0
    %v3797 = vadd.f32 %v3757, %v3796
    %v3798 = vpop.f32.mrb[0].mxu0
    %v3799 = vpop.f32.mrb[0].mxu0
    %v3800 = vpop.f32.mrb[0].mxu0
    %3801 = vdwg.mxu0
    %3802 = vmatprep.subr.bf16.mxu0 0
    %3803 = vmatpush1.bf16.msra.mxu0 %v3450
    %3804 = vmatprep.subr.bf16.mxu0 0
    %3805 = vmatpush1.bf16.msra.mxu0 %v3451
    %3806 = vmatprep.subr.bf16.mxu0 0
    %3807 = vmatpush1.bf16.msra.mxu0 %v3452
    %3808 = vmatprep.subr.bf16.mxu0 0
    %3809 = vmatpush1.bf16.msra.mxu0 %v3453
    %3810 = vmatprep.subr.bf16.mxu0 0
    %3811 = vmatpush1.bf16.msra.mxu0 %v3454
    %3812 = vmatprep.subr.bf16.mxu0 0
    %3813 = vmatpush1.bf16.msra.mxu0 %v3455
    %3814 = vmatprep.subr.bf16.mxu0 0
    %3815 = vmatpush1.bf16.msra.mxu0 %v3456
    %3816 = vmatprep.subr.bf16.mxu0 0
    %3817 = vmatpush1.bf16.msra.mxu0 %v3457
    %3818 = vmatprep.subr.bf16.mxu0 0
    %3819 = vmatpush1.bf16.msra.mxu0 %v3458
    %3820 = vmatprep.subr.bf16.mxu0 0
    %3821 = vmatpush1.bf16.msra.mxu0 %v3459
    %3822 = vmatprep.subr.bf16.mxu0 0
    %3823 = vmatpush1.bf16.msra.mxu0 %v3460
    %3824 = vmatprep.subr.bf16.mxu0 0
    %3825 = vmatpush1.bf16.msra.mxu0 %v3461
    %3826 = vmatprep.subr.bf16.mxu0 0
    %3827 = vmatpush1.bf16.msra.mxu0 %v3462
    %3828 = vmatprep.subr.bf16.mxu0 0
    %3829 = vmatpush1.bf16.msra.mxu0 %v3463
    %3830 = vmatprep.subr.bf16.mxu0 0
    %3831 = vmatpush1.bf16.msra.mxu0 %v3464
    %3832 = vmatprep.subr.bf16.mxu0 0
    %3833 = vmatpush1.bf16.msra.mxu0 %v3465
    %3834 = vmatprep.mubr.bf16.mxu0 %v2604
    %3835 = vmatmul.mubr.bf16.gmra.mrb[0].mxu0 %v2603
    %v3836 = vpop.f32.mrb[0].mxu0
    %v3837 = vadd.f32 %v3797, %v3836
    %v3838 = vpop.f32.mrb[0].mxu0
    %v3839 = vpop.f32.mrb[0].mxu0
    %v3840 = vpop.f32.mrb[0].mxu0
    %3841 = vdwg.mxu0
    %3842 = vmatprep.subr.bf16.mxu0 0
    %3843 = vmatpush1.bf16.msra.mxu0 %v3466
    %3844 = vmatprep.subr.bf16.mxu0 0
    %3845 = vmatpush1.bf16.msra.mxu0 %v3467
    %3846 = vmatprep.subr.bf16.mxu0 0
    %3847 = vmatpush1.bf16.msra.mxu0 %v3468
    %3848 = vmatprep.subr.bf16.mxu0 0
    %3849 = vmatpush1.bf16.msra.mxu0 %v3469
    %3850 = vmatprep.subr.bf16.mxu0 0
    %3851 = vmatpush1.bf16.msra.mxu0 %v3470
    %3852 = vmatprep.subr.bf16.mxu0 0
    %3853 = vmatpush1.bf16.msra.mxu0 %v3471
    %3854 = vmatprep.subr.bf16.mxu0 0
    %3855 = vmatpush1.bf16.msra.mxu0 %v3472
    %3856 = vmatprep.subr.bf16.mxu0 0
    %3857 = vmatpush1.bf16.msra.mxu0 %v3473
    %3858 = vmatprep.subr.bf16.mxu0 0
    %3859 = vmatpush1.bf16.msra.mxu0 %v3474
    %3860 = vmatprep.subr.bf16.mxu0 0
    %3861 = vmatpush1.bf16.msra.mxu0 %v3475
    %3862 = vmatprep.subr.bf16.mxu0 0
    %3863 = vmatpush1.bf16.msra.mxu0 %v3476
    %3864 = vmatprep.subr.bf16.mxu0 0
    %3865 = vmatpush1.bf16.msra.mxu0 %v3477
    %3866 = vmatprep.subr.bf16.mxu0 0
    %3867 = vmatpush1.bf16.msra.mxu0 %v3478
    %3868 = vmatprep.subr.bf16.mxu0 0
    %3869 = vmatpush1.bf16.msra.mxu0 %v3479
    %3870 = vmatprep.subr.bf16.mxu0 0
    %3871 = vmatpush1.bf16.msra.mxu0 %v3480
    %3872 = vmatprep.subr.bf16.mxu0 0
    %3873 = vmatpush1.bf16.msra.mxu0 %v3481
    %3874 = vmatprep.mubr.bf16.mxu0 %v2606
    %3875 = vmatmul.mubr.bf16.gmra.mrb[0].mxu0 %v2605
    %v3876 = vpop.f32.mrb[0].mxu0
    %v3877 = vadd.f32 %v3837, %v3876
    %v3878 = vpop.f32.mrb[0].mxu0
    %v3879 = vpop.f32.mrb[0].mxu0
    %v3880 = vpop.f32.mrb[0].mxu0
    %3881 = vdwg.mxu0
    %3882 = vmatprep.subr.bf16.mxu0 0
    %3883 = vmatpush1.bf16.msra.mxu0 %v3482
    %3884 = vmatprep.subr.bf16.mxu0 0
    %3885 = vmatpush1.bf16.msra.mxu0 %v3483
    %3886 = vmatprep.subr.bf16.mxu0 0
    %3887 = vmatpush1.bf16.msra.mxu0 %v3484
    %3888 = vmatprep.subr.bf16.mxu0 0
    %3889 = vmatpush1.bf16.msra.mxu0 %v3485
    %3890 = vmatprep.subr.bf16.mxu0 0
    %3891 = vmatpush1.bf16.msra.mxu0 %v3486
    %3892 = vmatprep.subr.bf16.mxu0 0
    %3893 = vmatpush1.bf16.msra.mxu0 %v3487
    %3894 = vmatprep.subr.bf16.mxu0 0
    %3895 = vmatpush1.bf16.msra.mxu0 %v3488
    %3896 = vmatprep.subr.bf16.mxu0 0
    %3897 = vmatpush1.bf16.msra.mxu0 %v3489
    %3898 = vmatprep.subr.bf16.mxu0 0
    %3899 = vmatpush1.bf16.msra.mxu0 %v3490
    %3900 = vmatprep.subr.bf16.mxu0 0
    %3901 = vmatpush1.bf16.msra.mxu0 %v3491
    %3902 = vmatprep.subr.bf16.mxu0 0
    %3903 = vmatpush1.bf16.msra.mxu0 %v3492
    %3904 = vmatprep.subr.bf16.mxu0 0
    %3905 = vmatpush1.bf16.msra.mxu0 %v3493
    %3906 = vmatprep.subr.bf16.mxu0 0
    %3907 = vmatpush1.bf16.msra.mxu0 %v3494
    %3908 = vmatprep.subr.bf16.mxu0 0
    %3909 = vmatpush1.bf16.msra.mxu0 %v3495
    %3910 = vmatprep.subr.bf16.mxu0 0
    %3911 = vmatpush1.bf16.msra.mxu0 %v3496
    %3912 = vmatprep.subr.bf16.mxu0 0
    %3913 = vmatpush1.bf16.msra.mxu0 %v3497
    %3914 = vmatprep.mubr.bf16.mxu0 %v2608
    %3915 = vmatmul.mubr.bf16.gmra.mrb[0].mxu0 %v2607
    %v3916 = vpop.f32.mrb[0].mxu0
    %v3917 = vadd.f32 %v3877, %v3916
    %v3918 = vpop.f32.mrb[0].mxu0
    %v3919 = vpop.f32.mrb[0].mxu0
    %v3920 = vpop.f32.mrb[0].mxu0
    %3921 = vdwg.mxu0
    %3922 = vmatprep.subr.bf16.mxu0 0
    %3923 = vmatpush1.bf16.msra.mxu0 %v3498
    %3924 = vmatprep.subr.bf16.mxu0 0
    %3925 = vmatpush1.bf16.msra.mxu0 %v3499
    %3926 = vmatprep.subr.bf16.mxu0 0
    %3927 = vmatpush1.bf16.msra.mxu0 %v3500
    %3928 = vmatprep.subr.bf16.mxu0 0
    %3929 = vmatpush1.bf16.msra.mxu0 %v3501
    %3930 = vmatprep.subr.bf16.mxu0 0
    %3931 = vmatpush1.bf16.msra.mxu0 %v3502
    %3932 = vmatprep.subr.bf16.mxu0 0
    %3933 = vmatpush1.bf16.msra.mxu0 %v3503
    %3934 = vmatprep.subr.bf16.mxu0 0
    %3935 = vmatpush1.bf16.msra.mxu0 %v3504
    %3936 = vmatprep.subr.bf16.mxu0 0
    %3937 = vmatpush1.bf16.msra.mxu0 %v3505
    %3938 = vmatprep.subr.bf16.mxu0 0
    %3939 = vmatpush1.bf16.msra.mxu0 %v3506
    %3940 = vmatprep.subr.bf16.mxu0 0
    %3941 = vmatpush1.bf16.msra.mxu0 %v3507
    %3942 = vmatprep.subr.bf16.mxu0 0
    %3943 = vmatpush1.bf16.msra.mxu0 %v3508
    %3944 = vmatprep.subr.bf16.mxu0 0
    %3945 = vmatpush1.bf16.msra.mxu0 %v3509
    %3946 = vmatprep.subr.bf16.mxu0 0
    %3947 = vmatpush1.bf16.msra.mxu0 %v3510
    %3948 = vmatprep.subr.bf16.mxu0 0
    %3949 = vmatpush1.bf16.msra.mxu0 %v3511
    %3950 = vmatprep.subr.bf16.mxu0 0
    %3951 = vmatpush1.bf16.msra.mxu0 %v3512
    %3952 = vmatprep.subr.bf16.mxu0 0
    %3953 = vmatpush1.bf16.msra.mxu0 %v3513
    %3954 = vmatprep.mubr.bf16.mxu0 %v2610
    %3955 = vmatmul.mubr.bf16.gmra.mrb[0].mxu0 %v2609
    %v3956 = vpop.f32.mrb[0].mxu0
    %v3957 = vadd.f32 %v3917, %v3956
    %v3958 = vpop.f32.mrb[0].mxu0
    %v3959 = vpop.f32.mrb[0].mxu0
    %v3960 = vpop.f32.mrb[0].mxu0
    %3961 = vdwg.mxu0
    %3962 = vst [vmem:[#allocation5] sm:$0x3] %v3957
    // Predicated region
    $region38: #{autoencoder_forward.1} parent=1 // pred_check
      _
    $region39: #{autoencoder_forward.1} parent=1 // pred_check_branch
      %3964 = sbr.rel (0) target = $region41
    $region40: #{autoencoder_forward.1} parent=1 // pred_region
      %s3966 = ssub.s32 32, 32
      %3967 = vsyncadd [#allocation6], %s3966
      %s3969 = sshll.u32 [#allocation5], 4
      %s3970 = int_to_ptr.vmem [resolvable:$true] %s3969
      %3972 = dma.vmem_to_hbm [thread:$0]  %s3970, 32, %s9, [#allocation6]
    $region41: #{autoencoder_forward.1} parent=1 // pred_fallthru
      _
    // Predicated region
    $region42: #{autoencoder_forward.1} parent=1 // pred_check
      _
    $region43: #{autoencoder_forward.1} parent=1 // pred_check_branch
      %3974 = sbr.rel (0) target = $region45
    $region44: #{autoencoder_forward.1} parent=1 // pred_region
      %3975 = dma.done [#allocation6], 32
    $region45: #{autoencoder_forward.1} parent=1 // pred_fallthru
      _
    %3976 = vsyncpa [#allocation6], 1

</llo_original>
